<compile_context>
chip_gen: v6e
topology: v6e:2x2x1
jax: 0.10.0
libtpu: 0.0.40
codegen_flags: <defaults>
</compile_context>

<pallas_src>
import jax
import jax.numpy as jnp
from jax import lax
from jax.experimental import pallas as pl
from jax.experimental.pallas import tpu as pltpu

KERNELS = [5, 21, 41, 61, 81]
PADS = [(k - 1) // 2 for k in KERNELS]   # all kernels odd -> symmetric "same"
KMAX = max(KERNELS)          # 81
PMAX = (KMAX - 1) // 2       # 40
NUM_BRANCHES = len(KERNELS)  # 5
# Lane offset of x inside the padded slab: a multiple of 128 that is >= PMAX,
# so all concat pieces are whole vregs (no relayout) and every halo access
# stays inside the slab.
X_OFF = 128

assert all(k % 2 == 1 for k in KERNELS), "centered packing needs odd kernels"
assert X_OFF % 128 == 0 and X_OFF >= PMAX


def _round_up(v, m):
    return ((v + m - 1) // m) * m


def _inception_kernel(w_ref, b_ref, x_ref, o_ref):
    """Single invocation computes all 5 conv branches.

    w_ref: (5, KMAX) f32 SMEM  -- per-branch taps, centered at column PMAX
    b_ref: (5,)      f32 SMEM  -- biases
    x_ref: (N, L)    f32 VMEM  -- unpadded input
    o_ref: (N, 5*L)  f32 VMEM  -- branch c occupies columns [c*L, (c+1)*L)
    """
    n, l = x_ref.shape
    lpad = _round_up(X_OFF + l + PMAX, 128)

    # Fused "same" padding, built in registers: left pad (X_OFF lanes), x, and
    # right pad are all 128-lane multiples, so this concat is pure vreg
    # placement -- no VMEM scratch round trip and no prologue store->load stall.
    xp = jnp.concatenate(
        [jnp.zeros((n, X_OFF), jnp.float32),
         x_ref[...],
         jnp.zeros((n, lpad - X_OFF - l), jnp.float32)],
        axis=-1)

    # Per-branch accumulators seeded with the bias.
    accs = [jnp.full((n, l), b_ref[c], dtype=jnp.float32)
            for c in range(NUM_BRANCHES)]

    # One shared sweep over the union of tap offsets d in [-PMAX, PMAX]:
    # each lane-shifted view of the in-register slab is produced once and
    # consumed by every branch whose (static) kernel width covers it
    # -> exactly 209 MACs, no zero taps, no per-tap VMEM reloads.
    # Weight index: branch c's tap j sits at packed column PMAX - p + j, and
    # with j = d + p that is column PMAX + d for every branch.
    for d in range(-PMAX, PMAX + 1):
        shifted = xp[:, X_OFF + d:X_OFF + d + l]          # shifted[t] = xpad[t + d]
        # Batch this offset's (<=5) SMEM scalar weight reads ahead of its MACs.
        taps = [(c, w_ref[c, PMAX + d])
                for c, p in enumerate(PADS) if abs(d) <= p]
        for c, w in taps:
            accs[c] = accs[c] + w * shifted

    # Lane-dense, vreg-aligned stores (L is a multiple of 128, asserted in the
    # wrapper), so these are full unmasked vst's.
    for c in range(NUM_BRANCHES):
        o_ref[:, c * l:(c + 1) * l] = accs[c]


@jax.jit
def inception_block(x, w_packed, biases):
    """x: (N, 1, L) f32  ->  (N, 5, L) f32  (matches torch.cat(out, dim=1))."""
    n, c_in, l = x.shape
    assert c_in == 1, "InceptionBlock expects a single input channel"
    # Lane-dense output stores (the biggest measured store-path lever) and the
    # in-register padding both require a 128-multiple L; fail loudly otherwise.
    assert l % 128 == 0, "L must be a multiple of 128 (pad in the wrapper)"

    x2 = x[:, 0, :].astype(jnp.float32)                   # (N, L), free view

    out = pl.pallas_call(
        _inception_kernel,
        out_shape=jax.ShapeDtypeStruct((n, NUM_BRANCHES * l), jnp.float32),
        in_specs=[
            pl.BlockSpec(memory_space=pltpu.SMEM),         # packed taps
            pl.BlockSpec(memory_space=pltpu.SMEM),         # biases
            pl.BlockSpec(memory_space=pltpu.VMEM),         # input rows
        ],
        out_specs=pl.BlockSpec(memory_space=pltpu.VMEM),
    )(w_packed, biases, x2)

    # (N, 5*L) -> (N, 5, L): contiguous row-major reshape (free), no transpose.
    return out.reshape(n, NUM_BRANCHES, l)


def make_params(key):
    """Deterministic synthetic parameters matching nn.Conv1d(1, 1, k) shapes."""
    weights = []
    biases = []
    for i, k in enumerate(KERNELS):
        kw, kb = jax.random.split(jax.random.fold_in(key, i))
        bound = 1.0 / (k ** 0.5)  # same fan-in scale as PyTorch default init
        weights.append(jax.random.uniform(kw, (k,), jnp.float32, -bound, bound))
        biases.append(jax.random.uniform(kb, (), jnp.float32, -bound, bound))

    # Pack each branch's taps, centered, into a length-KMAX row.
    w_packed = jnp.zeros((NUM_BRANCHES, KMAX), jnp.float32)
    for i, (k, p) in enumerate(zip(KERNELS, PADS)):
        off = PMAX - p
        w_packed = w_packed.at[i, off:off + k].set(weights[i])
    b = jnp.stack(biases).astype(jnp.float32)
    return weights, w_packed, b


def reference(x, weights, biases):
    """Pure-JAX reference replicating the PyTorch forward (cross-correlation)."""
    outs = []
    for i, (k, p) in enumerate(zip(KERNELS, PADS)):
        w = weights[i].reshape(1, 1, k)
        y = lax.conv_general_dilated(
            x, w, window_strides=(1,), padding=[(p, p)],
            dimension_numbers=("NCH", "OIH", "NCH"))
        outs.append(y + biases[i])
    return jnp.concatenate(outs, axis=1)


if __name__ == "__main__":
    key = jax.random.PRNGKey(0)
    kx, kp = jax.random.split(key)

    N, L = 8, 128
    x = jax.random.normal(kx, (N, 1, L), jnp.float32)

    weights, w_packed, biases = make_params(kp)

    out = inception_block(x, w_packed, biases)
    out = jax.block_until_ready(out)

    ref = reference(x, weights, biases)
    assert out.shape == (N, NUM_BRANCHES, L)
    assert jnp.allclose(out, ref, atol=1e-4, rtol=1e-4), "mismatch vs reference"

    print("KERNEL_OK")
</pallas_src>

<mosaic_0001>
module attributes {stable_mosaic.version = 11 : i64} {
  func.func @_inception_kernel(%arg0: memref<5x81xf32, #tpu.memory_space<smem>>, %arg1: memref<5xf32, #tpu.memory_space<smem>>, %arg2: memref<8x128xf32, #tpu.memory_space<vmem>>, %arg3: memref<8x640xf32, #tpu.memory_space<vmem>>) attributes {dimension_semantics = [], scalar_prefetch = 0 : i64, scratch_operands = 0 : i64, tpu.core_type = #tpu.core_type<tc>} {
    %cst = arith.constant 0.000000e+00 : f32
    %0 = vector.broadcast %cst : f32 to vector<8x128xf32>
    %c0 = arith.constant 0 : index
    %c0_0 = arith.constant 0 : index
    %1 = vector.load %arg2[%c0, %c0_0] : memref<8x128xf32, #tpu.memory_space<vmem>>, vector<8x128xf32>
    %cst_1 = arith.constant 0.000000e+00 : f32
    %2 = vector.broadcast %cst_1 : f32 to vector<8x128xf32>
    %3 = tpu.concatenate %0, %1, %2 in 1 : vector<8x128xf32>, vector<8x128xf32>, vector<8x128xf32> -> vector<8x384xf32>
    %c0_2 = arith.constant 0 : index
    %4 = memref.load %arg1[%c0_2] : memref<5xf32, #tpu.memory_space<smem>>
    %5 = vector.broadcast %4 : f32 to vector<8x128xf32>
    %c1 = arith.constant 1 : index
    %6 = memref.load %arg1[%c1] : memref<5xf32, #tpu.memory_space<smem>>
    %7 = vector.broadcast %6 : f32 to vector<8x128xf32>
    %c2 = arith.constant 2 : index
    %8 = memref.load %arg1[%c2] : memref<5xf32, #tpu.memory_space<smem>>
    %9 = vector.broadcast %8 : f32 to vector<8x128xf32>
    %c3 = arith.constant 3 : index
    %10 = memref.load %arg1[%c3] : memref<5xf32, #tpu.memory_space<smem>>
    %11 = vector.broadcast %10 : f32 to vector<8x128xf32>
    %c4 = arith.constant 4 : index
    %12 = memref.load %arg1[%c4] : memref<5xf32, #tpu.memory_space<smem>>
    %13 = vector.broadcast %12 : f32 to vector<8x128xf32>
    %14 = vector.extract_strided_slice %3 {offsets = [0, 88], sizes = [8, 128], strides = [1, 1]} : vector<8x384xf32> to vector<8x128xf32>
    %c4_3 = arith.constant 4 : index
    %c0_4 = arith.constant 0 : index
    %15 = memref.load %arg0[%c4_3, %c0_4] : memref<5x81xf32, #tpu.memory_space<smem>>
    %16 = vector.broadcast %15 : f32 to vector<8x128xf32>
    %17 = arith.mulf %16, %14 : vector<8x128xf32>
    %18 = arith.addf %13, %17 : vector<8x128xf32>
    %19 = vector.extract_strided_slice %3 {offsets = [0, 89], sizes = [8, 128], strides = [1, 1]} : vector<8x384xf32> to vector<8x128xf32>
    %c4_5 = arith.constant 4 : index
    %c1_6 = arith.constant 1 : index
    %20 = memref.load %arg0[%c4_5, %c1_6] : memref<5x81xf32, #tpu.memory_space<smem>>
    %21 = vector.broadcast %20 : f32 to vector<8x128xf32>
    %22 = arith.mulf %21, %19 : vector<8x128xf32>
    %23 = arith.addf %18, %22 : vector<8x128xf32>
    %24 = vector.extract_strided_slice %3 {offsets = [0, 90], sizes = [8, 128], strides = [1, 1]} : vector<8x384xf32> to vector<8x128xf32>
    %c4_7 = arith.constant 4 : index
    %c2_8 = arith.constant 2 : index
    %25 = memref.load %arg0[%c4_7, %c2_8] : memref<5x81xf32, #tpu.memory_space<smem>>
    %26 = vector.broadcast %25 : f32 to vector<8x128xf32>
    %27 = arith.mulf %26, %24 : vector<8x128xf32>
    %28 = arith.addf %23, %27 : vector<8x128xf32>
    %29 = vector.extract_strided_slice %3 {offsets = [0, 91], sizes = [8, 128], strides = [1, 1]} : vector<8x384xf32> to vector<8x128xf32>
    %c4_9 = arith.constant 4 : index
    %c3_10 = arith.constant 3 : index
    %30 = memref.load %arg0[%c4_9, %c3_10] : memref<5x81xf32, #tpu.memory_space<smem>>
    %31 = vector.broadcast %30 : f32 to vector<8x128xf32>
    %32 = arith.mulf %31, %29 : vector<8x128xf32>
    %33 = arith.addf %28, %32 : vector<8x128xf32>
    %34 = vector.extract_strided_slice %3 {offsets = [0, 92], sizes = [8, 128], strides = [1, 1]} : vector<8x384xf32> to vector<8x128xf32>
    %c4_11 = arith.constant 4 : index
    %c4_12 = arith.constant 4 : index
    %35 = memref.load %arg0[%c4_11, %c4_12] : memref<5x81xf32, #tpu.memory_space<smem>>
    %36 = vector.broadcast %35 : f32 to vector<8x128xf32>
    %37 = arith.mulf %36, %34 : vector<8x128xf32>
    %38 = arith.addf %33, %37 : vector<8x128xf32>
    %39 = vector.extract_strided_slice %3 {offsets = [0, 93], sizes = [8, 128], strides = [1, 1]} : vector<8x384xf32> to vector<8x128xf32>
    %c4_13 = arith.constant 4 : index
    %c5 = arith.constant 5 : index
    %40 = memref.load %arg0[%c4_13, %c5] : memref<5x81xf32, #tpu.memory_space<smem>>
    %41 = vector.broadcast %40 : f32 to vector<8x128xf32>
    %42 = arith.mulf %41, %39 : vector<8x128xf32>
    %43 = arith.addf %38, %42 : vector<8x128xf32>
    %44 = vector.extract_strided_slice %3 {offsets = [0, 94], sizes = [8, 128], strides = [1, 1]} : vector<8x384xf32> to vector<8x128xf32>
    %c4_14 = arith.constant 4 : index
    %c6 = arith.constant 6 : index
    %45 = memref.load %arg0[%c4_14, %c6] : memref<5x81xf32, #tpu.memory_space<smem>>
    %46 = vector.broadcast %45 : f32 to vector<8x128xf32>
    %47 = arith.mulf %46, %44 : vector<8x128xf32>
    %48 = arith.addf %43, %47 : vector<8x128xf32>
    %49 = vector.extract_strided_slice %3 {offsets = [0, 95], sizes = [8, 128], strides = [1, 1]} : vector<8x384xf32> to vector<8x128xf32>
    %c4_15 = arith.constant 4 : index
    %c7 = arith.constant 7 : index
    %50 = memref.load %arg0[%c4_15, %c7] : memref<5x81xf32, #tpu.memory_space<smem>>
    %51 = vector.broadcast %50 : f32 to vector<8x128xf32>
    %52 = arith.mulf %51, %49 : vector<8x128xf32>
    %53 = arith.addf %48, %52 : vector<8x128xf32>
    %54 = vector.extract_strided_slice %3 {offsets = [0, 96], sizes = [8, 128], strides = [1, 1]} : vector<8x384xf32> to vector<8x128xf32>
    %c4_16 = arith.constant 4 : index
    %c8 = arith.constant 8 : index
    %55 = memref.load %arg0[%c4_16, %c8] : memref<5x81xf32, #tpu.memory_space<smem>>
    %56 = vector.broadcast %55 : f32 to vector<8x128xf32>
    %57 = arith.mulf %56, %54 : vector<8x128xf32>
    %58 = arith.addf %53, %57 : vector<8x128xf32>
    %59 = vector.extract_strided_slice %3 {offsets = [0, 97], sizes = [8, 128], strides = [1, 1]} : vector<8x384xf32> to vector<8x128xf32>
    %c4_17 = arith.constant 4 : index
    %c9 = arith.constant 9 : index
    %60 = memref.load %arg0[%c4_17, %c9] : memref<5x81xf32, #tpu.memory_space<smem>>
    %61 = vector.broadcast %60 : f32 to vector<8x128xf32>
    %62 = arith.mulf %61, %59 : vector<8x128xf32>
    %63 = arith.addf %58, %62 : vector<8x128xf32>
    %64 = vector.extract_strided_slice %3 {offsets = [0, 98], sizes = [8, 128], strides = [1, 1]} : vector<8x384xf32> to vector<8x128xf32>
    %c3_18 = arith.constant 3 : index
    %c10 = arith.constant 10 : index
    %65 = memref.load %arg0[%c3_18, %c10] : memref<5x81xf32, #tpu.memory_space<smem>>
    %c4_19 = arith.constant 4 : index
    %c10_20 = arith.constant 10 : index
    %66 = memref.load %arg0[%c4_19, %c10_20] : memref<5x81xf32, #tpu.memory_space<smem>>
    %67 = vector.broadcast %65 : f32 to vector<8x128xf32>
    %68 = arith.mulf %67, %64 : vector<8x128xf32>
    %69 = arith.addf %11, %68 : vector<8x128xf32>
    %70 = vector.broadcast %66 : f32 to vector<8x128xf32>
    %71 = arith.mulf %70, %64 : vector<8x128xf32>
    %72 = arith.addf %63, %71 : vector<8x128xf32>
    %73 = vector.extract_strided_slice %3 {offsets = [0, 99], sizes = [8, 128], strides = [1, 1]} : vector<8x384xf32> to vector<8x128xf32>
    %c3_21 = arith.constant 3 : index
    %c11 = arith.constant 11 : index
    %74 = memref.load %arg0[%c3_21, %c11] : memref<5x81xf32, #tpu.memory_space<smem>>
    %c4_22 = arith.constant 4 : index
    %c11_23 = arith.constant 11 : index
    %75 = memref.load %arg0[%c4_22, %c11_23] : memref<5x81xf32, #tpu.memory_space<smem>>
    %76 = vector.broadcast %74 : f32 to vector<8x128xf32>
    %77 = arith.mulf %76, %73 : vector<8x128xf32>
    %78 = arith.addf %69, %77 : vector<8x128xf32>
    %79 = vector.broadcast %75 : f32 to vector<8x128xf32>
    %80 = arith.mulf %79, %73 : vector<8x128xf32>
    %81 = arith.addf %72, %80 : vector<8x128xf32>
    %82 = vector.extract_strided_slice %3 {offsets = [0, 100], sizes = [8, 128], strides = [1, 1]} : vector<8x384xf32> to vector<8x128xf32>
    %c3_24 = arith.constant 3 : index
    %c12 = arith.constant 12 : index
    %83 = memref.load %arg0[%c3_24, %c12] : memref<5x81xf32, #tpu.memory_space<smem>>
    %c4_25 = arith.constant 4 : index
    %c12_26 = arith.constant 12 : index
    %84 = memref.load %arg0[%c4_25, %c12_26] : memref<5x81xf32, #tpu.memory_space<smem>>
    %85 = vector.broadcast %83 : f32 to vector<8x128xf32>
    %86 = arith.mulf %85, %82 : vector<8x128xf32>
    %87 = arith.addf %78, %86 : vector<8x128xf32>
    %88 = vector.broadcast %84 : f32 to vector<8x128xf32>
    %89 = arith.mulf %88, %82 : vector<8x128xf32>
    %90 = arith.addf %81, %89 : vector<8x128xf32>
    %91 = vector.extract_strided_slice %3 {offsets = [0, 101], sizes = [8, 128], strides = [1, 1]} : vector<8x384xf32> to vector<8x128xf32>
    %c3_27 = arith.constant 3 : index
    %c13 = arith.constant 13 : index
    %92 = memref.load %arg0[%c3_27, %c13] : memref<5x81xf32, #tpu.memory_space<smem>>
    %c4_28 = arith.constant 4 : index
    %c13_29 = arith.constant 13 : index
    %93 = memref.load %arg0[%c4_28, %c13_29] : memref<5x81xf32, #tpu.memory_space<smem>>
    %94 = vector.broadcast %92 : f32 to vector<8x128xf32>
    %95 = arith.mulf %94, %91 : vector<8x128xf32>
    %96 = arith.addf %87, %95 : vector<8x128xf32>
    %97 = vector.broadcast %93 : f32 to vector<8x128xf32>
    %98 = arith.mulf %97, %91 : vector<8x128xf32>
    %99 = arith.addf %90, %98 : vector<8x128xf32>
    %100 = vector.extract_strided_slice %3 {offsets = [0, 102], sizes = [8, 128], strides = [1, 1]} : vector<8x384xf32> to vector<8x128xf32>
    %c3_30 = arith.constant 3 : index
    %c14 = arith.constant 14 : index
    %101 = memref.load %arg0[%c3_30, %c14] : memref<5x81xf32, #tpu.memory_space<smem>>
    %c4_31 = arith.constant 4 : index
    %c14_32 = arith.constant 14 : index
    %102 = memref.load %arg0[%c4_31, %c14_32] : memref<5x81xf32, #tpu.memory_space<smem>>
    %103 = vector.broadcast %101 : f32 to vector<8x128xf32>
    %104 = arith.mulf %103, %100 : vector<8x128xf32>
    %105 = arith.addf %96, %104 : vector<8x128xf32>
    %106 = vector.broadcast %102 : f32 to vector<8x128xf32>
    %107 = arith.mulf %106, %100 : vector<8x128xf32>
    %108 = arith.addf %99, %107 : vector<8x128xf32>
    %109 = vector.extract_strided_slice %3 {offsets = [0, 103], sizes = [8, 128], strides = [1, 1]} : vector<8x384xf32> to vector<8x128xf32>
    %c3_33 = arith.constant 3 : index
    %c15 = arith.constant 15 : index
    %110 = memref.load %arg0[%c3_33, %c15] : memref<5x81xf32, #tpu.memory_space<smem>>
    %c4_34 = arith.constant 4 : index
    %c15_35 = arith.constant 15 : index
    %111 = memref.load %arg0[%c4_34, %c15_35] : memref<5x81xf32, #tpu.memory_space<smem>>
    %112 = vector.broadcast %110 : f32 to vector<8x128xf32>
    %113 = arith.mulf %112, %109 : vector<8x128xf32>
    %114 = arith.addf %105, %113 : vector<8x128xf32>
    %115 = vector.broadcast %111 : f32 to vector<8x128xf32>
    %116 = arith.mulf %115, %109 : vector<8x128xf32>
    %117 = arith.addf %108, %116 : vector<8x128xf32>
    %118 = vector.extract_strided_slice %3 {offsets = [0, 104], sizes = [8, 128], strides = [1, 1]} : vector<8x384xf32> to vector<8x128xf32>
    %c3_36 = arith.constant 3 : index
    %c16 = arith.constant 16 : index
    %119 = memref.load %arg0[%c3_36, %c16] : memref<5x81xf32, #tpu.memory_space<smem>>
    %c4_37 = arith.constant 4 : index
    %c16_38 = arith.constant 16 : index
    %120 = memref.load %arg0[%c4_37, %c16_38] : memref<5x81xf32, #tpu.memory_space<smem>>
    %121 = vector.broadcast %119 : f32 to vector<8x128xf32>
    %122 = arith.mulf %121, %118 : vector<8x128xf32>
    %123 = arith.addf %114, %122 : vector<8x128xf32>
    %124 = vector.broadcast %120 : f32 to vector<8x128xf32>
    %125 = arith.mulf %124, %118 : vector<8x128xf32>
    %126 = arith.addf %117, %125 : vector<8x128xf32>
    %127 = vector.extract_strided_slice %3 {offsets = [0, 105], sizes = [8, 128], strides = [1, 1]} : vector<8x384xf32> to vector<8x128xf32>
    %c3_39 = arith.constant 3 : index
    %c17 = arith.constant 17 : index
    %128 = memref.load %arg0[%c3_39, %c17] : memref<5x81xf32, #tpu.memory_space<smem>>
    %c4_40 = arith.constant 4 : index
    %c17_41 = arith.constant 17 : index
    %129 = memref.load %arg0[%c4_40, %c17_41] : memref<5x81xf32, #tpu.memory_space<smem>>
    %130 = vector.broadcast %128 : f32 to vector<8x128xf32>
    %131 = arith.mulf %130, %127 : vector<8x128xf32>
    %132 = arith.addf %123, %131 : vector<8x128xf32>
    %133 = vector.broadcast %129 : f32 to vector<8x128xf32>
    %134 = arith.mulf %133, %127 : vector<8x128xf32>
    %135 = arith.addf %126, %134 : vector<8x128xf32>
    %136 = vector.extract_strided_slice %3 {offsets = [0, 106], sizes = [8, 128], strides = [1, 1]} : vector<8x384xf32> to vector<8x128xf32>
    %c3_42 = arith.constant 3 : index
    %c18 = arith.constant 18 : index
    %137 = memref.load %arg0[%c3_42, %c18] : memref<5x81xf32, #tpu.memory_space<smem>>
    %c4_43 = arith.constant 4 : index
    %c18_44 = arith.constant 18 : index
    %138 = memref.load %arg0[%c4_43, %c18_44] : memref<5x81xf32, #tpu.memory_space<smem>>
    %139 = vector.broadcast %137 : f32 to vector<8x128xf32>
    %140 = arith.mulf %139, %136 : vector<8x128xf32>
    %141 = arith.addf %132, %140 : vector<8x128xf32>
    %142 = vector.broadcast %138 : f32 to vector<8x128xf32>
    %143 = arith.mulf %142, %136 : vector<8x128xf32>
    %144 = arith.addf %135, %143 : vector<8x128xf32>
    %145 = vector.extract_strided_slice %3 {offsets = [0, 107], sizes = [8, 128], strides = [1, 1]} : vector<8x384xf32> to vector<8x128xf32>
    %c3_45 = arith.constant 3 : index
    %c19 = arith.constant 19 : index
    %146 = memref.load %arg0[%c3_45, %c19] : memref<5x81xf32, #tpu.memory_space<smem>>
    %c4_46 = arith.constant 4 : index
    %c19_47 = arith.constant 19 : index
    %147 = memref.load %arg0[%c4_46, %c19_47] : memref<5x81xf32, #tpu.memory_space<smem>>
    %148 = vector.broadcast %146 : f32 to vector<8x128xf32>
    %149 = arith.mulf %148, %145 : vector<8x128xf32>
    %150 = arith.addf %141, %149 : vector<8x128xf32>
    %151 = vector.broadcast %147 : f32 to vector<8x128xf32>
    %152 = arith.mulf %151, %145 : vector<8x128xf32>
    %153 = arith.addf %144, %152 : vector<8x128xf32>
    %154 = vector.extract_strided_slice %3 {offsets = [0, 108], sizes = [8, 128], strides = [1, 1]} : vector<8x384xf32> to vector<8x128xf32>
    %c2_48 = arith.constant 2 : index
    %c20 = arith.constant 20 : index
    %155 = memref.load %arg0[%c2_48, %c20] : memref<5x81xf32, #tpu.memory_space<smem>>
    %c3_49 = arith.constant 3 : index
    %c20_50 = arith.constant 20 : index
    %156 = memref.load %arg0[%c3_49, %c20_50] : memref<5x81xf32, #tpu.memory_space<smem>>
    %c4_51 = arith.constant 4 : index
    %c20_52 = arith.constant 20 : index
    %157 = memref.load %arg0[%c4_51, %c20_52] : memref<5x81xf32, #tpu.memory_space<smem>>
    %158 = vector.broadcast %155 : f32 to vector<8x128xf32>
    %159 = arith.mulf %158, %154 : vector<8x128xf32>
    %160 = arith.addf %9, %159 : vector<8x128xf32>
    %161 = vector.broadcast %156 : f32 to vector<8x128xf32>
    %162 = arith.mulf %161, %154 : vector<8x128xf32>
    %163 = arith.addf %150, %162 : vector<8x128xf32>
    %164 = vector.broadcast %157 : f32 to vector<8x128xf32>
    %165 = arith.mulf %164, %154 : vector<8x128xf32>
    %166 = arith.addf %153, %165 : vector<8x128xf32>
    %167 = vector.extract_strided_slice %3 {offsets = [0, 109], sizes = [8, 128], strides = [1, 1]} : vector<8x384xf32> to vector<8x128xf32>
    %c2_53 = arith.constant 2 : index
    %c21 = arith.constant 21 : index
    %168 = memref.load %arg0[%c2_53, %c21] : memref<5x81xf32, #tpu.memory_space<smem>>
    %c3_54 = arith.constant 3 : index
    %c21_55 = arith.constant 21 : index
    %169 = memref.load %arg0[%c3_54, %c21_55] : memref<5x81xf32, #tpu.memory_space<smem>>
    %c4_56 = arith.constant 4 : index
    %c21_57 = arith.constant 21 : index
    %170 = memref.load %arg0[%c4_56, %c21_57] : memref<5x81xf32, #tpu.memory_space<smem>>
    %171 = vector.broadcast %168 : f32 to vector<8x128xf32>
    %172 = arith.mulf %171, %167 : vector<8x128xf32>
    %173 = arith.addf %160, %172 : vector<8x128xf32>
    %174 = vector.broadcast %169 : f32 to vector<8x128xf32>
    %175 = arith.mulf %174, %167 : vector<8x128xf32>
    %176 = arith.addf %163, %175 : vector<8x128xf32>
    %177 = vector.broadcast %170 : f32 to vector<8x128xf32>
    %178 = arith.mulf %177, %167 : vector<8x128xf32>
    %179 = arith.addf %166, %178 : vector<8x128xf32>
    %180 = vector.extract_strided_slice %3 {offsets = [0, 110], sizes = [8, 128], strides = [1, 1]} : vector<8x384xf32> to vector<8x128xf32>
    %c2_58 = arith.constant 2 : index
    %c22 = arith.constant 22 : index
    %181 = memref.load %arg0[%c2_58, %c22] : memref<5x81xf32, #tpu.memory_space<smem>>
    %c3_59 = arith.constant 3 : index
    %c22_60 = arith.constant 22 : index
    %182 = memref.load %arg0[%c3_59, %c22_60] : memref<5x81xf32, #tpu.memory_space<smem>>
    %c4_61 = arith.constant 4 : index
    %c22_62 = arith.constant 22 : index
    %183 = memref.load %arg0[%c4_61, %c22_62] : memref<5x81xf32, #tpu.memory_space<smem>>
    %184 = vector.broadcast %181 : f32 to vector<8x128xf32>
    %185 = arith.mulf %184, %180 : vector<8x128xf32>
    %186 = arith.addf %173, %185 : vector<8x128xf32>
    %187 = vector.broadcast %182 : f32 to vector<8x128xf32>
    %188 = arith.mulf %187, %180 : vector<8x128xf32>
    %189 = arith.addf %176, %188 : vector<8x128xf32>
    %190 = vector.broadcast %183 : f32 to vector<8x128xf32>
    %191 = arith.mulf %190, %180 : vector<8x128xf32>
    %192 = arith.addf %179, %191 : vector<8x128xf32>
    %193 = vector.extract_strided_slice %3 {offsets = [0, 111], sizes = [8, 128], strides = [1, 1]} : vector<8x384xf32> to vector<8x128xf32>
    %c2_63 = arith.constant 2 : index
    %c23 = arith.constant 23 : index
    %194 = memref.load %arg0[%c2_63, %c23] : memref<5x81xf32, #tpu.memory_space<smem>>
    %c3_64 = arith.constant 3 : index
    %c23_65 = arith.constant 23 : index
    %195 = memref.load %arg0[%c3_64, %c23_65] : memref<5x81xf32, #tpu.memory_space<smem>>
    %c4_66 = arith.constant 4 : index
    %c23_67 = arith.constant 23 : index
    %196 = memref.load %arg0[%c4_66, %c23_67] : memref<5x81xf32, #tpu.memory_space<smem>>
    %197 = vector.broadcast %194 : f32 to vector<8x128xf32>
    %198 = arith.mulf %197, %193 : vector<8x128xf32>
    %199 = arith.addf %186, %198 : vector<8x128xf32>
    %200 = vector.broadcast %195 : f32 to vector<8x128xf32>
    %201 = arith.mulf %200, %193 : vector<8x128xf32>
    %202 = arith.addf %189, %201 : vector<8x128xf32>
    %203 = vector.broadcast %196 : f32 to vector<8x128xf32>
    %204 = arith.mulf %203, %193 : vector<8x128xf32>
    %205 = arith.addf %192, %204 : vector<8x128xf32>
    %206 = vector.extract_strided_slice %3 {offsets = [0, 112], sizes = [8, 128], strides = [1, 1]} : vector<8x384xf32> to vector<8x128xf32>
    %c2_68 = arith.constant 2 : index
    %c24 = arith.constant 24 : index
    %207 = memref.load %arg0[%c2_68, %c24] : memref<5x81xf32, #tpu.memory_space<smem>>
    %c3_69 = arith.constant 3 : index
    %c24_70 = arith.constant 24 : index
    %208 = memref.load %arg0[%c3_69, %c24_70] : memref<5x81xf32, #tpu.memory_space<smem>>
    %c4_71 = arith.constant 4 : index
    %c24_72 = arith.constant 24 : index
    %209 = memref.load %arg0[%c4_71, %c24_72] : memref<5x81xf32, #tpu.memory_space<smem>>
    %210 = vector.broadcast %207 : f32 to vector<8x128xf32>
    %211 = arith.mulf %210, %206 : vector<8x128xf32>
    %212 = arith.addf %199, %211 : vector<8x128xf32>
    %213 = vector.broadcast %208 : f32 to vector<8x128xf32>
    %214 = arith.mulf %213, %206 : vector<8x128xf32>
    %215 = arith.addf %202, %214 : vector<8x128xf32>
    %216 = vector.broadcast %209 : f32 to vector<8x128xf32>
    %217 = arith.mulf %216, %206 : vector<8x128xf32>
    %218 = arith.addf %205, %217 : vector<8x128xf32>
    %219 = vector.extract_strided_slice %3 {offsets = [0, 113], sizes = [8, 128], strides = [1, 1]} : vector<8x384xf32> to vector<8x128xf32>
    %c2_73 = arith.constant 2 : index
    %c25 = arith.constant 25 : index
    %220 = memref.load %arg0[%c2_73, %c25] : memref<5x81xf32, #tpu.memory_space<smem>>
    %c3_74 = arith.constant 3 : index
    %c25_75 = arith.constant 25 : index
    %221 = memref.load %arg0[%c3_74, %c25_75] : memref<5x81xf32, #tpu.memory_space<smem>>
    %c4_76 = arith.constant 4 : index
    %c25_77 = arith.constant 25 : index
    %222 = memref.load %arg0[%c4_76, %c25_77] : memref<5x81xf32, #tpu.memory_space<smem>>
    %223 = vector.broadcast %220 : f32 to vector<8x128xf32>
    %224 = arith.mulf %223, %219 : vector<8x128xf32>
    %225 = arith.addf %212, %224 : vector<8x128xf32>
    %226 = vector.broadcast %221 : f32 to vector<8x128xf32>
    %227 = arith.mulf %226, %219 : vector<8x128xf32>
    %228 = arith.addf %215, %227 : vector<8x128xf32>
    %229 = vector.broadcast %222 : f32 to vector<8x128xf32>
    %230 = arith.mulf %229, %219 : vector<8x128xf32>
    %231 = arith.addf %218, %230 : vector<8x128xf32>
    %232 = vector.extract_strided_slice %3 {offsets = [0, 114], sizes = [8, 128], strides = [1, 1]} : vector<8x384xf32> to vector<8x128xf32>
    %c2_78 = arith.constant 2 : index
    %c26 = arith.constant 26 : index
    %233 = memref.load %arg0[%c2_78, %c26] : memref<5x81xf32, #tpu.memory_space<smem>>
    %c3_79 = arith.constant 3 : index
    %c26_80 = arith.constant 26 : index
    %234 = memref.load %arg0[%c3_79, %c26_80] : memref<5x81xf32, #tpu.memory_space<smem>>
    %c4_81 = arith.constant 4 : index
    %c26_82 = arith.constant 26 : index
    %235 = memref.load %arg0[%c4_81, %c26_82] : memref<5x81xf32, #tpu.memory_space<smem>>
    %236 = vector.broadcast %233 : f32 to vector<8x128xf32>
    %237 = arith.mulf %236, %232 : vector<8x128xf32>
    %238 = arith.addf %225, %237 : vector<8x128xf32>
    %239 = vector.broadcast %234 : f32 to vector<8x128xf32>
    %240 = arith.mulf %239, %232 : vector<8x128xf32>
    %241 = arith.addf %228, %240 : vector<8x128xf32>
    %242 = vector.broadcast %235 : f32 to vector<8x128xf32>
    %243 = arith.mulf %242, %232 : vector<8x128xf32>
    %244 = arith.addf %231, %243 : vector<8x128xf32>
    %245 = vector.extract_strided_slice %3 {offsets = [0, 115], sizes = [8, 128], strides = [1, 1]} : vector<8x384xf32> to vector<8x128xf32>
    %c2_83 = arith.constant 2 : index
    %c27 = arith.constant 27 : index
    %246 = memref.load %arg0[%c2_83, %c27] : memref<5x81xf32, #tpu.memory_space<smem>>
    %c3_84 = arith.constant 3 : index
    %c27_85 = arith.constant 27 : index
    %247 = memref.load %arg0[%c3_84, %c27_85] : memref<5x81xf32, #tpu.memory_space<smem>>
    %c4_86 = arith.constant 4 : index
    %c27_87 = arith.constant 27 : index
    %248 = memref.load %arg0[%c4_86, %c27_87] : memref<5x81xf32, #tpu.memory_space<smem>>
    %249 = vector.broadcast %246 : f32 to vector<8x128xf32>
    %250 = arith.mulf %249, %245 : vector<8x128xf32>
    %251 = arith.addf %238, %250 : vector<8x128xf32>
    %252 = vector.broadcast %247 : f32 to vector<8x128xf32>
    %253 = arith.mulf %252, %245 : vector<8x128xf32>
    %254 = arith.addf %241, %253 : vector<8x128xf32>
    %255 = vector.broadcast %248 : f32 to vector<8x128xf32>
    %256 = arith.mulf %255, %245 : vector<8x128xf32>
    %257 = arith.addf %244, %256 : vector<8x128xf32>
    %258 = vector.extract_strided_slice %3 {offsets = [0, 116], sizes = [8, 128], strides = [1, 1]} : vector<8x384xf32> to vector<8x128xf32>
    %c2_88 = arith.constant 2 : index
    %c28 = arith.constant 28 : index
    %259 = memref.load %arg0[%c2_88, %c28] : memref<5x81xf32, #tpu.memory_space<smem>>
    %c3_89 = arith.constant 3 : index
    %c28_90 = arith.constant 28 : index
    %260 = memref.load %arg0[%c3_89, %c28_90] : memref<5x81xf32, #tpu.memory_space<smem>>
    %c4_91 = arith.constant 4 : index
    %c28_92 = arith.constant 28 : index
    %261 = memref.load %arg0[%c4_91, %c28_92] : memref<5x81xf32, #tpu.memory_space<smem>>
    %262 = vector.broadcast %259 : f32 to vector<8x128xf32>
    %263 = arith.mulf %262, %258 : vector<8x128xf32>
    %264 = arith.addf %251, %263 : vector<8x128xf32>
    %265 = vector.broadcast %260 : f32 to vector<8x128xf32>
    %266 = arith.mulf %265, %258 : vector<8x128xf32>
    %267 = arith.addf %254, %266 : vector<8x128xf32>
    %268 = vector.broadcast %261 : f32 to vector<8x128xf32>
    %269 = arith.mulf %268, %258 : vector<8x128xf32>
    %270 = arith.addf %257, %269 : vector<8x128xf32>
    %271 = vector.extract_strided_slice %3 {offsets = [0, 117], sizes = [8, 128], strides = [1, 1]} : vector<8x384xf32> to vector<8x128xf32>
    %c2_93 = arith.constant 2 : index
    %c29 = arith.constant 29 : index
    %272 = memref.load %arg0[%c2_93, %c29] : memref<5x81xf32, #tpu.memory_space<smem>>
    %c3_94 = arith.constant 3 : index
    %c29_95 = arith.constant 29 : index
    %273 = memref.load %arg0[%c3_94, %c29_95] : memref<5x81xf32, #tpu.memory_space<smem>>
    %c4_96 = arith.constant 4 : index
    %c29_97 = arith.constant 29 : index
    %274 = memref.load %arg0[%c4_96, %c29_97] : memref<5x81xf32, #tpu.memory_space<smem>>
    %275 = vector.broadcast %272 : f32 to vector<8x128xf32>
    %276 = arith.mulf %275, %271 : vector<8x128xf32>
    %277 = arith.addf %264, %276 : vector<8x128xf32>
    %278 = vector.broadcast %273 : f32 to vector<8x128xf32>
    %279 = arith.mulf %278, %271 : vector<8x128xf32>
    %280 = arith.addf %267, %279 : vector<8x128xf32>
    %281 = vector.broadcast %274 : f32 to vector<8x128xf32>
    %282 = arith.mulf %281, %271 : vector<8x128xf32>
    %283 = arith.addf %270, %282 : vector<8x128xf32>
    %284 = vector.extract_strided_slice %3 {offsets = [0, 118], sizes = [8, 128], strides = [1, 1]} : vector<8x384xf32> to vector<8x128xf32>
    %c1_98 = arith.constant 1 : index
    %c30 = arith.constant 30 : index
    %285 = memref.load %arg0[%c1_98, %c30] : memref<5x81xf32, #tpu.memory_space<smem>>
    %c2_99 = arith.constant 2 : index
    %c30_100 = arith.constant 30 : index
    %286 = memref.load %arg0[%c2_99, %c30_100] : memref<5x81xf32, #tpu.memory_space<smem>>
    %c3_101 = arith.constant 3 : index
    %c30_102 = arith.constant 30 : index
    %287 = memref.load %arg0[%c3_101, %c30_102] : memref<5x81xf32, #tpu.memory_space<smem>>
    %c4_103 = arith.constant 4 : index
    %c30_104 = arith.constant 30 : index
    %288 = memref.load %arg0[%c4_103, %c30_104] : memref<5x81xf32, #tpu.memory_space<smem>>
    %289 = vector.broadcast %285 : f32 to vector<8x128xf32>
    %290 = arith.mulf %289, %284 : vector<8x128xf32>
    %291 = arith.addf %7, %290 : vector<8x128xf32>
    %292 = vector.broadcast %286 : f32 to vector<8x128xf32>
    %293 = arith.mulf %292, %284 : vector<8x128xf32>
    %294 = arith.addf %277, %293 : vector<8x128xf32>
    %295 = vector.broadcast %287 : f32 to vector<8x128xf32>
    %296 = arith.mulf %295, %284 : vector<8x128xf32>
    %297 = arith.addf %280, %296 : vector<8x128xf32>
    %298 = vector.broadcast %288 : f32 to vector<8x128xf32>
    %299 = arith.mulf %298, %284 : vector<8x128xf32>
    %300 = arith.addf %283, %299 : vector<8x128xf32>
    %301 = vector.extract_strided_slice %3 {offsets = [0, 119], sizes = [8, 128], strides = [1, 1]} : vector<8x384xf32> to vector<8x128xf32>
    %c1_105 = arith.constant 1 : index
    %c31 = arith.constant 31 : index
    %302 = memref.load %arg0[%c1_105, %c31] : memref<5x81xf32, #tpu.memory_space<smem>>
    %c2_106 = arith.constant 2 : index
    %c31_107 = arith.constant 31 : index
    %303 = memref.load %arg0[%c2_106, %c31_107] : memref<5x81xf32, #tpu.memory_space<smem>>
    %c3_108 = arith.constant 3 : index
    %c31_109 = arith.constant 31 : index
    %304 = memref.load %arg0[%c3_108, %c31_109] : memref<5x81xf32, #tpu.memory_space<smem>>
    %c4_110 = arith.constant 4 : index
    %c31_111 = arith.constant 31 : index
    %305 = memref.load %arg0[%c4_110, %c31_111] : memref<5x81xf32, #tpu.memory_space<smem>>
    %306 = vector.broadcast %302 : f32 to vector<8x128xf32>
    %307 = arith.mulf %306, %301 : vector<8x128xf32>
    %308 = arith.addf %291, %307 : vector<8x128xf32>
    %309 = vector.broadcast %303 : f32 to vector<8x128xf32>
    %310 = arith.mulf %309, %301 : vector<8x128xf32>
    %311 = arith.addf %294, %310 : vector<8x128xf32>
    %312 = vector.broadcast %304 : f32 to vector<8x128xf32>
    %313 = arith.mulf %312, %301 : vector<8x128xf32>
    %314 = arith.addf %297, %313 : vector<8x128xf32>
    %315 = vector.broadcast %305 : f32 to vector<8x128xf32>
    %316 = arith.mulf %315, %301 : vector<8x128xf32>
    %317 = arith.addf %300, %316 : vector<8x128xf32>
    %318 = vector.extract_strided_slice %3 {offsets = [0, 120], sizes = [8, 128], strides = [1, 1]} : vector<8x384xf32> to vector<8x128xf32>
    %c1_112 = arith.constant 1 : index
    %c32 = arith.constant 32 : index
    %319 = memref.load %arg0[%c1_112, %c32] : memref<5x81xf32, #tpu.memory_space<smem>>
    %c2_113 = arith.constant 2 : index
    %c32_114 = arith.constant 32 : index
    %320 = memref.load %arg0[%c2_113, %c32_114] : memref<5x81xf32, #tpu.memory_space<smem>>
    %c3_115 = arith.constant 3 : index
    %c32_116 = arith.constant 32 : index
    %321 = memref.load %arg0[%c3_115, %c32_116] : memref<5x81xf32, #tpu.memory_space<smem>>
    %c4_117 = arith.constant 4 : index
    %c32_118 = arith.constant 32 : index
    %322 = memref.load %arg0[%c4_117, %c32_118] : memref<5x81xf32, #tpu.memory_space<smem>>
    %323 = vector.broadcast %319 : f32 to vector<8x128xf32>
    %324 = arith.mulf %323, %318 : vector<8x128xf32>
    %325 = arith.addf %308, %324 : vector<8x128xf32>
    %326 = vector.broadcast %320 : f32 to vector<8x128xf32>
    %327 = arith.mulf %326, %318 : vector<8x128xf32>
    %328 = arith.addf %311, %327 : vector<8x128xf32>
    %329 = vector.broadcast %321 : f32 to vector<8x128xf32>
    %330 = arith.mulf %329, %318 : vector<8x128xf32>
    %331 = arith.addf %314, %330 : vector<8x128xf32>
    %332 = vector.broadcast %322 : f32 to vector<8x128xf32>
    %333 = arith.mulf %332, %318 : vector<8x128xf32>
    %334 = arith.addf %317, %333 : vector<8x128xf32>
    %335 = vector.extract_strided_slice %3 {offsets = [0, 121], sizes = [8, 128], strides = [1, 1]} : vector<8x384xf32> to vector<8x128xf32>
    %c1_119 = arith.constant 1 : index
    %c33 = arith.constant 33 : index
    %336 = memref.load %arg0[%c1_119, %c33] : memref<5x81xf32, #tpu.memory_space<smem>>
    %c2_120 = arith.constant 2 : index
    %c33_121 = arith.constant 33 : index
    %337 = memref.load %arg0[%c2_120, %c33_121] : memref<5x81xf32, #tpu.memory_space<smem>>
    %c3_122 = arith.constant 3 : index
    %c33_123 = arith.constant 33 : index
    %338 = memref.load %arg0[%c3_122, %c33_123] : memref<5x81xf32, #tpu.memory_space<smem>>
    %c4_124 = arith.constant 4 : index
    %c33_125 = arith.constant 33 : index
    %339 = memref.load %arg0[%c4_124, %c33_125] : memref<5x81xf32, #tpu.memory_space<smem>>
    %340 = vector.broadcast %336 : f32 to vector<8x128xf32>
    %341 = arith.mulf %340, %335 : vector<8x128xf32>
    %342 = arith.addf %325, %341 : vector<8x128xf32>
    %343 = vector.broadcast %337 : f32 to vector<8x128xf32>
    %344 = arith.mulf %343, %335 : vector<8x128xf32>
    %345 = arith.addf %328, %344 : vector<8x128xf32>
    %346 = vector.broadcast %338 : f32 to vector<8x128xf32>
    %347 = arith.mulf %346, %335 : vector<8x128xf32>
    %348 = arith.addf %331, %347 : vector<8x128xf32>
    %349 = vector.broadcast %339 : f32 to vector<8x128xf32>
    %350 = arith.mulf %349, %335 : vector<8x128xf32>
    %351 = arith.addf %334, %350 : vector<8x128xf32>
    %352 = vector.extract_strided_slice %3 {offsets = [0, 122], sizes = [8, 128], strides = [1, 1]} : vector<8x384xf32> to vector<8x128xf32>
    %c1_126 = arith.constant 1 : index
    %c34 = arith.constant 34 : index
    %353 = memref.load %arg0[%c1_126, %c34] : memref<5x81xf32, #tpu.memory_space<smem>>
    %c2_127 = arith.constant 2 : index
    %c34_128 = arith.constant 34 : index
    %354 = memref.load %arg0[%c2_127, %c34_128] : memref<5x81xf32, #tpu.memory_space<smem>>
    %c3_129 = arith.constant 3 : index
    %c34_130 = arith.constant 34 : index
    %355 = memref.load %arg0[%c3_129, %c34_130] : memref<5x81xf32, #tpu.memory_space<smem>>
    %c4_131 = arith.constant 4 : index
    %c34_132 = arith.constant 34 : index
    %356 = memref.load %arg0[%c4_131, %c34_132] : memref<5x81xf32, #tpu.memory_space<smem>>
    %357 = vector.broadcast %353 : f32 to vector<8x128xf32>
    %358 = arith.mulf %357, %352 : vector<8x128xf32>
    %359 = arith.addf %342, %358 : vector<8x128xf32>
    %360 = vector.broadcast %354 : f32 to vector<8x128xf32>
    %361 = arith.mulf %360, %352 : vector<8x128xf32>
    %362 = arith.addf %345, %361 : vector<8x128xf32>
    %363 = vector.broadcast %355 : f32 to vector<8x128xf32>
    %364 = arith.mulf %363, %352 : vector<8x128xf32>
    %365 = arith.addf %348, %364 : vector<8x128xf32>
    %366 = vector.broadcast %356 : f32 to vector<8x128xf32>
    %367 = arith.mulf %366, %352 : vector<8x128xf32>
    %368 = arith.addf %351, %367 : vector<8x128xf32>
    %369 = vector.extract_strided_slice %3 {offsets = [0, 123], sizes = [8, 128], strides = [1, 1]} : vector<8x384xf32> to vector<8x128xf32>
    %c1_133 = arith.constant 1 : index
    %c35 = arith.constant 35 : index
    %370 = memref.load %arg0[%c1_133, %c35] : memref<5x81xf32, #tpu.memory_space<smem>>
    %c2_134 = arith.constant 2 : index
    %c35_135 = arith.constant 35 : index
    %371 = memref.load %arg0[%c2_134, %c35_135] : memref<5x81xf32, #tpu.memory_space<smem>>
    %c3_136 = arith.constant 3 : index
    %c35_137 = arith.constant 35 : index
    %372 = memref.load %arg0[%c3_136, %c35_137] : memref<5x81xf32, #tpu.memory_space<smem>>
    %c4_138 = arith.constant 4 : index
    %c35_139 = arith.constant 35 : index
    %373 = memref.load %arg0[%c4_138, %c35_139] : memref<5x81xf32, #tpu.memory_space<smem>>
    %374 = vector.broadcast %370 : f32 to vector<8x128xf32>
    %375 = arith.mulf %374, %369 : vector<8x128xf32>
    %376 = arith.addf %359, %375 : vector<8x128xf32>
    %377 = vector.broadcast %371 : f32 to vector<8x128xf32>
    %378 = arith.mulf %377, %369 : vector<8x128xf32>
    %379 = arith.addf %362, %378 : vector<8x128xf32>
    %380 = vector.broadcast %372 : f32 to vector<8x128xf32>
    %381 = arith.mulf %380, %369 : vector<8x128xf32>
    %382 = arith.addf %365, %381 : vector<8x128xf32>
    %383 = vector.broadcast %373 : f32 to vector<8x128xf32>
    %384 = arith.mulf %383, %369 : vector<8x128xf32>
    %385 = arith.addf %368, %384 : vector<8x128xf32>
    %386 = vector.extract_strided_slice %3 {offsets = [0, 124], sizes = [8, 128], strides = [1, 1]} : vector<8x384xf32> to vector<8x128xf32>
    %c1_140 = arith.constant 1 : index
    %c36 = arith.constant 36 : index
    %387 = memref.load %arg0[%c1_140, %c36] : memref<5x81xf32, #tpu.memory_space<smem>>
    %c2_141 = arith.constant 2 : index
    %c36_142 = arith.constant 36 : index
    %388 = memref.load %arg0[%c2_141, %c36_142] : memref<5x81xf32, #tpu.memory_space<smem>>
    %c3_143 = arith.constant 3 : index
    %c36_144 = arith.constant 36 : index
    %389 = memref.load %arg0[%c3_143, %c36_144] : memref<5x81xf32, #tpu.memory_space<smem>>
    %c4_145 = arith.constant 4 : index
    %c36_146 = arith.constant 36 : index
    %390 = memref.load %arg0[%c4_145, %c36_146] : memref<5x81xf32, #tpu.memory_space<smem>>
    %391 = vector.broadcast %387 : f32 to vector<8x128xf32>
    %392 = arith.mulf %391, %386 : vector<8x128xf32>
    %393 = arith.addf %376, %392 : vector<8x128xf32>
    %394 = vector.broadcast %388 : f32 to vector<8x128xf32>
    %395 = arith.mulf %394, %386 : vector<8x128xf32>
    %396 = arith.addf %379, %395 : vector<8x128xf32>
    %397 = vector.broadcast %389 : f32 to vector<8x128xf32>
    %398 = arith.mulf %397, %386 : vector<8x128xf32>
    %399 = arith.addf %382, %398 : vector<8x128xf32>
    %400 = vector.broadcast %390 : f32 to vector<8x128xf32>
    %401 = arith.mulf %400, %386 : vector<8x128xf32>
    %402 = arith.addf %385, %401 : vector<8x128xf32>
    %403 = vector.extract_strided_slice %3 {offsets = [0, 125], sizes = [8, 128], strides = [1, 1]} : vector<8x384xf32> to vector<8x128xf32>
    %c1_147 = arith.constant 1 : index
    %c37 = arith.constant 37 : index
    %404 = memref.load %arg0[%c1_147, %c37] : memref<5x81xf32, #tpu.memory_space<smem>>
    %c2_148 = arith.constant 2 : index
    %c37_149 = arith.constant 37 : index
    %405 = memref.load %arg0[%c2_148, %c37_149] : memref<5x81xf32, #tpu.memory_space<smem>>
    %c3_150 = arith.constant 3 : index
    %c37_151 = arith.constant 37 : index
    %406 = memref.load %arg0[%c3_150, %c37_151] : memref<5x81xf32, #tpu.memory_space<smem>>
    %c4_152 = arith.constant 4 : index
    %c37_153 = arith.constant 37 : index
    %407 = memref.load %arg0[%c4_152, %c37_153] : memref<5x81xf32, #tpu.memory_space<smem>>
    %408 = vector.broadcast %404 : f32 to vector<8x128xf32>
    %409 = arith.mulf %408, %403 : vector<8x128xf32>
    %410 = arith.addf %393, %409 : vector<8x128xf32>
    %411 = vector.broadcast %405 : f32 to vector<8x128xf32>
    %412 = arith.mulf %411, %403 : vector<8x128xf32>
    %413 = arith.addf %396, %412 : vector<8x128xf32>
    %414 = vector.broadcast %406 : f32 to vector<8x128xf32>
    %415 = arith.mulf %414, %403 : vector<8x128xf32>
    %416 = arith.addf %399, %415 : vector<8x128xf32>
    %417 = vector.broadcast %407 : f32 to vector<8x128xf32>
    %418 = arith.mulf %417, %403 : vector<8x128xf32>
    %419 = arith.addf %402, %418 : vector<8x128xf32>
    %420 = vector.extract_strided_slice %3 {offsets = [0, 126], sizes = [8, 128], strides = [1, 1]} : vector<8x384xf32> to vector<8x128xf32>
    %c0_154 = arith.constant 0 : index
    %c38 = arith.constant 38 : index
    %421 = memref.load %arg0[%c0_154, %c38] : memref<5x81xf32, #tpu.memory_space<smem>>
    %c1_155 = arith.constant 1 : index
    %c38_156 = arith.constant 38 : index
    %422 = memref.load %arg0[%c1_155, %c38_156] : memref<5x81xf32, #tpu.memory_space<smem>>
    %c2_157 = arith.constant 2 : index
    %c38_158 = arith.constant 38 : index
    %423 = memref.load %arg0[%c2_157, %c38_158] : memref<5x81xf32, #tpu.memory_space<smem>>
    %c3_159 = arith.constant 3 : index
    %c38_160 = arith.constant 38 : index
    %424 = memref.load %arg0[%c3_159, %c38_160] : memref<5x81xf32, #tpu.memory_space<smem>>
    %c4_161 = arith.constant 4 : index
    %c38_162 = arith.constant 38 : index
    %425 = memref.load %arg0[%c4_161, %c38_162] : memref<5x81xf32, #tpu.memory_space<smem>>
    %426 = vector.broadcast %421 : f32 to vector<8x128xf32>
    %427 = arith.mulf %426, %420 : vector<8x128xf32>
    %428 = arith.addf %5, %427 : vector<8x128xf32>
    %429 = vector.broadcast %422 : f32 to vector<8x128xf32>
    %430 = arith.mulf %429, %420 : vector<8x128xf32>
    %431 = arith.addf %410, %430 : vector<8x128xf32>
    %432 = vector.broadcast %423 : f32 to vector<8x128xf32>
    %433 = arith.mulf %432, %420 : vector<8x128xf32>
    %434 = arith.addf %413, %433 : vector<8x128xf32>
    %435 = vector.broadcast %424 : f32 to vector<8x128xf32>
    %436 = arith.mulf %435, %420 : vector<8x128xf32>
    %437 = arith.addf %416, %436 : vector<8x128xf32>
    %438 = vector.broadcast %425 : f32 to vector<8x128xf32>
    %439 = arith.mulf %438, %420 : vector<8x128xf32>
    %440 = arith.addf %419, %439 : vector<8x128xf32>
    %441 = vector.extract_strided_slice %3 {offsets = [0, 127], sizes = [8, 128], strides = [1, 1]} : vector<8x384xf32> to vector<8x128xf32>
    %c0_163 = arith.constant 0 : index
    %c39 = arith.constant 39 : index
    %442 = memref.load %arg0[%c0_163, %c39] : memref<5x81xf32, #tpu.memory_space<smem>>
    %c1_164 = arith.constant 1 : index
    %c39_165 = arith.constant 39 : index
    %443 = memref.load %arg0[%c1_164, %c39_165] : memref<5x81xf32, #tpu.memory_space<smem>>
    %c2_166 = arith.constant 2 : index
    %c39_167 = arith.constant 39 : index
    %444 = memref.load %arg0[%c2_166, %c39_167] : memref<5x81xf32, #tpu.memory_space<smem>>
    %c3_168 = arith.constant 3 : index
    %c39_169 = arith.constant 39 : index
    %445 = memref.load %arg0[%c3_168, %c39_169] : memref<5x81xf32, #tpu.memory_space<smem>>
    %c4_170 = arith.constant 4 : index
    %c39_171 = arith.constant 39 : index
    %446 = memref.load %arg0[%c4_170, %c39_171] : memref<5x81xf32, #tpu.memory_space<smem>>
    %447 = vector.broadcast %442 : f32 to vector<8x128xf32>
    %448 = arith.mulf %447, %441 : vector<8x128xf32>
    %449 = arith.addf %428, %448 : vector<8x128xf32>
    %450 = vector.broadcast %443 : f32 to vector<8x128xf32>
    %451 = arith.mulf %450, %441 : vector<8x128xf32>
    %452 = arith.addf %431, %451 : vector<8x128xf32>
    %453 = vector.broadcast %444 : f32 to vector<8x128xf32>
    %454 = arith.mulf %453, %441 : vector<8x128xf32>
    %455 = arith.addf %434, %454 : vector<8x128xf32>
    %456 = vector.broadcast %445 : f32 to vector<8x128xf32>
    %457 = arith.mulf %456, %441 : vector<8x128xf32>
    %458 = arith.addf %437, %457 : vector<8x128xf32>
    %459 = vector.broadcast %446 : f32 to vector<8x128xf32>
    %460 = arith.mulf %459, %441 : vector<8x128xf32>
    %461 = arith.addf %440, %460 : vector<8x128xf32>
    %462 = vector.extract_strided_slice %3 {offsets = [0, 128], sizes = [8, 128], strides = [1, 1]} : vector<8x384xf32> to vector<8x128xf32>
    %c0_172 = arith.constant 0 : index
    %c40 = arith.constant 40 : index
    %463 = memref.load %arg0[%c0_172, %c40] : memref<5x81xf32, #tpu.memory_space<smem>>
    %c1_173 = arith.constant 1 : index
    %c40_174 = arith.constant 40 : index
    %464 = memref.load %arg0[%c1_173, %c40_174] : memref<5x81xf32, #tpu.memory_space<smem>>
    %c2_175 = arith.constant 2 : index
    %c40_176 = arith.constant 40 : index
    %465 = memref.load %arg0[%c2_175, %c40_176] : memref<5x81xf32, #tpu.memory_space<smem>>
    %c3_177 = arith.constant 3 : index
    %c40_178 = arith.constant 40 : index
    %466 = memref.load %arg0[%c3_177, %c40_178] : memref<5x81xf32, #tpu.memory_space<smem>>
    %c4_179 = arith.constant 4 : index
    %c40_180 = arith.constant 40 : index
    %467 = memref.load %arg0[%c4_179, %c40_180] : memref<5x81xf32, #tpu.memory_space<smem>>
    %468 = vector.broadcast %463 : f32 to vector<8x128xf32>
    %469 = arith.mulf %468, %462 : vector<8x128xf32>
    %470 = arith.addf %449, %469 : vector<8x128xf32>
    %471 = vector.broadcast %464 : f32 to vector<8x128xf32>
    %472 = arith.mulf %471, %462 : vector<8x128xf32>
    %473 = arith.addf %452, %472 : vector<8x128xf32>
    %474 = vector.broadcast %465 : f32 to vector<8x128xf32>
    %475 = arith.mulf %474, %462 : vector<8x128xf32>
    %476 = arith.addf %455, %475 : vector<8x128xf32>
    %477 = vector.broadcast %466 : f32 to vector<8x128xf32>
    %478 = arith.mulf %477, %462 : vector<8x128xf32>
    %479 = arith.addf %458, %478 : vector<8x128xf32>
    %480 = vector.broadcast %467 : f32 to vector<8x128xf32>
    %481 = arith.mulf %480, %462 : vector<8x128xf32>
    %482 = arith.addf %461, %481 : vector<8x128xf32>
    %483 = vector.extract_strided_slice %3 {offsets = [0, 129], sizes = [8, 128], strides = [1, 1]} : vector<8x384xf32> to vector<8x128xf32>
    %c0_181 = arith.constant 0 : index
    %c41 = arith.constant 41 : index
    %484 = memref.load %arg0[%c0_181, %c41] : memref<5x81xf32, #tpu.memory_space<smem>>
    %c1_182 = arith.constant 1 : index
    %c41_183 = arith.constant 41 : index
    %485 = memref.load %arg0[%c1_182, %c41_183] : memref<5x81xf32, #tpu.memory_space<smem>>
    %c2_184 = arith.constant 2 : index
    %c41_185 = arith.constant 41 : index
    %486 = memref.load %arg0[%c2_184, %c41_185] : memref<5x81xf32, #tpu.memory_space<smem>>
    %c3_186 = arith.constant 3 : index
    %c41_187 = arith.constant 41 : index
    %487 = memref.load %arg0[%c3_186, %c41_187] : memref<5x81xf32, #tpu.memory_space<smem>>
    %c4_188 = arith.constant 4 : index
    %c41_189 = arith.constant 41 : index
    %488 = memref.load %arg0[%c4_188, %c41_189] : memref<5x81xf32, #tpu.memory_space<smem>>
    %489 = vector.broadcast %484 : f32 to vector<8x128xf32>
    %490 = arith.mulf %489, %483 : vector<8x128xf32>
    %491 = arith.addf %470, %490 : vector<8x128xf32>
    %492 = vector.broadcast %485 : f32 to vector<8x128xf32>
    %493 = arith.mulf %492, %483 : vector<8x128xf32>
    %494 = arith.addf %473, %493 : vector<8x128xf32>
    %495 = vector.broadcast %486 : f32 to vector<8x128xf32>
    %496 = arith.mulf %495, %483 : vector<8x128xf32>
    %497 = arith.addf %476, %496 : vector<8x128xf32>
    %498 = vector.broadcast %487 : f32 to vector<8x128xf32>
    %499 = arith.mulf %498, %483 : vector<8x128xf32>
    %500 = arith.addf %479, %499 : vector<8x128xf32>
    %501 = vector.broadcast %488 : f32 to vector<8x128xf32>
    %502 = arith.mulf %501, %483 : vector<8x128xf32>
    %503 = arith.addf %482, %502 : vector<8x128xf32>
    %504 = vector.extract_strided_slice %3 {offsets = [0, 130], sizes = [8, 128], strides = [1, 1]} : vector<8x384xf32> to vector<8x128xf32>
    %c0_190 = arith.constant 0 : index
    %c42 = arith.constant 42 : index
    %505 = memref.load %arg0[%c0_190, %c42] : memref<5x81xf32, #tpu.memory_space<smem>>
    %c1_191 = arith.constant 1 : index
    %c42_192 = arith.constant 42 : index
    %506 = memref.load %arg0[%c1_191, %c42_192] : memref<5x81xf32, #tpu.memory_space<smem>>
    %c2_193 = arith.constant 2 : index
    %c42_194 = arith.constant 42 : index
    %507 = memref.load %arg0[%c2_193, %c42_194] : memref<5x81xf32, #tpu.memory_space<smem>>
    %c3_195 = arith.constant 3 : index
    %c42_196 = arith.constant 42 : index
    %508 = memref.load %arg0[%c3_195, %c42_196] : memref<5x81xf32, #tpu.memory_space<smem>>
    %c4_197 = arith.constant 4 : index
    %c42_198 = arith.constant 42 : index
    %509 = memref.load %arg0[%c4_197, %c42_198] : memref<5x81xf32, #tpu.memory_space<smem>>
    %510 = vector.broadcast %505 : f32 to vector<8x128xf32>
    %511 = arith.mulf %510, %504 : vector<8x128xf32>
    %512 = arith.addf %491, %511 : vector<8x128xf32>
    %513 = vector.broadcast %506 : f32 to vector<8x128xf32>
    %514 = arith.mulf %513, %504 : vector<8x128xf32>
    %515 = arith.addf %494, %514 : vector<8x128xf32>
    %516 = vector.broadcast %507 : f32 to vector<8x128xf32>
    %517 = arith.mulf %516, %504 : vector<8x128xf32>
    %518 = arith.addf %497, %517 : vector<8x128xf32>
    %519 = vector.broadcast %508 : f32 to vector<8x128xf32>
    %520 = arith.mulf %519, %504 : vector<8x128xf32>
    %521 = arith.addf %500, %520 : vector<8x128xf32>
    %522 = vector.broadcast %509 : f32 to vector<8x128xf32>
    %523 = arith.mulf %522, %504 : vector<8x128xf32>
    %524 = arith.addf %503, %523 : vector<8x128xf32>
    %525 = vector.extract_strided_slice %3 {offsets = [0, 131], sizes = [8, 128], strides = [1, 1]} : vector<8x384xf32> to vector<8x128xf32>
    %c1_199 = arith.constant 1 : index
    %c43 = arith.constant 43 : index
    %526 = memref.load %arg0[%c1_199, %c43] : memref<5x81xf32, #tpu.memory_space<smem>>
    %c2_200 = arith.constant 2 : index
    %c43_201 = arith.constant 43 : index
    %527 = memref.load %arg0[%c2_200, %c43_201] : memref<5x81xf32, #tpu.memory_space<smem>>
    %c3_202 = arith.constant 3 : index
    %c43_203 = arith.constant 43 : index
    %528 = memref.load %arg0[%c3_202, %c43_203] : memref<5x81xf32, #tpu.memory_space<smem>>
    %c4_204 = arith.constant 4 : index
    %c43_205 = arith.constant 43 : index
    %529 = memref.load %arg0[%c4_204, %c43_205] : memref<5x81xf32, #tpu.memory_space<smem>>
    %530 = vector.broadcast %526 : f32 to vector<8x128xf32>
    %531 = arith.mulf %530, %525 : vector<8x128xf32>
    %532 = arith.addf %515, %531 : vector<8x128xf32>
    %533 = vector.broadcast %527 : f32 to vector<8x128xf32>
    %534 = arith.mulf %533, %525 : vector<8x128xf32>
    %535 = arith.addf %518, %534 : vector<8x128xf32>
    %536 = vector.broadcast %528 : f32 to vector<8x128xf32>
    %537 = arith.mulf %536, %525 : vector<8x128xf32>
    %538 = arith.addf %521, %537 : vector<8x128xf32>
    %539 = vector.broadcast %529 : f32 to vector<8x128xf32>
    %540 = arith.mulf %539, %525 : vector<8x128xf32>
    %541 = arith.addf %524, %540 : vector<8x128xf32>
    %542 = vector.extract_strided_slice %3 {offsets = [0, 132], sizes = [8, 128], strides = [1, 1]} : vector<8x384xf32> to vector<8x128xf32>
    %c1_206 = arith.constant 1 : index
    %c44 = arith.constant 44 : index
    %543 = memref.load %arg0[%c1_206, %c44] : memref<5x81xf32, #tpu.memory_space<smem>>
    %c2_207 = arith.constant 2 : index
    %c44_208 = arith.constant 44 : index
    %544 = memref.load %arg0[%c2_207, %c44_208] : memref<5x81xf32, #tpu.memory_space<smem>>
    %c3_209 = arith.constant 3 : index
    %c44_210 = arith.constant 44 : index
    %545 = memref.load %arg0[%c3_209, %c44_210] : memref<5x81xf32, #tpu.memory_space<smem>>
    %c4_211 = arith.constant 4 : index
    %c44_212 = arith.constant 44 : index
    %546 = memref.load %arg0[%c4_211, %c44_212] : memref<5x81xf32, #tpu.memory_space<smem>>
    %547 = vector.broadcast %543 : f32 to vector<8x128xf32>
    %548 = arith.mulf %547, %542 : vector<8x128xf32>
    %549 = arith.addf %532, %548 : vector<8x128xf32>
    %550 = vector.broadcast %544 : f32 to vector<8x128xf32>
    %551 = arith.mulf %550, %542 : vector<8x128xf32>
    %552 = arith.addf %535, %551 : vector<8x128xf32>
    %553 = vector.broadcast %545 : f32 to vector<8x128xf32>
    %554 = arith.mulf %553, %542 : vector<8x128xf32>
    %555 = arith.addf %538, %554 : vector<8x128xf32>
    %556 = vector.broadcast %546 : f32 to vector<8x128xf32>
    %557 = arith.mulf %556, %542 : vector<8x128xf32>
    %558 = arith.addf %541, %557 : vector<8x128xf32>
    %559 = vector.extract_strided_slice %3 {offsets = [0, 133], sizes = [8, 128], strides = [1, 1]} : vector<8x384xf32> to vector<8x128xf32>
    %c1_213 = arith.constant 1 : index
    %c45 = arith.constant 45 : index
    %560 = memref.load %arg0[%c1_213, %c45] : memref<5x81xf32, #tpu.memory_space<smem>>
    %c2_214 = arith.constant 2 : index
    %c45_215 = arith.constant 45 : index
    %561 = memref.load %arg0[%c2_214, %c45_215] : memref<5x81xf32, #tpu.memory_space<smem>>
    %c3_216 = arith.constant 3 : index
    %c45_217 = arith.constant 45 : index
    %562 = memref.load %arg0[%c3_216, %c45_217] : memref<5x81xf32, #tpu.memory_space<smem>>
    %c4_218 = arith.constant 4 : index
    %c45_219 = arith.constant 45 : index
    %563 = memref.load %arg0[%c4_218, %c45_219] : memref<5x81xf32, #tpu.memory_space<smem>>
    %564 = vector.broadcast %560 : f32 to vector<8x128xf32>
    %565 = arith.mulf %564, %559 : vector<8x128xf32>
    %566 = arith.addf %549, %565 : vector<8x128xf32>
    %567 = vector.broadcast %561 : f32 to vector<8x128xf32>
    %568 = arith.mulf %567, %559 : vector<8x128xf32>
    %569 = arith.addf %552, %568 : vector<8x128xf32>
    %570 = vector.broadcast %562 : f32 to vector<8x128xf32>
    %571 = arith.mulf %570, %559 : vector<8x128xf32>
    %572 = arith.addf %555, %571 : vector<8x128xf32>
    %573 = vector.broadcast %563 : f32 to vector<8x128xf32>
    %574 = arith.mulf %573, %559 : vector<8x128xf32>
    %575 = arith.addf %558, %574 : vector<8x128xf32>
    %576 = vector.extract_strided_slice %3 {offsets = [0, 134], sizes = [8, 128], strides = [1, 1]} : vector<8x384xf32> to vector<8x128xf32>
    %c1_220 = arith.constant 1 : index
    %c46 = arith.constant 46 : index
    %577 = memref.load %arg0[%c1_220, %c46] : memref<5x81xf32, #tpu.memory_space<smem>>
    %c2_221 = arith.constant 2 : index
    %c46_222 = arith.constant 46 : index
    %578 = memref.load %arg0[%c2_221, %c46_222] : memref<5x81xf32, #tpu.memory_space<smem>>
    %c3_223 = arith.constant 3 : index
    %c46_224 = arith.constant 46 : index
    %579 = memref.load %arg0[%c3_223, %c46_224] : memref<5x81xf32, #tpu.memory_space<smem>>
    %c4_225 = arith.constant 4 : index
    %c46_226 = arith.constant 46 : index
    %580 = memref.load %arg0[%c4_225, %c46_226] : memref<5x81xf32, #tpu.memory_space<smem>>
    %581 = vector.broadcast %577 : f32 to vector<8x128xf32>
    %582 = arith.mulf %581, %576 : vector<8x128xf32>
    %583 = arith.addf %566, %582 : vector<8x128xf32>
    %584 = vector.broadcast %578 : f32 to vector<8x128xf32>
    %585 = arith.mulf %584, %576 : vector<8x128xf32>
    %586 = arith.addf %569, %585 : vector<8x128xf32>
    %587 = vector.broadcast %579 : f32 to vector<8x128xf32>
    %588 = arith.mulf %587, %576 : vector<8x128xf32>
    %589 = arith.addf %572, %588 : vector<8x128xf32>
    %590 = vector.broadcast %580 : f32 to vector<8x128xf32>
    %591 = arith.mulf %590, %576 : vector<8x128xf32>
    %592 = arith.addf %575, %591 : vector<8x128xf32>
    %593 = vector.extract_strided_slice %3 {offsets = [0, 135], sizes = [8, 128], strides = [1, 1]} : vector<8x384xf32> to vector<8x128xf32>
    %c1_227 = arith.constant 1 : index
    %c47 = arith.constant 47 : index
    %594 = memref.load %arg0[%c1_227, %c47] : memref<5x81xf32, #tpu.memory_space<smem>>
    %c2_228 = arith.constant 2 : index
    %c47_229 = arith.constant 47 : index
    %595 = memref.load %arg0[%c2_228, %c47_229] : memref<5x81xf32, #tpu.memory_space<smem>>
    %c3_230 = arith.constant 3 : index
    %c47_231 = arith.constant 47 : index
    %596 = memref.load %arg0[%c3_230, %c47_231] : memref<5x81xf32, #tpu.memory_space<smem>>
    %c4_232 = arith.constant 4 : index
    %c47_233 = arith.constant 47 : index
    %597 = memref.load %arg0[%c4_232, %c47_233] : memref<5x81xf32, #tpu.memory_space<smem>>
    %598 = vector.broadcast %594 : f32 to vector<8x128xf32>
    %599 = arith.mulf %598, %593 : vector<8x128xf32>
    %600 = arith.addf %583, %599 : vector<8x128xf32>
    %601 = vector.broadcast %595 : f32 to vector<8x128xf32>
    %602 = arith.mulf %601, %593 : vector<8x128xf32>
    %603 = arith.addf %586, %602 : vector<8x128xf32>
    %604 = vector.broadcast %596 : f32 to vector<8x128xf32>
    %605 = arith.mulf %604, %593 : vector<8x128xf32>
    %606 = arith.addf %589, %605 : vector<8x128xf32>
    %607 = vector.broadcast %597 : f32 to vector<8x128xf32>
    %608 = arith.mulf %607, %593 : vector<8x128xf32>
    %609 = arith.addf %592, %608 : vector<8x128xf32>
    %610 = vector.extract_strided_slice %3 {offsets = [0, 136], sizes = [8, 128], strides = [1, 1]} : vector<8x384xf32> to vector<8x128xf32>
    %c1_234 = arith.constant 1 : index
    %c48 = arith.constant 48 : index
    %611 = memref.load %arg0[%c1_234, %c48] : memref<5x81xf32, #tpu.memory_space<smem>>
    %c2_235 = arith.constant 2 : index
    %c48_236 = arith.constant 48 : index
    %612 = memref.load %arg0[%c2_235, %c48_236] : memref<5x81xf32, #tpu.memory_space<smem>>
    %c3_237 = arith.constant 3 : index
    %c48_238 = arith.constant 48 : index
    %613 = memref.load %arg0[%c3_237, %c48_238] : memref<5x81xf32, #tpu.memory_space<smem>>
    %c4_239 = arith.constant 4 : index
    %c48_240 = arith.constant 48 : index
    %614 = memref.load %arg0[%c4_239, %c48_240] : memref<5x81xf32, #tpu.memory_space<smem>>
    %615 = vector.broadcast %611 : f32 to vector<8x128xf32>
    %616 = arith.mulf %615, %610 : vector<8x128xf32>
    %617 = arith.addf %600, %616 : vector<8x128xf32>
    %618 = vector.broadcast %612 : f32 to vector<8x128xf32>
    %619 = arith.mulf %618, %610 : vector<8x128xf32>
    %620 = arith.addf %603, %619 : vector<8x128xf32>
    %621 = vector.broadcast %613 : f32 to vector<8x128xf32>
    %622 = arith.mulf %621, %610 : vector<8x128xf32>
    %623 = arith.addf %606, %622 : vector<8x128xf32>
    %624 = vector.broadcast %614 : f32 to vector<8x128xf32>
    %625 = arith.mulf %624, %610 : vector<8x128xf32>
    %626 = arith.addf %609, %625 : vector<8x128xf32>
    %627 = vector.extract_strided_slice %3 {offsets = [0, 137], sizes = [8, 128], strides = [1, 1]} : vector<8x384xf32> to vector<8x128xf32>
    %c1_241 = arith.constant 1 : index
    %c49 = arith.constant 49 : index
    %628 = memref.load %arg0[%c1_241, %c49] : memref<5x81xf32, #tpu.memory_space<smem>>
    %c2_242 = arith.constant 2 : index
    %c49_243 = arith.constant 49 : index
    %629 = memref.load %arg0[%c2_242, %c49_243] : memref<5x81xf32, #tpu.memory_space<smem>>
    %c3_244 = arith.constant 3 : index
    %c49_245 = arith.constant 49 : index
    %630 = memref.load %arg0[%c3_244, %c49_245] : memref<5x81xf32, #tpu.memory_space<smem>>
    %c4_246 = arith.constant 4 : index
    %c49_247 = arith.constant 49 : index
    %631 = memref.load %arg0[%c4_246, %c49_247] : memref<5x81xf32, #tpu.memory_space<smem>>
    %632 = vector.broadcast %628 : f32 to vector<8x128xf32>
    %633 = arith.mulf %632, %627 : vector<8x128xf32>
    %634 = arith.addf %617, %633 : vector<8x128xf32>
    %635 = vector.broadcast %629 : f32 to vector<8x128xf32>
    %636 = arith.mulf %635, %627 : vector<8x128xf32>
    %637 = arith.addf %620, %636 : vector<8x128xf32>
    %638 = vector.broadcast %630 : f32 to vector<8x128xf32>
    %639 = arith.mulf %638, %627 : vector<8x128xf32>
    %640 = arith.addf %623, %639 : vector<8x128xf32>
    %641 = vector.broadcast %631 : f32 to vector<8x128xf32>
    %642 = arith.mulf %641, %627 : vector<8x128xf32>
    %643 = arith.addf %626, %642 : vector<8x128xf32>
    %644 = vector.extract_strided_slice %3 {offsets = [0, 138], sizes = [8, 128], strides = [1, 1]} : vector<8x384xf32> to vector<8x128xf32>
    %c1_248 = arith.constant 1 : index
    %c50 = arith.constant 50 : index
    %645 = memref.load %arg0[%c1_248, %c50] : memref<5x81xf32, #tpu.memory_space<smem>>
    %c2_249 = arith.constant 2 : index
    %c50_250 = arith.constant 50 : index
    %646 = memref.load %arg0[%c2_249, %c50_250] : memref<5x81xf32, #tpu.memory_space<smem>>
    %c3_251 = arith.constant 3 : index
    %c50_252 = arith.constant 50 : index
    %647 = memref.load %arg0[%c3_251, %c50_252] : memref<5x81xf32, #tpu.memory_space<smem>>
    %c4_253 = arith.constant 4 : index
    %c50_254 = arith.constant 50 : index
    %648 = memref.load %arg0[%c4_253, %c50_254] : memref<5x81xf32, #tpu.memory_space<smem>>
    %649 = vector.broadcast %645 : f32 to vector<8x128xf32>
    %650 = arith.mulf %649, %644 : vector<8x128xf32>
    %651 = arith.addf %634, %650 : vector<8x128xf32>
    %652 = vector.broadcast %646 : f32 to vector<8x128xf32>
    %653 = arith.mulf %652, %644 : vector<8x128xf32>
    %654 = arith.addf %637, %653 : vector<8x128xf32>
    %655 = vector.broadcast %647 : f32 to vector<8x128xf32>
    %656 = arith.mulf %655, %644 : vector<8x128xf32>
    %657 = arith.addf %640, %656 : vector<8x128xf32>
    %658 = vector.broadcast %648 : f32 to vector<8x128xf32>
    %659 = arith.mulf %658, %644 : vector<8x128xf32>
    %660 = arith.addf %643, %659 : vector<8x128xf32>
    %661 = vector.extract_strided_slice %3 {offsets = [0, 139], sizes = [8, 128], strides = [1, 1]} : vector<8x384xf32> to vector<8x128xf32>
    %c2_255 = arith.constant 2 : index
    %c51 = arith.constant 51 : index
    %662 = memref.load %arg0[%c2_255, %c51] : memref<5x81xf32, #tpu.memory_space<smem>>
    %c3_256 = arith.constant 3 : index
    %c51_257 = arith.constant 51 : index
    %663 = memref.load %arg0[%c3_256, %c51_257] : memref<5x81xf32, #tpu.memory_space<smem>>
    %c4_258 = arith.constant 4 : index
    %c51_259 = arith.constant 51 : index
    %664 = memref.load %arg0[%c4_258, %c51_259] : memref<5x81xf32, #tpu.memory_space<smem>>
    %665 = vector.broadcast %662 : f32 to vector<8x128xf32>
    %666 = arith.mulf %665, %661 : vector<8x128xf32>
    %667 = arith.addf %654, %666 : vector<8x128xf32>
    %668 = vector.broadcast %663 : f32 to vector<8x128xf32>
    %669 = arith.mulf %668, %661 : vector<8x128xf32>
    %670 = arith.addf %657, %669 : vector<8x128xf32>
    %671 = vector.broadcast %664 : f32 to vector<8x128xf32>
    %672 = arith.mulf %671, %661 : vector<8x128xf32>
    %673 = arith.addf %660, %672 : vector<8x128xf32>
    %674 = vector.extract_strided_slice %3 {offsets = [0, 140], sizes = [8, 128], strides = [1, 1]} : vector<8x384xf32> to vector<8x128xf32>
    %c2_260 = arith.constant 2 : index
    %c52 = arith.constant 52 : index
    %675 = memref.load %arg0[%c2_260, %c52] : memref<5x81xf32, #tpu.memory_space<smem>>
    %c3_261 = arith.constant 3 : index
    %c52_262 = arith.constant 52 : index
    %676 = memref.load %arg0[%c3_261, %c52_262] : memref<5x81xf32, #tpu.memory_space<smem>>
    %c4_263 = arith.constant 4 : index
    %c52_264 = arith.constant 52 : index
    %677 = memref.load %arg0[%c4_263, %c52_264] : memref<5x81xf32, #tpu.memory_space<smem>>
    %678 = vector.broadcast %675 : f32 to vector<8x128xf32>
    %679 = arith.mulf %678, %674 : vector<8x128xf32>
    %680 = arith.addf %667, %679 : vector<8x128xf32>
    %681 = vector.broadcast %676 : f32 to vector<8x128xf32>
    %682 = arith.mulf %681, %674 : vector<8x128xf32>
    %683 = arith.addf %670, %682 : vector<8x128xf32>
    %684 = vector.broadcast %677 : f32 to vector<8x128xf32>
    %685 = arith.mulf %684, %674 : vector<8x128xf32>
    %686 = arith.addf %673, %685 : vector<8x128xf32>
    %687 = vector.extract_strided_slice %3 {offsets = [0, 141], sizes = [8, 128], strides = [1, 1]} : vector<8x384xf32> to vector<8x128xf32>
    %c2_265 = arith.constant 2 : index
    %c53 = arith.constant 53 : index
    %688 = memref.load %arg0[%c2_265, %c53] : memref<5x81xf32, #tpu.memory_space<smem>>
    %c3_266 = arith.constant 3 : index
    %c53_267 = arith.constant 53 : index
    %689 = memref.load %arg0[%c3_266, %c53_267] : memref<5x81xf32, #tpu.memory_space<smem>>
    %c4_268 = arith.constant 4 : index
    %c53_269 = arith.constant 53 : index
    %690 = memref.load %arg0[%c4_268, %c53_269] : memref<5x81xf32, #tpu.memory_space<smem>>
    %691 = vector.broadcast %688 : f32 to vector<8x128xf32>
    %692 = arith.mulf %691, %687 : vector<8x128xf32>
    %693 = arith.addf %680, %692 : vector<8x128xf32>
    %694 = vector.broadcast %689 : f32 to vector<8x128xf32>
    %695 = arith.mulf %694, %687 : vector<8x128xf32>
    %696 = arith.addf %683, %695 : vector<8x128xf32>
    %697 = vector.broadcast %690 : f32 to vector<8x128xf32>
    %698 = arith.mulf %697, %687 : vector<8x128xf32>
    %699 = arith.addf %686, %698 : vector<8x128xf32>
    %700 = vector.extract_strided_slice %3 {offsets = [0, 142], sizes = [8, 128], strides = [1, 1]} : vector<8x384xf32> to vector<8x128xf32>
    %c2_270 = arith.constant 2 : index
    %c54 = arith.constant 54 : index
    %701 = memref.load %arg0[%c2_270, %c54] : memref<5x81xf32, #tpu.memory_space<smem>>
    %c3_271 = arith.constant 3 : index
    %c54_272 = arith.constant 54 : index
    %702 = memref.load %arg0[%c3_271, %c54_272] : memref<5x81xf32, #tpu.memory_space<smem>>
    %c4_273 = arith.constant 4 : index
    %c54_274 = arith.constant 54 : index
    %703 = memref.load %arg0[%c4_273, %c54_274] : memref<5x81xf32, #tpu.memory_space<smem>>
    %704 = vector.broadcast %701 : f32 to vector<8x128xf32>
    %705 = arith.mulf %704, %700 : vector<8x128xf32>
    %706 = arith.addf %693, %705 : vector<8x128xf32>
    %707 = vector.broadcast %702 : f32 to vector<8x128xf32>
    %708 = arith.mulf %707, %700 : vector<8x128xf32>
    %709 = arith.addf %696, %708 : vector<8x128xf32>
    %710 = vector.broadcast %703 : f32 to vector<8x128xf32>
    %711 = arith.mulf %710, %700 : vector<8x128xf32>
    %712 = arith.addf %699, %711 : vector<8x128xf32>
    %713 = vector.extract_strided_slice %3 {offsets = [0, 143], sizes = [8, 128], strides = [1, 1]} : vector<8x384xf32> to vector<8x128xf32>
    %c2_275 = arith.constant 2 : index
    %c55 = arith.constant 55 : index
    %714 = memref.load %arg0[%c2_275, %c55] : memref<5x81xf32, #tpu.memory_space<smem>>
    %c3_276 = arith.constant 3 : index
    %c55_277 = arith.constant 55 : index
    %715 = memref.load %arg0[%c3_276, %c55_277] : memref<5x81xf32, #tpu.memory_space<smem>>
    %c4_278 = arith.constant 4 : index
    %c55_279 = arith.constant 55 : index
    %716 = memref.load %arg0[%c4_278, %c55_279] : memref<5x81xf32, #tpu.memory_space<smem>>
    %717 = vector.broadcast %714 : f32 to vector<8x128xf32>
    %718 = arith.mulf %717, %713 : vector<8x128xf32>
    %719 = arith.addf %706, %718 : vector<8x128xf32>
    %720 = vector.broadcast %715 : f32 to vector<8x128xf32>
    %721 = arith.mulf %720, %713 : vector<8x128xf32>
    %722 = arith.addf %709, %721 : vector<8x128xf32>
    %723 = vector.broadcast %716 : f32 to vector<8x128xf32>
    %724 = arith.mulf %723, %713 : vector<8x128xf32>
    %725 = arith.addf %712, %724 : vector<8x128xf32>
    %726 = vector.extract_strided_slice %3 {offsets = [0, 144], sizes = [8, 128], strides = [1, 1]} : vector<8x384xf32> to vector<8x128xf32>
    %c2_280 = arith.constant 2 : index
    %c56 = arith.constant 56 : index
    %727 = memref.load %arg0[%c2_280, %c56] : memref<5x81xf32, #tpu.memory_space<smem>>
    %c3_281 = arith.constant 3 : index
    %c56_282 = arith.constant 56 : index
    %728 = memref.load %arg0[%c3_281, %c56_282] : memref<5x81xf32, #tpu.memory_space<smem>>
    %c4_283 = arith.constant 4 : index
    %c56_284 = arith.constant 56 : index
    %729 = memref.load %arg0[%c4_283, %c56_284] : memref<5x81xf32, #tpu.memory_space<smem>>
    %730 = vector.broadcast %727 : f32 to vector<8x128xf32>
    %731 = arith.mulf %730, %726 : vector<8x128xf32>
    %732 = arith.addf %719, %731 : vector<8x128xf32>
    %733 = vector.broadcast %728 : f32 to vector<8x128xf32>
    %734 = arith.mulf %733, %726 : vector<8x128xf32>
    %735 = arith.addf %722, %734 : vector<8x128xf32>
    %736 = vector.broadcast %729 : f32 to vector<8x128xf32>
    %737 = arith.mulf %736, %726 : vector<8x128xf32>
    %738 = arith.addf %725, %737 : vector<8x128xf32>
    %739 = vector.extract_strided_slice %3 {offsets = [0, 145], sizes = [8, 128], strides = [1, 1]} : vector<8x384xf32> to vector<8x128xf32>
    %c2_285 = arith.constant 2 : index
    %c57 = arith.constant 57 : index
    %740 = memref.load %arg0[%c2_285, %c57] : memref<5x81xf32, #tpu.memory_space<smem>>
    %c3_286 = arith.constant 3 : index
    %c57_287 = arith.constant 57 : index
    %741 = memref.load %arg0[%c3_286, %c57_287] : memref<5x81xf32, #tpu.memory_space<smem>>
    %c4_288 = arith.constant 4 : index
    %c57_289 = arith.constant 57 : index
    %742 = memref.load %arg0[%c4_288, %c57_289] : memref<5x81xf32, #tpu.memory_space<smem>>
    %743 = vector.broadcast %740 : f32 to vector<8x128xf32>
    %744 = arith.mulf %743, %739 : vector<8x128xf32>
    %745 = arith.addf %732, %744 : vector<8x128xf32>
    %746 = vector.broadcast %741 : f32 to vector<8x128xf32>
    %747 = arith.mulf %746, %739 : vector<8x128xf32>
    %748 = arith.addf %735, %747 : vector<8x128xf32>
    %749 = vector.broadcast %742 : f32 to vector<8x128xf32>
    %750 = arith.mulf %749, %739 : vector<8x128xf32>
    %751 = arith.addf %738, %750 : vector<8x128xf32>
    %752 = vector.extract_strided_slice %3 {offsets = [0, 146], sizes = [8, 128], strides = [1, 1]} : vector<8x384xf32> to vector<8x128xf32>
    %c2_290 = arith.constant 2 : index
    %c58 = arith.constant 58 : index
    %753 = memref.load %arg0[%c2_290, %c58] : memref<5x81xf32, #tpu.memory_space<smem>>
    %c3_291 = arith.constant 3 : index
    %c58_292 = arith.constant 58 : index
    %754 = memref.load %arg0[%c3_291, %c58_292] : memref<5x81xf32, #tpu.memory_space<smem>>
    %c4_293 = arith.constant 4 : index
    %c58_294 = arith.constant 58 : index
    %755 = memref.load %arg0[%c4_293, %c58_294] : memref<5x81xf32, #tpu.memory_space<smem>>
    %756 = vector.broadcast %753 : f32 to vector<8x128xf32>
    %757 = arith.mulf %756, %752 : vector<8x128xf32>
    %758 = arith.addf %745, %757 : vector<8x128xf32>
    %759 = vector.broadcast %754 : f32 to vector<8x128xf32>
    %760 = arith.mulf %759, %752 : vector<8x128xf32>
    %761 = arith.addf %748, %760 : vector<8x128xf32>
    %762 = vector.broadcast %755 : f32 to vector<8x128xf32>
    %763 = arith.mulf %762, %752 : vector<8x128xf32>
    %764 = arith.addf %751, %763 : vector<8x128xf32>
    %765 = vector.extract_strided_slice %3 {offsets = [0, 147], sizes = [8, 128], strides = [1, 1]} : vector<8x384xf32> to vector<8x128xf32>
    %c2_295 = arith.constant 2 : index
    %c59 = arith.constant 59 : index
    %766 = memref.load %arg0[%c2_295, %c59] : memref<5x81xf32, #tpu.memory_space<smem>>
    %c3_296 = arith.constant 3 : index
    %c59_297 = arith.constant 59 : index
    %767 = memref.load %arg0[%c3_296, %c59_297] : memref<5x81xf32, #tpu.memory_space<smem>>
    %c4_298 = arith.constant 4 : index
    %c59_299 = arith.constant 59 : index
    %768 = memref.load %arg0[%c4_298, %c59_299] : memref<5x81xf32, #tpu.memory_space<smem>>
    %769 = vector.broadcast %766 : f32 to vector<8x128xf32>
    %770 = arith.mulf %769, %765 : vector<8x128xf32>
    %771 = arith.addf %758, %770 : vector<8x128xf32>
    %772 = vector.broadcast %767 : f32 to vector<8x128xf32>
    %773 = arith.mulf %772, %765 : vector<8x128xf32>
    %774 = arith.addf %761, %773 : vector<8x128xf32>
    %775 = vector.broadcast %768 : f32 to vector<8x128xf32>
    %776 = arith.mulf %775, %765 : vector<8x128xf32>
    %777 = arith.addf %764, %776 : vector<8x128xf32>
    %778 = vector.extract_strided_slice %3 {offsets = [0, 148], sizes = [8, 128], strides = [1, 1]} : vector<8x384xf32> to vector<8x128xf32>
    %c2_300 = arith.constant 2 : index
    %c60 = arith.constant 60 : index
    %779 = memref.load %arg0[%c2_300, %c60] : memref<5x81xf32, #tpu.memory_space<smem>>
    %c3_301 = arith.constant 3 : index
    %c60_302 = arith.constant 60 : index
    %780 = memref.load %arg0[%c3_301, %c60_302] : memref<5x81xf32, #tpu.memory_space<smem>>
    %c4_303 = arith.constant 4 : index
    %c60_304 = arith.constant 60 : index
    %781 = memref.load %arg0[%c4_303, %c60_304] : memref<5x81xf32, #tpu.memory_space<smem>>
    %782 = vector.broadcast %779 : f32 to vector<8x128xf32>
    %783 = arith.mulf %782, %778 : vector<8x128xf32>
    %784 = arith.addf %771, %783 : vector<8x128xf32>
    %785 = vector.broadcast %780 : f32 to vector<8x128xf32>
    %786 = arith.mulf %785, %778 : vector<8x128xf32>
    %787 = arith.addf %774, %786 : vector<8x128xf32>
    %788 = vector.broadcast %781 : f32 to vector<8x128xf32>
    %789 = arith.mulf %788, %778 : vector<8x128xf32>
    %790 = arith.addf %777, %789 : vector<8x128xf32>
    %791 = vector.extract_strided_slice %3 {offsets = [0, 149], sizes = [8, 128], strides = [1, 1]} : vector<8x384xf32> to vector<8x128xf32>
    %c3_305 = arith.constant 3 : index
    %c61 = arith.constant 61 : index
    %792 = memref.load %arg0[%c3_305, %c61] : memref<5x81xf32, #tpu.memory_space<smem>>
    %c4_306 = arith.constant 4 : index
    %c61_307 = arith.constant 61 : index
    %793 = memref.load %arg0[%c4_306, %c61_307] : memref<5x81xf32, #tpu.memory_space<smem>>
    %794 = vector.broadcast %792 : f32 to vector<8x128xf32>
    %795 = arith.mulf %794, %791 : vector<8x128xf32>
    %796 = arith.addf %787, %795 : vector<8x128xf32>
    %797 = vector.broadcast %793 : f32 to vector<8x128xf32>
    %798 = arith.mulf %797, %791 : vector<8x128xf32>
    %799 = arith.addf %790, %798 : vector<8x128xf32>
    %800 = vector.extract_strided_slice %3 {offsets = [0, 150], sizes = [8, 128], strides = [1, 1]} : vector<8x384xf32> to vector<8x128xf32>
    %c3_308 = arith.constant 3 : index
    %c62 = arith.constant 62 : index
    %801 = memref.load %arg0[%c3_308, %c62] : memref<5x81xf32, #tpu.memory_space<smem>>
    %c4_309 = arith.constant 4 : index
    %c62_310 = arith.constant 62 : index
    %802 = memref.load %arg0[%c4_309, %c62_310] : memref<5x81xf32, #tpu.memory_space<smem>>
    %803 = vector.broadcast %801 : f32 to vector<8x128xf32>
    %804 = arith.mulf %803, %800 : vector<8x128xf32>
    %805 = arith.addf %796, %804 : vector<8x128xf32>
    %806 = vector.broadcast %802 : f32 to vector<8x128xf32>
    %807 = arith.mulf %806, %800 : vector<8x128xf32>
    %808 = arith.addf %799, %807 : vector<8x128xf32>
    %809 = vector.extract_strided_slice %3 {offsets = [0, 151], sizes = [8, 128], strides = [1, 1]} : vector<8x384xf32> to vector<8x128xf32>
    %c3_311 = arith.constant 3 : index
    %c63 = arith.constant 63 : index
    %810 = memref.load %arg0[%c3_311, %c63] : memref<5x81xf32, #tpu.memory_space<smem>>
    %c4_312 = arith.constant 4 : index
    %c63_313 = arith.constant 63 : index
    %811 = memref.load %arg0[%c4_312, %c63_313] : memref<5x81xf32, #tpu.memory_space<smem>>
    %812 = vector.broadcast %810 : f32 to vector<8x128xf32>
    %813 = arith.mulf %812, %809 : vector<8x128xf32>
    %814 = arith.addf %805, %813 : vector<8x128xf32>
    %815 = vector.broadcast %811 : f32 to vector<8x128xf32>
    %816 = arith.mulf %815, %809 : vector<8x128xf32>
    %817 = arith.addf %808, %816 : vector<8x128xf32>
    %818 = vector.extract_strided_slice %3 {offsets = [0, 152], sizes = [8, 128], strides = [1, 1]} : vector<8x384xf32> to vector<8x128xf32>
    %c3_314 = arith.constant 3 : index
    %c64 = arith.constant 64 : index
    %819 = memref.load %arg0[%c3_314, %c64] : memref<5x81xf32, #tpu.memory_space<smem>>
    %c4_315 = arith.constant 4 : index
    %c64_316 = arith.constant 64 : index
    %820 = memref.load %arg0[%c4_315, %c64_316] : memref<5x81xf32, #tpu.memory_space<smem>>
    %821 = vector.broadcast %819 : f32 to vector<8x128xf32>
    %822 = arith.mulf %821, %818 : vector<8x128xf32>
    %823 = arith.addf %814, %822 : vector<8x128xf32>
    %824 = vector.broadcast %820 : f32 to vector<8x128xf32>
    %825 = arith.mulf %824, %818 : vector<8x128xf32>
    %826 = arith.addf %817, %825 : vector<8x128xf32>
    %827 = vector.extract_strided_slice %3 {offsets = [0, 153], sizes = [8, 128], strides = [1, 1]} : vector<8x384xf32> to vector<8x128xf32>
    %c3_317 = arith.constant 3 : index
    %c65 = arith.constant 65 : index
    %828 = memref.load %arg0[%c3_317, %c65] : memref<5x81xf32, #tpu.memory_space<smem>>
    %c4_318 = arith.constant 4 : index
    %c65_319 = arith.constant 65 : index
    %829 = memref.load %arg0[%c4_318, %c65_319] : memref<5x81xf32, #tpu.memory_space<smem>>
    %830 = vector.broadcast %828 : f32 to vector<8x128xf32>
    %831 = arith.mulf %830, %827 : vector<8x128xf32>
    %832 = arith.addf %823, %831 : vector<8x128xf32>
    %833 = vector.broadcast %829 : f32 to vector<8x128xf32>
    %834 = arith.mulf %833, %827 : vector<8x128xf32>
    %835 = arith.addf %826, %834 : vector<8x128xf32>
    %836 = vector.extract_strided_slice %3 {offsets = [0, 154], sizes = [8, 128], strides = [1, 1]} : vector<8x384xf32> to vector<8x128xf32>
    %c3_320 = arith.constant 3 : index
    %c66 = arith.constant 66 : index
    %837 = memref.load %arg0[%c3_320, %c66] : memref<5x81xf32, #tpu.memory_space<smem>>
    %c4_321 = arith.constant 4 : index
    %c66_322 = arith.constant 66 : index
    %838 = memref.load %arg0[%c4_321, %c66_322] : memref<5x81xf32, #tpu.memory_space<smem>>
    %839 = vector.broadcast %837 : f32 to vector<8x128xf32>
    %840 = arith.mulf %839, %836 : vector<8x128xf32>
    %841 = arith.addf %832, %840 : vector<8x128xf32>
    %842 = vector.broadcast %838 : f32 to vector<8x128xf32>
    %843 = arith.mulf %842, %836 : vector<8x128xf32>
    %844 = arith.addf %835, %843 : vector<8x128xf32>
    %845 = vector.extract_strided_slice %3 {offsets = [0, 155], sizes = [8, 128], strides = [1, 1]} : vector<8x384xf32> to vector<8x128xf32>
    %c3_323 = arith.constant 3 : index
    %c67 = arith.constant 67 : index
    %846 = memref.load %arg0[%c3_323, %c67] : memref<5x81xf32, #tpu.memory_space<smem>>
    %c4_324 = arith.constant 4 : index
    %c67_325 = arith.constant 67 : index
    %847 = memref.load %arg0[%c4_324, %c67_325] : memref<5x81xf32, #tpu.memory_space<smem>>
    %848 = vector.broadcast %846 : f32 to vector<8x128xf32>
    %849 = arith.mulf %848, %845 : vector<8x128xf32>
    %850 = arith.addf %841, %849 : vector<8x128xf32>
    %851 = vector.broadcast %847 : f32 to vector<8x128xf32>
    %852 = arith.mulf %851, %845 : vector<8x128xf32>
    %853 = arith.addf %844, %852 : vector<8x128xf32>
    %854 = vector.extract_strided_slice %3 {offsets = [0, 156], sizes = [8, 128], strides = [1, 1]} : vector<8x384xf32> to vector<8x128xf32>
    %c3_326 = arith.constant 3 : index
    %c68 = arith.constant 68 : index
    %855 = memref.load %arg0[%c3_326, %c68] : memref<5x81xf32, #tpu.memory_space<smem>>
    %c4_327 = arith.constant 4 : index
    %c68_328 = arith.constant 68 : index
    %856 = memref.load %arg0[%c4_327, %c68_328] : memref<5x81xf32, #tpu.memory_space<smem>>
    %857 = vector.broadcast %855 : f32 to vector<8x128xf32>
    %858 = arith.mulf %857, %854 : vector<8x128xf32>
    %859 = arith.addf %850, %858 : vector<8x128xf32>
    %860 = vector.broadcast %856 : f32 to vector<8x128xf32>
    %861 = arith.mulf %860, %854 : vector<8x128xf32>
    %862 = arith.addf %853, %861 : vector<8x128xf32>
    %863 = vector.extract_strided_slice %3 {offsets = [0, 157], sizes = [8, 128], strides = [1, 1]} : vector<8x384xf32> to vector<8x128xf32>
    %c3_329 = arith.constant 3 : index
    %c69 = arith.constant 69 : index
    %864 = memref.load %arg0[%c3_329, %c69] : memref<5x81xf32, #tpu.memory_space<smem>>
    %c4_330 = arith.constant 4 : index
    %c69_331 = arith.constant 69 : index
    %865 = memref.load %arg0[%c4_330, %c69_331] : memref<5x81xf32, #tpu.memory_space<smem>>
    %866 = vector.broadcast %864 : f32 to vector<8x128xf32>
    %867 = arith.mulf %866, %863 : vector<8x128xf32>
    %868 = arith.addf %859, %867 : vector<8x128xf32>
    %869 = vector.broadcast %865 : f32 to vector<8x128xf32>
    %870 = arith.mulf %869, %863 : vector<8x128xf32>
    %871 = arith.addf %862, %870 : vector<8x128xf32>
    %872 = vector.extract_strided_slice %3 {offsets = [0, 158], sizes = [8, 128], strides = [1, 1]} : vector<8x384xf32> to vector<8x128xf32>
    %c3_332 = arith.constant 3 : index
    %c70 = arith.constant 70 : index
    %873 = memref.load %arg0[%c3_332, %c70] : memref<5x81xf32, #tpu.memory_space<smem>>
    %c4_333 = arith.constant 4 : index
    %c70_334 = arith.constant 70 : index
    %874 = memref.load %arg0[%c4_333, %c70_334] : memref<5x81xf32, #tpu.memory_space<smem>>
    %875 = vector.broadcast %873 : f32 to vector<8x128xf32>
    %876 = arith.mulf %875, %872 : vector<8x128xf32>
    %877 = arith.addf %868, %876 : vector<8x128xf32>
    %878 = vector.broadcast %874 : f32 to vector<8x128xf32>
    %879 = arith.mulf %878, %872 : vector<8x128xf32>
    %880 = arith.addf %871, %879 : vector<8x128xf32>
    %881 = vector.extract_strided_slice %3 {offsets = [0, 159], sizes = [8, 128], strides = [1, 1]} : vector<8x384xf32> to vector<8x128xf32>
    %c4_335 = arith.constant 4 : index
    %c71 = arith.constant 71 : index
    %882 = memref.load %arg0[%c4_335, %c71] : memref<5x81xf32, #tpu.memory_space<smem>>
    %883 = vector.broadcast %882 : f32 to vector<8x128xf32>
    %884 = arith.mulf %883, %881 : vector<8x128xf32>
    %885 = arith.addf %880, %884 : vector<8x128xf32>
    %886 = vector.extract_strided_slice %3 {offsets = [0, 160], sizes = [8, 128], strides = [1, 1]} : vector<8x384xf32> to vector<8x128xf32>
    %c4_336 = arith.constant 4 : index
    %c72 = arith.constant 72 : index
    %887 = memref.load %arg0[%c4_336, %c72] : memref<5x81xf32, #tpu.memory_space<smem>>
    %888 = vector.broadcast %887 : f32 to vector<8x128xf32>
    %889 = arith.mulf %888, %886 : vector<8x128xf32>
    %890 = arith.addf %885, %889 : vector<8x128xf32>
    %891 = vector.extract_strided_slice %3 {offsets = [0, 161], sizes = [8, 128], strides = [1, 1]} : vector<8x384xf32> to vector<8x128xf32>
    %c4_337 = arith.constant 4 : index
    %c73 = arith.constant 73 : index
    %892 = memref.load %arg0[%c4_337, %c73] : memref<5x81xf32, #tpu.memory_space<smem>>
    %893 = vector.broadcast %892 : f32 to vector<8x128xf32>
    %894 = arith.mulf %893, %891 : vector<8x128xf32>
    %895 = arith.addf %890, %894 : vector<8x128xf32>
    %896 = vector.extract_strided_slice %3 {offsets = [0, 162], sizes = [8, 128], strides = [1, 1]} : vector<8x384xf32> to vector<8x128xf32>
    %c4_338 = arith.constant 4 : index
    %c74 = arith.constant 74 : index
    %897 = memref.load %arg0[%c4_338, %c74] : memref<5x81xf32, #tpu.memory_space<smem>>
    %898 = vector.broadcast %897 : f32 to vector<8x128xf32>
    %899 = arith.mulf %898, %896 : vector<8x128xf32>
    %900 = arith.addf %895, %899 : vector<8x128xf32>
    %901 = vector.extract_strided_slice %3 {offsets = [0, 163], sizes = [8, 128], strides = [1, 1]} : vector<8x384xf32> to vector<8x128xf32>
    %c4_339 = arith.constant 4 : index
    %c75 = arith.constant 75 : index
    %902 = memref.load %arg0[%c4_339, %c75] : memref<5x81xf32, #tpu.memory_space<smem>>
    %903 = vector.broadcast %902 : f32 to vector<8x128xf32>
    %904 = arith.mulf %903, %901 : vector<8x128xf32>
    %905 = arith.addf %900, %904 : vector<8x128xf32>
    %906 = vector.extract_strided_slice %3 {offsets = [0, 164], sizes = [8, 128], strides = [1, 1]} : vector<8x384xf32> to vector<8x128xf32>
    %c4_340 = arith.constant 4 : index
    %c76 = arith.constant 76 : index
    %907 = memref.load %arg0[%c4_340, %c76] : memref<5x81xf32, #tpu.memory_space<smem>>
    %908 = vector.broadcast %907 : f32 to vector<8x128xf32>
    %909 = arith.mulf %908, %906 : vector<8x128xf32>
    %910 = arith.addf %905, %909 : vector<8x128xf32>
    %911 = vector.extract_strided_slice %3 {offsets = [0, 165], sizes = [8, 128], strides = [1, 1]} : vector<8x384xf32> to vector<8x128xf32>
    %c4_341 = arith.constant 4 : index
    %c77 = arith.constant 77 : index
    %912 = memref.load %arg0[%c4_341, %c77] : memref<5x81xf32, #tpu.memory_space<smem>>
    %913 = vector.broadcast %912 : f32 to vector<8x128xf32>
    %914 = arith.mulf %913, %911 : vector<8x128xf32>
    %915 = arith.addf %910, %914 : vector<8x128xf32>
    %916 = vector.extract_strided_slice %3 {offsets = [0, 166], sizes = [8, 128], strides = [1, 1]} : vector<8x384xf32> to vector<8x128xf32>
    %c4_342 = arith.constant 4 : index
    %c78 = arith.constant 78 : index
    %917 = memref.load %arg0[%c4_342, %c78] : memref<5x81xf32, #tpu.memory_space<smem>>
    %918 = vector.broadcast %917 : f32 to vector<8x128xf32>
    %919 = arith.mulf %918, %916 : vector<8x128xf32>
    %920 = arith.addf %915, %919 : vector<8x128xf32>
    %921 = vector.extract_strided_slice %3 {offsets = [0, 167], sizes = [8, 128], strides = [1, 1]} : vector<8x384xf32> to vector<8x128xf32>
    %c4_343 = arith.constant 4 : index
    %c79 = arith.constant 79 : index
    %922 = memref.load %arg0[%c4_343, %c79] : memref<5x81xf32, #tpu.memory_space<smem>>
    %923 = vector.broadcast %922 : f32 to vector<8x128xf32>
    %924 = arith.mulf %923, %921 : vector<8x128xf32>
    %925 = arith.addf %920, %924 : vector<8x128xf32>
    %926 = vector.extract_strided_slice %3 {offsets = [0, 168], sizes = [8, 128], strides = [1, 1]} : vector<8x384xf32> to vector<8x128xf32>
    %c4_344 = arith.constant 4 : index
    %c80 = arith.constant 80 : index
    %927 = memref.load %arg0[%c4_344, %c80] : memref<5x81xf32, #tpu.memory_space<smem>>
    %928 = vector.broadcast %927 : f32 to vector<8x128xf32>
    %929 = arith.mulf %928, %926 : vector<8x128xf32>
    %930 = arith.addf %925, %929 : vector<8x128xf32>
    %c0_345 = arith.constant 0 : index
    %c0_346 = arith.constant 0 : index
    %931 = vector.load %arg3[%c0_345, %c0_346] : memref<8x640xf32, #tpu.memory_space<vmem>>, vector<8x128xf32>
    tpu.vector_store %arg3[%c0_345, %c0_346], %512 {strides = array<i32>} : memref<8x640xf32, #tpu.memory_space<vmem>>, vector<8x128xf32>,
    %c0_347 = arith.constant 0 : index
    %c128 = arith.constant 128 : index
    %932 = vector.load %arg3[%c0_347, %c128] : memref<8x640xf32, #tpu.memory_space<vmem>>, vector<8x128xf32>
    tpu.vector_store %arg3[%c0_347, %c128], %651 {strides = array<i32>} : memref<8x640xf32, #tpu.memory_space<vmem>>, vector<8x128xf32>,
    %c0_348 = arith.constant 0 : index
    %c256 = arith.constant 256 : index
    %933 = vector.load %arg3[%c0_348, %c256] : memref<8x640xf32, #tpu.memory_space<vmem>>, vector<8x128xf32>
    tpu.vector_store %arg3[%c0_348, %c256], %784 {strides = array<i32>} : memref<8x640xf32, #tpu.memory_space<vmem>>, vector<8x128xf32>,
    %c0_349 = arith.constant 0 : index
    %c384 = arith.constant 384 : index
    %934 = vector.load %arg3[%c0_349, %c384] : memref<8x640xf32, #tpu.memory_space<vmem>>, vector<8x128xf32>
    tpu.vector_store %arg3[%c0_349, %c384], %877 {strides = array<i32>} : memref<8x640xf32, #tpu.memory_space<vmem>>, vector<8x128xf32>,
    %c0_350 = arith.constant 0 : index
    %c512 = arith.constant 512 : index
    %935 = vector.load %arg3[%c0_350, %c512] : memref<8x640xf32, #tpu.memory_space<vmem>>, vector<8x128xf32>
    tpu.vector_store %arg3[%c0_350, %c512], %930 {strides = array<i32>} : memref<8x640xf32, #tpu.memory_space<vmem>>, vector<8x128xf32>,
    return
  }
}

</mosaic_0001>

<llo_original>
// kernel: inception_block.1
$region0: #{inception_block.1}
  #allocation0 [shape = 'u32[]', space=smem, size = 0x4, offset = 0x4, fixed_abs, tag = 'smem constant byte address 0x4 - core index']
  #allocation1 [shape = 'u32[144,128]{1,0:T(1,128)}', space=vmem, size = 0x12000, scoped, tag = 'internal scratch']
  %s0 = inlined_call_operand.hbm [shape: f32[5,81], index: 0, kind: input, shape index: {}]
  %s1 = inlined_call_operand.vmem [shape: f32[5], index: 1, kind: input, shape index: {}]
  %s2 = inlined_call_operand.hbm [shape: f32[8,128], index: 2, kind: input, shape index: {}]
  %s3 = inlined_call_operand.hbm [shape: f32[8,640], index: 3, kind: output, shape index: {}]
  %s4 = sld [smem:[#allocation0]]
  $region34: #{inception_block.1} parent=0
    _
  %s6 = ssub.s32 1, %s4
  %s7 = scalar_select 0, %s6, %s4
  $region1: #{inception_block.1} parent=0
    #allocation2 [shape = 'u8[4096]{0}', space=smem, size = 0x1000, scoped, tag = 'input window, operand 0, single buffered']
    #allocation3 [shape = 's32[1]{0}', space=sflag, size = 0x4, scoped, tag = 'scoped memory for inception_block.1']
    #allocation4 [shape = 's32[1]{0}', space=sflag, size = 0x4, scoped, tag = 'scoped memory for inception_block.1']
    #allocation5 [shape = 's32[1]{0}', space=sflag, size = 0x4, scoped, tag = 'scoped memory for inception_block.1']
    #allocation6 [shape = 's32[1]{0}', space=sflag, size = 0x4, scoped, tag = 'scoped memory for inception_block.1']
    #allocation7 [shape = 'u8[512]{0}', space=smem, size = 0x200, scoped, tag = 'input window, operand 1, single buffered']
    #allocation8 [shape = 'u8[4096]{0}', space=vmem, size = 0x1000, scoped, tag = 'input window, operand 2, single buffered']
    #allocation9 [shape = 'u8[20480]{0}', space=vmem, size = 0x5000, scoped, tag = 'output window, operand 0, single buffered']
    %8 = vsyncpa [#allocation5], 0
    %9 = vsyncpa [#allocation6], 0
    %10 = vsyncpa [#allocation3], 0
    %11 = vsyncpa [#allocation4], 0
    // Predicated region
    $region2: #{inception_block.1} parent=1 // pred_check
      _
    $region3: #{inception_block.1} parent=1 // pred_check_branch
      %13 = sbr.rel (0) target = $region5
    $region4: #{inception_block.1} parent=1 // pred_region
      %s15 = ssub.s32 128, 128
      %16 = vsyncadd [#allocation5], %s15
      %19 = dma.hbm_to_smem %s0, 128, [#allocation2], [#allocation5]
    $region5: #{inception_block.1} parent=1 // pred_fallthru
      _
    // Predicated region
    $region6: #{inception_block.1} parent=1 // pred_check
      _
    $region7: #{inception_block.1} parent=1 // pred_check_branch
      %21 = sbr.rel (0) target = $region9
    $region8: #{inception_block.1} parent=1 // pred_region
      %s23 = ssub.s32 16, 16
      %24 = vsyncadd [#allocation6], %s23
      %s26 = sshll.u32 %s1, 4
      %s27 = int_to_ptr.vmem [resolvable:$true] %s26
      %29 = dma.vmem_to_smem %s27, 16, [#allocation7], [#allocation6]
    $region9: #{inception_block.1} parent=1 // pred_fallthru
      _
    // Predicated region
    $region10: #{inception_block.1} parent=1 // pred_check
      _
    $region11: #{inception_block.1} parent=1 // pred_check_branch
      %31 = sbr.rel (0) target = $region13
    $region12: #{inception_block.1} parent=1 // pred_region
      %s33 = ssub.s32 128, 128
      %34 = vsyncadd [#allocation3], %s33
      %s36 = sshll.u32 [#allocation8], 4
      %s37 = int_to_ptr.vmem [resolvable:$true] %s36
      %39 = dma.hbm_to_vmem [thread:$0]  %s2, 128, %s37, [#allocation3]
    $region13: #{inception_block.1} parent=1 // pred_fallthru
      _
    // Predicated region
    $region14: #{inception_block.1} parent=1 // pred_check
      _
    $region15: #{inception_block.1} parent=1 // pred_check_branch
      %41 = sbr.rel (0) target = $region17
    $region16: #{inception_block.1} parent=1 // pred_region
      %42 = dma.done [#allocation5], 128
    $region17: #{inception_block.1} parent=1 // pred_fallthru
      _
    // Predicated region
    $region18: #{inception_block.1} parent=1 // pred_check
      _
    $region19: #{inception_block.1} parent=1 // pred_check_branch
      %44 = sbr.rel (0) target = $region21
    $region20: #{inception_block.1} parent=1 // pred_region
      %45 = dma.done [#allocation6], 16
    $region21: #{inception_block.1} parent=1 // pred_fallthru
      _
    // Predicated region
    $region22: #{inception_block.1} parent=1 // pred_check
      _
    $region23: #{inception_block.1} parent=1 // pred_check_branch
      %47 = sbr.rel (0) target = $region25
    $region24: #{inception_block.1} parent=1 // pred_region
      %48 = dma.done [#allocation3], 128
    $region25: #{inception_block.1} parent=1 // pred_fallthru
      _
    %49 = sfence
    %v50 = vld [vmem:[#allocation8] sm:$0xff]
    %s51 = sld [smem:[#allocation7]]
    %v52 = vstv %s51
    %s53 = sld [smem:[#allocation7 + $0x1]]
    %v54 = vstv %s53
    %s55 = sld [smem:[#allocation7 + $0x2]]
    %v56 = vstv %s55
    %s57 = sld [smem:[#allocation7 + $0x3]]
    %v58 = vstv %s57
    %s59 = sld [smem:[#allocation7 + $0x4]]
    %v60 = vstv %s59
    %s61 = sld [smem:[#allocation2 + $0x200]]
    %v62 = vstv %s61
    %v63 = vmul.f32 %v62, 0.0
    %v64 = vmul.f32 %v62, %v50
    %v65 = vadd.f32 %v60, %v63
    %v66 = vadd.f32 %v60, %v64
    %s67 = sld [smem:[#allocation2 + $0x201]]
    %v68 = vstv %s67
    %v69 = vmul.f32 %v68, 0.0
    %v70 = vmul.f32 %v68, %v50
    %73 = vrot.lane.b32.xlu0 %v69, 127
    %v74 = vpop.permute.xlu0 %73
    %75 = vrot.lane.b32.xlu0 %v70, 127
    %v76 = vpop.permute.xlu0 %75
    %vm77 = vcmask 1039360
    %v78 = vsel %vm77, %v74, %v76
    %v81 = vadd.f32 %v65, %v78
    %v82 = vadd.f32 %v66, %v76
    %s83 = sld [smem:[#allocation2 + $0x202]]
    %v84 = vstv %s83
    %v85 = vmul.f32 %v84, 0.0
    %v86 = vmul.f32 %v84, %v50
    %89 = vrot.lane.b32.xlu0 %v85, 126
    %v90 = vpop.permute.xlu0 %89
    %91 = vrot.lane.b32.xlu0 %v86, 126
    %v92 = vpop.permute.xlu0 %91
    %vm93 = vcmask 1031168
    %v94 = vsel %vm93, %v90, %v92
    %v97 = vadd.f32 %v81, %v94
    %v98 = vadd.f32 %v82, %v92
    %s99 = sld [smem:[#allocation2 + $0x203]]
    %v100 = vstv %s99
    %v101 = vmul.f32 %v100, 0.0
    %v102 = vmul.f32 %v100, %v50
    %105 = vrot.lane.b32.xlu0 %v101, 125
    %v106 = vpop.permute.xlu0 %105
    %107 = vrot.lane.b32.xlu0 %v102, 125
    %v108 = vpop.permute.xlu0 %107
    %vm109 = vcmask 1022976
    %v110 = vsel %vm109, %v106, %v108
    %v113 = vadd.f32 %v97, %v110
    %v114 = vadd.f32 %v98, %v108
    %s115 = sld [smem:[#allocation2 + $0x204]]
    %v116 = vstv %s115
    %v117 = vmul.f32 %v116, 0.0
    %v118 = vmul.f32 %v116, %v50
    %121 = vrot.lane.b32.xlu0 %v117, 124
    %v122 = vpop.permute.xlu0 %121
    %123 = vrot.lane.b32.xlu0 %v118, 124
    %v124 = vpop.permute.xlu0 %123
    %vm125 = vcmask 1014784
    %v126 = vsel %vm125, %v122, %v124
    %v129 = vadd.f32 %v113, %v126
    %v130 = vadd.f32 %v114, %v124
    %s131 = sld [smem:[#allocation2 + $0x205]]
    %v132 = vstv %s131
    %v133 = vmul.f32 %v132, 0.0
    %v134 = vmul.f32 %v132, %v50
    %137 = vrot.lane.b32.xlu0 %v133, 123
    %v138 = vpop.permute.xlu0 %137
    %139 = vrot.lane.b32.xlu0 %v134, 123
    %v140 = vpop.permute.xlu0 %139
    %vm141 = vcmask 1006592
    %v142 = vsel %vm141, %v138, %v140
    %v145 = vadd.f32 %v129, %v142
    %v146 = vadd.f32 %v130, %v140
    %s147 = sld [smem:[#allocation2 + $0x206]]
    %v148 = vstv %s147
    %v149 = vmul.f32 %v148, 0.0
    %v150 = vmul.f32 %v148, %v50
    %153 = vrot.lane.b32.xlu0 %v149, 122
    %v154 = vpop.permute.xlu0 %153
    %155 = vrot.lane.b32.xlu0 %v150, 122
    %v156 = vpop.permute.xlu0 %155
    %vm157 = vcmask 998400
    %v158 = vsel %vm157, %v154, %v156
    %v161 = vadd.f32 %v145, %v158
    %v162 = vadd.f32 %v146, %v156
    %s163 = sld [smem:[#allocation2 + $0x207]]
    %v164 = vstv %s163
    %v165 = vmul.f32 %v164, 0.0
    %v166 = vmul.f32 %v164, %v50
    %169 = vrot.lane.b32.xlu0 %v165, 121
    %v170 = vpop.permute.xlu0 %169
    %171 = vrot.lane.b32.xlu0 %v166, 121
    %v172 = vpop.permute.xlu0 %171
    %vm173 = vcmask 990208
    %v174 = vsel %vm173, %v170, %v172
    %v177 = vadd.f32 %v161, %v174
    %v178 = vadd.f32 %v162, %v172
    %s179 = sld [smem:[#allocation2 + $0x208]]
    %v180 = vstv %s179
    %v181 = vmul.f32 %v180, 0.0
    %v182 = vmul.f32 %v180, %v50
    %185 = vrot.lane.b32.xlu0 %v181, 120
    %v186 = vpop.permute.xlu0 %185
    %187 = vrot.lane.b32.xlu0 %v182, 120
    %v188 = vpop.permute.xlu0 %187
    %vm189 = vcmask 982016
    %v190 = vsel %vm189, %v186, %v188
    %v193 = vadd.f32 %v177, %v190
    %v194 = vadd.f32 %v178, %v188
    %s195 = sld [smem:[#allocation2 + $0x209]]
    %v196 = vstv %s195
    %v197 = vmul.f32 %v196, 0.0
    %v198 = vmul.f32 %v196, %v50
    %201 = vrot.lane.b32.xlu0 %v197, 119
    %v202 = vpop.permute.xlu0 %201
    %203 = vrot.lane.b32.xlu0 %v198, 119
    %v204 = vpop.permute.xlu0 %203
    %vm205 = vcmask 973824
    %v206 = vsel %vm205, %v202, %v204
    %v209 = vadd.f32 %v193, %v206
    %v210 = vadd.f32 %v194, %v204
    %s211 = sld [smem:[#allocation2 + $0x18a]]
    %s212 = sld [smem:[#allocation2 + $0x20a]]
    %v213 = vstv %s211
    %v214 = vmul.f32 %v213, 0.0
    %v215 = vmul.f32 %v213, %v50
    %v216 = vadd.f32 %v58, %v214
    %v217 = vadd.f32 %v58, %v215
    %v218 = vstv %s212
    %v219 = vmul.f32 %v218, 0.0
    %v220 = vmul.f32 %v218, %v50
    %223 = vrot.lane.b32.xlu0 %v219, 118
    %v224 = vpop.permute.xlu0 %223
    %225 = vrot.lane.b32.xlu0 %v220, 118
    %v226 = vpop.permute.xlu0 %225
    %vm227 = vcmask 965632
    %v228 = vsel %vm227, %v224, %v226
    %v231 = vadd.f32 %v209, %v228
    %v232 = vadd.f32 %v210, %v226
    %s233 = sld [smem:[#allocation2 + $0x18b]]
    %s234 = sld [smem:[#allocation2 + $0x20b]]
    %v235 = vstv %s233
    %v236 = vmul.f32 %v235, 0.0
    %v237 = vmul.f32 %v235, %v50
    %240 = vrot.lane.b32.xlu0 %v236, 127
    %v241 = vpop.permute.xlu0 %240
    %242 = vrot.lane.b32.xlu0 %v237, 127
    %v243 = vpop.permute.xlu0 %242
    %v244 = vsel %vm77, %v241, %v243
    %v247 = vadd.f32 %v216, %v244
    %v248 = vadd.f32 %v217, %v243
    %v249 = vstv %s234
    %v250 = vmul.f32 %v249, 0.0
    %v251 = vmul.f32 %v249, %v50
    %254 = vrot.lane.b32.xlu0 %v250, 117
    %v255 = vpop.permute.xlu0 %254
    %256 = vrot.lane.b32.xlu0 %v251, 117
    %v257 = vpop.permute.xlu0 %256
    %vm258 = vcmask 957440
    %v259 = vsel %vm258, %v255, %v257
    %v262 = vadd.f32 %v231, %v259
    %v263 = vadd.f32 %v232, %v257
    %s264 = sld [smem:[#allocation2 + $0x18c]]
    %s265 = sld [smem:[#allocation2 + $0x20c]]
    %v266 = vstv %s264
    %v267 = vmul.f32 %v266, 0.0
    %v268 = vmul.f32 %v266, %v50
    %271 = vrot.lane.b32.xlu0 %v267, 126
    %v272 = vpop.permute.xlu0 %271
    %273 = vrot.lane.b32.xlu0 %v268, 126
    %v274 = vpop.permute.xlu0 %273
    %v275 = vsel %vm93, %v272, %v274
    %v278 = vadd.f32 %v247, %v275
    %v279 = vadd.f32 %v248, %v274
    %v280 = vstv %s265
    %v281 = vmul.f32 %v280, 0.0
    %v282 = vmul.f32 %v280, %v50
    %285 = vrot.lane.b32.xlu0 %v281, 116
    %v286 = vpop.permute.xlu0 %285
    %287 = vrot.lane.b32.xlu0 %v282, 116
    %v288 = vpop.permute.xlu0 %287
    %vm289 = vcmask 949248
    %v290 = vsel %vm289, %v286, %v288
    %v293 = vadd.f32 %v262, %v290
    %v294 = vadd.f32 %v263, %v288
    %s295 = sld [smem:[#allocation2 + $0x18d]]
    %s296 = sld [smem:[#allocation2 + $0x20d]]
    %v297 = vstv %s295
    %v298 = vmul.f32 %v297, 0.0
    %v299 = vmul.f32 %v297, %v50
    %302 = vrot.lane.b32.xlu0 %v298, 125
    %v303 = vpop.permute.xlu0 %302
    %304 = vrot.lane.b32.xlu0 %v299, 125
    %v305 = vpop.permute.xlu0 %304
    %v306 = vsel %vm109, %v303, %v305
    %v309 = vadd.f32 %v278, %v306
    %v310 = vadd.f32 %v279, %v305
    %v311 = vstv %s296
    %v312 = vmul.f32 %v311, 0.0
    %v313 = vmul.f32 %v311, %v50
    %316 = vrot.lane.b32.xlu0 %v312, 115
    %v317 = vpop.permute.xlu0 %316
    %318 = vrot.lane.b32.xlu0 %v313, 115
    %v319 = vpop.permute.xlu0 %318
    %vm320 = vcmask 941056
    %v321 = vsel %vm320, %v317, %v319
    %v324 = vadd.f32 %v293, %v321
    %v325 = vadd.f32 %v294, %v319
    %s326 = sld [smem:[#allocation2 + $0x18e]]
    %s327 = sld [smem:[#allocation2 + $0x20e]]
    %v328 = vstv %s326
    %v329 = vmul.f32 %v328, 0.0
    %v330 = vmul.f32 %v328, %v50
    %333 = vrot.lane.b32.xlu0 %v329, 124
    %v334 = vpop.permute.xlu0 %333
    %335 = vrot.lane.b32.xlu0 %v330, 124
    %v336 = vpop.permute.xlu0 %335
    %v337 = vsel %vm125, %v334, %v336
    %v340 = vadd.f32 %v309, %v337
    %v341 = vadd.f32 %v310, %v336
    %v342 = vstv %s327
    %v343 = vmul.f32 %v342, 0.0
    %v344 = vmul.f32 %v342, %v50
    %347 = vrot.lane.b32.xlu0 %v343, 114
    %v348 = vpop.permute.xlu0 %347
    %349 = vrot.lane.b32.xlu0 %v344, 114
    %v350 = vpop.permute.xlu0 %349
    %vm351 = vcmask 932864
    %v352 = vsel %vm351, %v348, %v350
    %v355 = vadd.f32 %v324, %v352
    %v356 = vadd.f32 %v325, %v350
    %s357 = sld [smem:[#allocation2 + $0x18f]]
    %s358 = sld [smem:[#allocation2 + $0x20f]]
    %v359 = vstv %s357
    %v360 = vmul.f32 %v359, 0.0
    %v361 = vmul.f32 %v359, %v50
    %364 = vrot.lane.b32.xlu0 %v360, 123
    %v365 = vpop.permute.xlu0 %364
    %366 = vrot.lane.b32.xlu0 %v361, 123
    %v367 = vpop.permute.xlu0 %366
    %v368 = vsel %vm141, %v365, %v367
    %v371 = vadd.f32 %v340, %v368
    %v372 = vadd.f32 %v341, %v367
    %v373 = vstv %s358
    %v374 = vmul.f32 %v373, 0.0
    %v375 = vmul.f32 %v373, %v50
    %378 = vrot.lane.b32.xlu0 %v374, 113
    %v379 = vpop.permute.xlu0 %378
    %380 = vrot.lane.b32.xlu0 %v375, 113
    %v381 = vpop.permute.xlu0 %380
    %vm382 = vcmask 924672
    %v383 = vsel %vm382, %v379, %v381
    %v386 = vadd.f32 %v355, %v383
    %v387 = vadd.f32 %v356, %v381
    %s388 = sld [smem:[#allocation2 + $0x190]]
    %s389 = sld [smem:[#allocation2 + $0x210]]
    %v390 = vstv %s388
    %v391 = vmul.f32 %v390, 0.0
    %v392 = vmul.f32 %v390, %v50
    %395 = vrot.lane.b32.xlu0 %v391, 122
    %v396 = vpop.permute.xlu0 %395
    %397 = vrot.lane.b32.xlu0 %v392, 122
    %v398 = vpop.permute.xlu0 %397
    %v399 = vsel %vm157, %v396, %v398
    %v402 = vadd.f32 %v371, %v399
    %v403 = vadd.f32 %v372, %v398
    %v404 = vstv %s389
    %v405 = vmul.f32 %v404, 0.0
    %v406 = vmul.f32 %v404, %v50
    %409 = vrot.lane.b32.xlu0 %v405, 112
    %v410 = vpop.permute.xlu0 %409
    %411 = vrot.lane.b32.xlu0 %v406, 112
    %v412 = vpop.permute.xlu0 %411
    %vm413 = vcmask 916480
    %v414 = vsel %vm413, %v410, %v412
    %v417 = vadd.f32 %v386, %v414
    %v418 = vadd.f32 %v387, %v412
    %s419 = sld [smem:[#allocation2 + $0x191]]
    %s420 = sld [smem:[#allocation2 + $0x211]]
    %v421 = vstv %s419
    %v422 = vmul.f32 %v421, 0.0
    %v423 = vmul.f32 %v421, %v50
    %426 = vrot.lane.b32.xlu0 %v422, 121
    %v427 = vpop.permute.xlu0 %426
    %428 = vrot.lane.b32.xlu0 %v423, 121
    %v429 = vpop.permute.xlu0 %428
    %v430 = vsel %vm173, %v427, %v429
    %v433 = vadd.f32 %v402, %v430
    %v434 = vadd.f32 %v403, %v429
    %v435 = vstv %s420
    %v436 = vmul.f32 %v435, 0.0
    %v437 = vmul.f32 %v435, %v50
    %440 = vrot.lane.b32.xlu0 %v436, 111
    %v441 = vpop.permute.xlu0 %440
    %442 = vrot.lane.b32.xlu0 %v437, 111
    %v443 = vpop.permute.xlu0 %442
    %vm444 = vcmask 908288
    %v445 = vsel %vm444, %v441, %v443
    %v448 = vadd.f32 %v417, %v445
    %v449 = vadd.f32 %v418, %v443
    %s450 = sld [smem:[#allocation2 + $0x192]]
    %s451 = sld [smem:[#allocation2 + $0x212]]
    %v452 = vstv %s450
    %v453 = vmul.f32 %v452, 0.0
    %v454 = vmul.f32 %v452, %v50
    %457 = vrot.lane.b32.xlu0 %v453, 120
    %v458 = vpop.permute.xlu0 %457
    %459 = vrot.lane.b32.xlu0 %v454, 120
    %v460 = vpop.permute.xlu0 %459
    %v461 = vsel %vm189, %v458, %v460
    %v464 = vadd.f32 %v433, %v461
    %v465 = vadd.f32 %v434, %v460
    %v466 = vstv %s451
    %v467 = vmul.f32 %v466, 0.0
    %v468 = vmul.f32 %v466, %v50
    %471 = vrot.lane.b32.xlu0 %v467, 110
    %v472 = vpop.permute.xlu0 %471
    %473 = vrot.lane.b32.xlu0 %v468, 110
    %v474 = vpop.permute.xlu0 %473
    %vm475 = vcmask 900096
    %v476 = vsel %vm475, %v472, %v474
    %v479 = vadd.f32 %v448, %v476
    %v480 = vadd.f32 %v449, %v474
    %s481 = sld [smem:[#allocation2 + $0x193]]
    %s482 = sld [smem:[#allocation2 + $0x213]]
    %v483 = vstv %s481
    %v484 = vmul.f32 %v483, 0.0
    %v485 = vmul.f32 %v483, %v50
    %488 = vrot.lane.b32.xlu0 %v484, 119
    %v489 = vpop.permute.xlu0 %488
    %490 = vrot.lane.b32.xlu0 %v485, 119
    %v491 = vpop.permute.xlu0 %490
    %v492 = vsel %vm205, %v489, %v491
    %v495 = vadd.f32 %v464, %v492
    %v496 = vadd.f32 %v465, %v491
    %v497 = vstv %s482
    %v498 = vmul.f32 %v497, 0.0
    %v499 = vmul.f32 %v497, %v50
    %502 = vrot.lane.b32.xlu0 %v498, 109
    %v503 = vpop.permute.xlu0 %502
    %504 = vrot.lane.b32.xlu0 %v499, 109
    %v505 = vpop.permute.xlu0 %504
    %vm506 = vcmask 891904
    %v507 = vsel %vm506, %v503, %v505
    %v510 = vadd.f32 %v479, %v507
    %v511 = vadd.f32 %v480, %v505
    %s512 = sld [smem:[#allocation2 + $0x114]]
    %s513 = sld [smem:[#allocation2 + $0x194]]
    %s514 = sld [smem:[#allocation2 + $0x214]]
    %v515 = vstv %s512
    %v516 = vmul.f32 %v515, 0.0
    %v517 = vmul.f32 %v515, %v50
    %v518 = vadd.f32 %v56, %v516
    %v519 = vadd.f32 %v56, %v517
    %v520 = vstv %s513
    %v521 = vmul.f32 %v520, 0.0
    %v522 = vmul.f32 %v520, %v50
    %525 = vrot.lane.b32.xlu0 %v521, 118
    %v526 = vpop.permute.xlu0 %525
    %527 = vrot.lane.b32.xlu0 %v522, 118
    %v528 = vpop.permute.xlu0 %527
    %v529 = vsel %vm227, %v526, %v528
    %v532 = vadd.f32 %v495, %v529
    %v533 = vadd.f32 %v496, %v528
    %v534 = vstv %s514
    %v535 = vmul.f32 %v534, 0.0
    %v536 = vmul.f32 %v534, %v50
    %539 = vrot.lane.b32.xlu0 %v535, 108
    %v540 = vpop.permute.xlu0 %539
    %541 = vrot.lane.b32.xlu0 %v536, 108
    %v542 = vpop.permute.xlu0 %541
    %vm543 = vcmask 883712
    %v544 = vsel %vm543, %v540, %v542
    %v547 = vadd.f32 %v510, %v544
    %v548 = vadd.f32 %v511, %v542
    %s549 = sld [smem:[#allocation2 + $0x115]]
    %s550 = sld [smem:[#allocation2 + $0x195]]
    %s551 = sld [smem:[#allocation2 + $0x215]]
    %v552 = vstv %s549
    %v553 = vmul.f32 %v552, 0.0
    %v554 = vmul.f32 %v552, %v50
    %557 = vrot.lane.b32.xlu0 %v553, 127
    %v558 = vpop.permute.xlu0 %557
    %559 = vrot.lane.b32.xlu0 %v554, 127
    %v560 = vpop.permute.xlu0 %559
    %v561 = vsel %vm77, %v558, %v560
    %v564 = vadd.f32 %v518, %v561
    %v565 = vadd.f32 %v519, %v560
    %v566 = vstv %s550
    %v567 = vmul.f32 %v566, 0.0
    %v568 = vmul.f32 %v566, %v50
    %571 = vrot.lane.b32.xlu0 %v567, 117
    %v572 = vpop.permute.xlu0 %571
    %573 = vrot.lane.b32.xlu0 %v568, 117
    %v574 = vpop.permute.xlu0 %573
    %v575 = vsel %vm258, %v572, %v574
    %v578 = vadd.f32 %v532, %v575
    %v579 = vadd.f32 %v533, %v574
    %v580 = vstv %s551
    %v581 = vmul.f32 %v580, 0.0
    %v582 = vmul.f32 %v580, %v50
    %585 = vrot.lane.b32.xlu0 %v581, 107
    %v586 = vpop.permute.xlu0 %585
    %587 = vrot.lane.b32.xlu0 %v582, 107
    %v588 = vpop.permute.xlu0 %587
    %vm589 = vcmask 875520
    %v590 = vsel %vm589, %v586, %v588
    %v593 = vadd.f32 %v547, %v590
    %v594 = vadd.f32 %v548, %v588
    %s595 = sld [smem:[#allocation2 + $0x116]]
    %s596 = sld [smem:[#allocation2 + $0x196]]
    %s597 = sld [smem:[#allocation2 + $0x216]]
    %v598 = vstv %s595
    %v599 = vmul.f32 %v598, 0.0
    %v600 = vmul.f32 %v598, %v50
    %603 = vrot.lane.b32.xlu0 %v599, 126
    %v604 = vpop.permute.xlu0 %603
    %605 = vrot.lane.b32.xlu0 %v600, 126
    %v606 = vpop.permute.xlu0 %605
    %v607 = vsel %vm93, %v604, %v606
    %v610 = vadd.f32 %v564, %v607
    %v611 = vadd.f32 %v565, %v606
    %v612 = vstv %s596
    %v613 = vmul.f32 %v612, 0.0
    %v614 = vmul.f32 %v612, %v50
    %617 = vrot.lane.b32.xlu0 %v613, 116
    %v618 = vpop.permute.xlu0 %617
    %619 = vrot.lane.b32.xlu0 %v614, 116
    %v620 = vpop.permute.xlu0 %619
    %v621 = vsel %vm289, %v618, %v620
    %v624 = vadd.f32 %v578, %v621
    %v625 = vadd.f32 %v579, %v620
    %v626 = vstv %s597
    %v627 = vmul.f32 %v626, 0.0
    %v628 = vmul.f32 %v626, %v50
    %631 = vrot.lane.b32.xlu0 %v627, 106
    %v632 = vpop.permute.xlu0 %631
    %633 = vrot.lane.b32.xlu0 %v628, 106
    %v634 = vpop.permute.xlu0 %633
    %vm635 = vcmask 867328
    %v636 = vsel %vm635, %v632, %v634
    %v639 = vadd.f32 %v593, %v636
    %v640 = vadd.f32 %v594, %v634
    %s641 = sld [smem:[#allocation2 + $0x117]]
    %s642 = sld [smem:[#allocation2 + $0x197]]
    %s643 = sld [smem:[#allocation2 + $0x217]]
    %v644 = vstv %s641
    %v645 = vmul.f32 %v644, 0.0
    %v646 = vmul.f32 %v644, %v50
    %649 = vrot.lane.b32.xlu0 %v645, 125
    %v650 = vpop.permute.xlu0 %649
    %651 = vrot.lane.b32.xlu0 %v646, 125
    %v652 = vpop.permute.xlu0 %651
    %v653 = vsel %vm109, %v650, %v652
    %v656 = vadd.f32 %v610, %v653
    %v657 = vadd.f32 %v611, %v652
    %v658 = vstv %s642
    %v659 = vmul.f32 %v658, 0.0
    %v660 = vmul.f32 %v658, %v50
    %663 = vrot.lane.b32.xlu0 %v659, 115
    %v664 = vpop.permute.xlu0 %663
    %665 = vrot.lane.b32.xlu0 %v660, 115
    %v666 = vpop.permute.xlu0 %665
    %v667 = vsel %vm320, %v664, %v666
    %v670 = vadd.f32 %v624, %v667
    %v671 = vadd.f32 %v625, %v666
    %v672 = vstv %s643
    %v673 = vmul.f32 %v672, 0.0
    %v674 = vmul.f32 %v672, %v50
    %677 = vrot.lane.b32.xlu0 %v673, 105
    %v678 = vpop.permute.xlu0 %677
    %679 = vrot.lane.b32.xlu0 %v674, 105
    %v680 = vpop.permute.xlu0 %679
    %vm681 = vcmask 859136
    %v682 = vsel %vm681, %v678, %v680
    %v685 = vadd.f32 %v639, %v682
    %v686 = vadd.f32 %v640, %v680
    %s687 = sld [smem:[#allocation2 + $0x118]]
    %s688 = sld [smem:[#allocation2 + $0x198]]
    %s689 = sld [smem:[#allocation2 + $0x218]]
    %v690 = vstv %s687
    %v691 = vmul.f32 %v690, 0.0
    %v692 = vmul.f32 %v690, %v50
    %695 = vrot.lane.b32.xlu0 %v691, 124
    %v696 = vpop.permute.xlu0 %695
    %697 = vrot.lane.b32.xlu0 %v692, 124
    %v698 = vpop.permute.xlu0 %697
    %v699 = vsel %vm125, %v696, %v698
    %v702 = vadd.f32 %v656, %v699
    %v703 = vadd.f32 %v657, %v698
    %v704 = vstv %s688
    %v705 = vmul.f32 %v704, 0.0
    %v706 = vmul.f32 %v704, %v50
    %709 = vrot.lane.b32.xlu0 %v705, 114
    %v710 = vpop.permute.xlu0 %709
    %711 = vrot.lane.b32.xlu0 %v706, 114
    %v712 = vpop.permute.xlu0 %711
    %v713 = vsel %vm351, %v710, %v712
    %v716 = vadd.f32 %v670, %v713
    %v717 = vadd.f32 %v671, %v712
    %v718 = vstv %s689
    %v719 = vmul.f32 %v718, 0.0
    %v720 = vmul.f32 %v718, %v50
    %723 = vrot.lane.b32.xlu0 %v719, 104
    %v724 = vpop.permute.xlu0 %723
    %725 = vrot.lane.b32.xlu0 %v720, 104
    %v726 = vpop.permute.xlu0 %725
    %vm727 = vcmask 850944
    %v728 = vsel %vm727, %v724, %v726
    %v731 = vadd.f32 %v685, %v728
    %v732 = vadd.f32 %v686, %v726
    %s733 = sld [smem:[#allocation2 + $0x119]]
    %s734 = sld [smem:[#allocation2 + $0x199]]
    %s735 = sld [smem:[#allocation2 + $0x219]]
    %v736 = vstv %s733
    %v737 = vmul.f32 %v736, 0.0
    %v738 = vmul.f32 %v736, %v50
    %741 = vrot.lane.b32.xlu0 %v737, 123
    %v742 = vpop.permute.xlu0 %741
    %743 = vrot.lane.b32.xlu0 %v738, 123
    %v744 = vpop.permute.xlu0 %743
    %v745 = vsel %vm141, %v742, %v744
    %v748 = vadd.f32 %v702, %v745
    %v749 = vadd.f32 %v703, %v744
    %v750 = vstv %s734
    %v751 = vmul.f32 %v750, 0.0
    %v752 = vmul.f32 %v750, %v50
    %755 = vrot.lane.b32.xlu0 %v751, 113
    %v756 = vpop.permute.xlu0 %755
    %757 = vrot.lane.b32.xlu0 %v752, 113
    %v758 = vpop.permute.xlu0 %757
    %v759 = vsel %vm382, %v756, %v758
    %v762 = vadd.f32 %v716, %v759
    %v763 = vadd.f32 %v717, %v758
    %v764 = vstv %s735
    %v765 = vmul.f32 %v764, 0.0
    %v766 = vmul.f32 %v764, %v50
    %769 = vrot.lane.b32.xlu0 %v765, 103
    %v770 = vpop.permute.xlu0 %769
    %771 = vrot.lane.b32.xlu0 %v766, 103
    %v772 = vpop.permute.xlu0 %771
    %vm773 = vcmask 842752
    %v774 = vsel %vm773, %v770, %v772
    %v777 = vadd.f32 %v731, %v774
    %v778 = vadd.f32 %v732, %v772
    %s779 = sld [smem:[#allocation2 + $0x11a]]
    %s780 = sld [smem:[#allocation2 + $0x19a]]
    %s781 = sld [smem:[#allocation2 + $0x21a]]
    %v782 = vstv %s779
    %v783 = vmul.f32 %v782, 0.0
    %v784 = vmul.f32 %v782, %v50
    %787 = vrot.lane.b32.xlu0 %v783, 122
    %v788 = vpop.permute.xlu0 %787
    %789 = vrot.lane.b32.xlu0 %v784, 122
    %v790 = vpop.permute.xlu0 %789
    %v791 = vsel %vm157, %v788, %v790
    %v794 = vadd.f32 %v748, %v791
    %v795 = vadd.f32 %v749, %v790
    %v796 = vstv %s780
    %v797 = vmul.f32 %v796, 0.0
    %v798 = vmul.f32 %v796, %v50
    %801 = vrot.lane.b32.xlu0 %v797, 112
    %v802 = vpop.permute.xlu0 %801
    %803 = vrot.lane.b32.xlu0 %v798, 112
    %v804 = vpop.permute.xlu0 %803
    %v805 = vsel %vm413, %v802, %v804
    %v808 = vadd.f32 %v762, %v805
    %v809 = vadd.f32 %v763, %v804
    %v810 = vstv %s781
    %v811 = vmul.f32 %v810, 0.0
    %v812 = vmul.f32 %v810, %v50
    %815 = vrot.lane.b32.xlu0 %v811, 102
    %v816 = vpop.permute.xlu0 %815
    %817 = vrot.lane.b32.xlu0 %v812, 102
    %v818 = vpop.permute.xlu0 %817
    %vm819 = vcmask 834560
    %v820 = vsel %vm819, %v816, %v818
    %v823 = vadd.f32 %v777, %v820
    %v824 = vadd.f32 %v778, %v818
    %s825 = sld [smem:[#allocation2 + $0x11b]]
    %s826 = sld [smem:[#allocation2 + $0x19b]]
    %s827 = sld [smem:[#allocation2 + $0x21b]]
    %v828 = vstv %s825
    %v829 = vmul.f32 %v828, 0.0
    %v830 = vmul.f32 %v828, %v50
    %833 = vrot.lane.b32.xlu0 %v829, 121
    %v834 = vpop.permute.xlu0 %833
    %835 = vrot.lane.b32.xlu0 %v830, 121
    %v836 = vpop.permute.xlu0 %835
    %v837 = vsel %vm173, %v834, %v836
    %v840 = vadd.f32 %v794, %v837
    %v841 = vadd.f32 %v795, %v836
    %v842 = vstv %s826
    %v843 = vmul.f32 %v842, 0.0
    %v844 = vmul.f32 %v842, %v50
    %847 = vrot.lane.b32.xlu0 %v843, 111
    %v848 = vpop.permute.xlu0 %847
    %849 = vrot.lane.b32.xlu0 %v844, 111
    %v850 = vpop.permute.xlu0 %849
    %v851 = vsel %vm444, %v848, %v850
    %v854 = vadd.f32 %v808, %v851
    %v855 = vadd.f32 %v809, %v850
    %v856 = vstv %s827
    %v857 = vmul.f32 %v856, 0.0
    %v858 = vmul.f32 %v856, %v50
    %861 = vrot.lane.b32.xlu0 %v857, 101
    %v862 = vpop.permute.xlu0 %861
    %863 = vrot.lane.b32.xlu0 %v858, 101
    %v864 = vpop.permute.xlu0 %863
    %vm865 = vcmask 826368
    %v866 = vsel %vm865, %v862, %v864
    %v869 = vadd.f32 %v823, %v866
    %v870 = vadd.f32 %v824, %v864
    %s871 = sld [smem:[#allocation2 + $0x11c]]
    %s872 = sld [smem:[#allocation2 + $0x19c]]
    %s873 = sld [smem:[#allocation2 + $0x21c]]
    %v874 = vstv %s871
    %v875 = vmul.f32 %v874, 0.0
    %v876 = vmul.f32 %v874, %v50
    %879 = vrot.lane.b32.xlu0 %v875, 120
    %v880 = vpop.permute.xlu0 %879
    %881 = vrot.lane.b32.xlu0 %v876, 120
    %v882 = vpop.permute.xlu0 %881
    %v883 = vsel %vm189, %v880, %v882
    %v886 = vadd.f32 %v840, %v883
    %v887 = vadd.f32 %v841, %v882
    %v888 = vstv %s872
    %v889 = vmul.f32 %v888, 0.0
    %v890 = vmul.f32 %v888, %v50
    %893 = vrot.lane.b32.xlu0 %v889, 110
    %v894 = vpop.permute.xlu0 %893
    %895 = vrot.lane.b32.xlu0 %v890, 110
    %v896 = vpop.permute.xlu0 %895
    %v897 = vsel %vm475, %v894, %v896
    %v900 = vadd.f32 %v854, %v897
    %v901 = vadd.f32 %v855, %v896
    %v902 = vstv %s873
    %v903 = vmul.f32 %v902, 0.0
    %v904 = vmul.f32 %v902, %v50
    %907 = vrot.lane.b32.xlu0 %v903, 100
    %v908 = vpop.permute.xlu0 %907
    %909 = vrot.lane.b32.xlu0 %v904, 100
    %v910 = vpop.permute.xlu0 %909
    %vm911 = vcmask 818176
    %v912 = vsel %vm911, %v908, %v910
    %v915 = vadd.f32 %v869, %v912
    %v916 = vadd.f32 %v870, %v910
    %s917 = sld [smem:[#allocation2 + $0x11d]]
    %s918 = sld [smem:[#allocation2 + $0x19d]]
    %s919 = sld [smem:[#allocation2 + $0x21d]]
    %v920 = vstv %s917
    %v921 = vmul.f32 %v920, 0.0
    %v922 = vmul.f32 %v920, %v50
    %925 = vrot.lane.b32.xlu0 %v921, 119
    %v926 = vpop.permute.xlu0 %925
    %927 = vrot.lane.b32.xlu0 %v922, 119
    %v928 = vpop.permute.xlu0 %927
    %v929 = vsel %vm205, %v926, %v928
    %v932 = vadd.f32 %v886, %v929
    %v933 = vadd.f32 %v887, %v928
    %v934 = vstv %s918
    %v935 = vmul.f32 %v934, 0.0
    %v936 = vmul.f32 %v934, %v50
    %939 = vrot.lane.b32.xlu0 %v935, 109
    %v940 = vpop.permute.xlu0 %939
    %941 = vrot.lane.b32.xlu0 %v936, 109
    %v942 = vpop.permute.xlu0 %941
    %v943 = vsel %vm506, %v940, %v942
    %v946 = vadd.f32 %v900, %v943
    %v947 = vadd.f32 %v901, %v942
    %v948 = vstv %s919
    %v949 = vmul.f32 %v948, 0.0
    %v950 = vmul.f32 %v948, %v50
    %953 = vrot.lane.b32.xlu0 %v949, 99
    %v954 = vpop.permute.xlu0 %953
    %955 = vrot.lane.b32.xlu0 %v950, 99
    %v956 = vpop.permute.xlu0 %955
    %vm957 = vcmask 809984
    %v958 = vsel %vm957, %v954, %v956
    %v961 = vadd.f32 %v915, %v958
    %v962 = vadd.f32 %v916, %v956
    %s963 = sld [smem:[#allocation2 + $0x9e]]
    %s964 = sld [smem:[#allocation2 + $0x11e]]
    %s965 = sld [smem:[#allocation2 + $0x19e]]
    %s966 = sld [smem:[#allocation2 + $0x21e]]
    %v967 = vstv %s963
    %v968 = vmul.f32 %v967, 0.0
    %v969 = vmul.f32 %v967, %v50
    %v970 = vadd.f32 %v54, %v968
    %v971 = vadd.f32 %v54, %v969
    %v972 = vstv %s964
    %v973 = vmul.f32 %v972, 0.0
    %v974 = vmul.f32 %v972, %v50
    %977 = vrot.lane.b32.xlu0 %v973, 118
    %v978 = vpop.permute.xlu0 %977
    %979 = vrot.lane.b32.xlu0 %v974, 118
    %v980 = vpop.permute.xlu0 %979
    %v981 = vsel %vm227, %v978, %v980
    %v984 = vadd.f32 %v932, %v981
    %v985 = vadd.f32 %v933, %v980
    %v986 = vstv %s965
    %v987 = vmul.f32 %v986, 0.0
    %v988 = vmul.f32 %v986, %v50
    %991 = vrot.lane.b32.xlu0 %v987, 108
    %v992 = vpop.permute.xlu0 %991
    %993 = vrot.lane.b32.xlu0 %v988, 108
    %v994 = vpop.permute.xlu0 %993
    %v995 = vsel %vm543, %v992, %v994
    %v998 = vadd.f32 %v946, %v995
    %v999 = vadd.f32 %v947, %v994
    %v1000 = vstv %s966
    %v1001 = vmul.f32 %v1000, 0.0
    %v1002 = vmul.f32 %v1000, %v50
    %1005 = vrot.lane.b32.xlu0 %v1001, 98
    %v1006 = vpop.permute.xlu0 %1005
    %1007 = vrot.lane.b32.xlu0 %v1002, 98
    %v1008 = vpop.permute.xlu0 %1007
    %vm1009 = vcmask 801792
    %v1010 = vsel %vm1009, %v1006, %v1008
    %v1013 = vadd.f32 %v961, %v1010
    %v1014 = vadd.f32 %v962, %v1008
    %s1015 = sld [smem:[#allocation2 + $0x9f]]
    %s1016 = sld [smem:[#allocation2 + $0x11f]]
    %s1017 = sld [smem:[#allocation2 + $0x19f]]
    %s1018 = sld [smem:[#allocation2 + $0x21f]]
    %v1019 = vstv %s1015
    %v1020 = vmul.f32 %v1019, 0.0
    %v1021 = vmul.f32 %v1019, %v50
    %1024 = vrot.lane.b32.xlu0 %v1020, 127
    %v1025 = vpop.permute.xlu0 %1024
    %1026 = vrot.lane.b32.xlu0 %v1021, 127
    %v1027 = vpop.permute.xlu0 %1026
    %v1028 = vsel %vm77, %v1025, %v1027
    %v1031 = vadd.f32 %v970, %v1028
    %v1032 = vadd.f32 %v971, %v1027
    %v1033 = vstv %s1016
    %v1034 = vmul.f32 %v1033, 0.0
    %v1035 = vmul.f32 %v1033, %v50
    %1038 = vrot.lane.b32.xlu0 %v1034, 117
    %v1039 = vpop.permute.xlu0 %1038
    %1040 = vrot.lane.b32.xlu0 %v1035, 117
    %v1041 = vpop.permute.xlu0 %1040
    %v1042 = vsel %vm258, %v1039, %v1041
    %v1045 = vadd.f32 %v984, %v1042
    %v1046 = vadd.f32 %v985, %v1041
    %v1047 = vstv %s1017
    %v1048 = vmul.f32 %v1047, 0.0
    %v1049 = vmul.f32 %v1047, %v50
    %1052 = vrot.lane.b32.xlu0 %v1048, 107
    %v1053 = vpop.permute.xlu0 %1052
    %1054 = vrot.lane.b32.xlu0 %v1049, 107
    %v1055 = vpop.permute.xlu0 %1054
    %v1056 = vsel %vm589, %v1053, %v1055
    %v1059 = vadd.f32 %v998, %v1056
    %v1060 = vadd.f32 %v999, %v1055
    %v1061 = vstv %s1018
    %v1062 = vmul.f32 %v1061, 0.0
    %v1063 = vmul.f32 %v1061, %v50
    %1066 = vrot.lane.b32.xlu0 %v1062, 97
    %v1067 = vpop.permute.xlu0 %1066
    %1068 = vrot.lane.b32.xlu0 %v1063, 97
    %v1069 = vpop.permute.xlu0 %1068
    %vm1070 = vcmask 793600
    %v1071 = vsel %vm1070, %v1067, %v1069
    %v1074 = vadd.f32 %v1013, %v1071
    %v1075 = vadd.f32 %v1014, %v1069
    %s1076 = sld [smem:[#allocation2 + $0xa0]]
    %s1077 = sld [smem:[#allocation2 + $0x120]]
    %s1078 = sld [smem:[#allocation2 + $0x1a0]]
    %s1079 = sld [smem:[#allocation2 + $0x220]]
    %v1080 = vstv %s1076
    %v1081 = vmul.f32 %v1080, 0.0
    %v1082 = vmul.f32 %v1080, %v50
    %1085 = vrot.lane.b32.xlu0 %v1081, 126
    %v1086 = vpop.permute.xlu0 %1085
    %1087 = vrot.lane.b32.xlu0 %v1082, 126
    %v1088 = vpop.permute.xlu0 %1087
    %v1089 = vsel %vm93, %v1086, %v1088
    %v1092 = vadd.f32 %v1031, %v1089
    %v1093 = vadd.f32 %v1032, %v1088
    %v1094 = vstv %s1077
    %v1095 = vmul.f32 %v1094, 0.0
    %v1096 = vmul.f32 %v1094, %v50
    %1099 = vrot.lane.b32.xlu0 %v1095, 116
    %v1100 = vpop.permute.xlu0 %1099
    %1101 = vrot.lane.b32.xlu0 %v1096, 116
    %v1102 = vpop.permute.xlu0 %1101
    %v1103 = vsel %vm289, %v1100, %v1102
    %v1106 = vadd.f32 %v1045, %v1103
    %v1107 = vadd.f32 %v1046, %v1102
    %v1108 = vstv %s1078
    %v1109 = vmul.f32 %v1108, 0.0
    %v1110 = vmul.f32 %v1108, %v50
    %1113 = vrot.lane.b32.xlu0 %v1109, 106
    %v1114 = vpop.permute.xlu0 %1113
    %1115 = vrot.lane.b32.xlu0 %v1110, 106
    %v1116 = vpop.permute.xlu0 %1115
    %v1117 = vsel %vm635, %v1114, %v1116
    %v1120 = vadd.f32 %v1059, %v1117
    %v1121 = vadd.f32 %v1060, %v1116
    %v1122 = vstv %s1079
    %v1123 = vmul.f32 %v1122, 0.0
    %v1124 = vmul.f32 %v1122, %v50
    %1127 = vrot.lane.b32.xlu0 %v1123, 96
    %v1128 = vpop.permute.xlu0 %1127
    %1129 = vrot.lane.b32.xlu0 %v1124, 96
    %v1130 = vpop.permute.xlu0 %1129
    %vm1131 = vcmask 785408
    %v1132 = vsel %vm1131, %v1128, %v1130
    %v1135 = vadd.f32 %v1074, %v1132
    %v1136 = vadd.f32 %v1075, %v1130
    %s1137 = sld [smem:[#allocation2 + $0xa1]]
    %s1138 = sld [smem:[#allocation2 + $0x121]]
    %s1139 = sld [smem:[#allocation2 + $0x1a1]]
    %s1140 = sld [smem:[#allocation2 + $0x221]]
    %v1141 = vstv %s1137
    %v1142 = vmul.f32 %v1141, 0.0
    %v1143 = vmul.f32 %v1141, %v50
    %1146 = vrot.lane.b32.xlu0 %v1142, 125
    %v1147 = vpop.permute.xlu0 %1146
    %1148 = vrot.lane.b32.xlu0 %v1143, 125
    %v1149 = vpop.permute.xlu0 %1148
    %v1150 = vsel %vm109, %v1147, %v1149
    %v1153 = vadd.f32 %v1092, %v1150
    %v1154 = vadd.f32 %v1093, %v1149
    %v1155 = vstv %s1138
    %v1156 = vmul.f32 %v1155, 0.0
    %v1157 = vmul.f32 %v1155, %v50
    %1160 = vrot.lane.b32.xlu0 %v1156, 115
    %v1161 = vpop.permute.xlu0 %1160
    %1162 = vrot.lane.b32.xlu0 %v1157, 115
    %v1163 = vpop.permute.xlu0 %1162
    %v1164 = vsel %vm320, %v1161, %v1163
    %v1167 = vadd.f32 %v1106, %v1164
    %v1168 = vadd.f32 %v1107, %v1163
    %v1169 = vstv %s1139
    %v1170 = vmul.f32 %v1169, 0.0
    %v1171 = vmul.f32 %v1169, %v50
    %1174 = vrot.lane.b32.xlu0 %v1170, 105
    %v1175 = vpop.permute.xlu0 %1174
    %1176 = vrot.lane.b32.xlu0 %v1171, 105
    %v1177 = vpop.permute.xlu0 %1176
    %v1178 = vsel %vm681, %v1175, %v1177
    %v1181 = vadd.f32 %v1120, %v1178
    %v1182 = vadd.f32 %v1121, %v1177
    %v1183 = vstv %s1140
    %v1184 = vmul.f32 %v1183, 0.0
    %v1185 = vmul.f32 %v1183, %v50
    %1188 = vrot.lane.b32.xlu0 %v1184, 95
    %v1189 = vpop.permute.xlu0 %1188
    %1190 = vrot.lane.b32.xlu0 %v1185, 95
    %v1191 = vpop.permute.xlu0 %1190
    %vm1192 = vcmask 777216
    %v1193 = vsel %vm1192, %v1189, %v1191
    %v1196 = vadd.f32 %v1135, %v1193
    %v1197 = vadd.f32 %v1136, %v1191
    %s1198 = sld [smem:[#allocation2 + $0xa2]]
    %s1199 = sld [smem:[#allocation2 + $0x122]]
    %s1200 = sld [smem:[#allocation2 + $0x1a2]]
    %s1201 = sld [smem:[#allocation2 + $0x222]]
    %v1202 = vstv %s1198
    %v1203 = vmul.f32 %v1202, 0.0
    %v1204 = vmul.f32 %v1202, %v50
    %1207 = vrot.lane.b32.xlu0 %v1203, 124
    %v1208 = vpop.permute.xlu0 %1207
    %1209 = vrot.lane.b32.xlu0 %v1204, 124
    %v1210 = vpop.permute.xlu0 %1209
    %v1211 = vsel %vm125, %v1208, %v1210
    %v1214 = vadd.f32 %v1153, %v1211
    %v1215 = vadd.f32 %v1154, %v1210
    %v1216 = vstv %s1199
    %v1217 = vmul.f32 %v1216, 0.0
    %v1218 = vmul.f32 %v1216, %v50
    %1221 = vrot.lane.b32.xlu0 %v1217, 114
    %v1222 = vpop.permute.xlu0 %1221
    %1223 = vrot.lane.b32.xlu0 %v1218, 114
    %v1224 = vpop.permute.xlu0 %1223
    %v1225 = vsel %vm351, %v1222, %v1224
    %v1228 = vadd.f32 %v1167, %v1225
    %v1229 = vadd.f32 %v1168, %v1224
    %v1230 = vstv %s1200
    %v1231 = vmul.f32 %v1230, 0.0
    %v1232 = vmul.f32 %v1230, %v50
    %1235 = vrot.lane.b32.xlu0 %v1231, 104
    %v1236 = vpop.permute.xlu0 %1235
    %1237 = vrot.lane.b32.xlu0 %v1232, 104
    %v1238 = vpop.permute.xlu0 %1237
    %v1239 = vsel %vm727, %v1236, %v1238
    %v1242 = vadd.f32 %v1181, %v1239
    %v1243 = vadd.f32 %v1182, %v1238
    %v1244 = vstv %s1201
    %v1245 = vmul.f32 %v1244, 0.0
    %v1246 = vmul.f32 %v1244, %v50
    %1249 = vrot.lane.b32.xlu0 %v1245, 94
    %v1250 = vpop.permute.xlu0 %1249
    %1251 = vrot.lane.b32.xlu0 %v1246, 94
    %v1252 = vpop.permute.xlu0 %1251
    %vm1253 = vcmask 769024
    %v1254 = vsel %vm1253, %v1250, %v1252
    %v1257 = vadd.f32 %v1196, %v1254
    %v1258 = vadd.f32 %v1197, %v1252
    %s1259 = sld [smem:[#allocation2 + $0xa3]]
    %s1260 = sld [smem:[#allocation2 + $0x123]]
    %s1261 = sld [smem:[#allocation2 + $0x1a3]]
    %s1262 = sld [smem:[#allocation2 + $0x223]]
    %v1263 = vstv %s1259
    %v1264 = vmul.f32 %v1263, 0.0
    %v1265 = vmul.f32 %v1263, %v50
    %1268 = vrot.lane.b32.xlu0 %v1264, 123
    %v1269 = vpop.permute.xlu0 %1268
    %1270 = vrot.lane.b32.xlu0 %v1265, 123
    %v1271 = vpop.permute.xlu0 %1270
    %v1272 = vsel %vm141, %v1269, %v1271
    %v1275 = vadd.f32 %v1214, %v1272
    %v1276 = vadd.f32 %v1215, %v1271
    %v1277 = vstv %s1260
    %v1278 = vmul.f32 %v1277, 0.0
    %v1279 = vmul.f32 %v1277, %v50
    %1282 = vrot.lane.b32.xlu0 %v1278, 113
    %v1283 = vpop.permute.xlu0 %1282
    %1284 = vrot.lane.b32.xlu0 %v1279, 113
    %v1285 = vpop.permute.xlu0 %1284
    %v1286 = vsel %vm382, %v1283, %v1285
    %v1289 = vadd.f32 %v1228, %v1286
    %v1290 = vadd.f32 %v1229, %v1285
    %v1291 = vstv %s1261
    %v1292 = vmul.f32 %v1291, 0.0
    %v1293 = vmul.f32 %v1291, %v50
    %1296 = vrot.lane.b32.xlu0 %v1292, 103
    %v1297 = vpop.permute.xlu0 %1296
    %1298 = vrot.lane.b32.xlu0 %v1293, 103
    %v1299 = vpop.permute.xlu0 %1298
    %v1300 = vsel %vm773, %v1297, %v1299
    %v1303 = vadd.f32 %v1242, %v1300
    %v1304 = vadd.f32 %v1243, %v1299
    %v1305 = vstv %s1262
    %v1306 = vmul.f32 %v1305, 0.0
    %v1307 = vmul.f32 %v1305, %v50
    %1310 = vrot.lane.b32.xlu0 %v1306, 93
    %v1311 = vpop.permute.xlu0 %1310
    %1312 = vrot.lane.b32.xlu0 %v1307, 93
    %v1313 = vpop.permute.xlu0 %1312
    %vm1314 = vcmask 760832
    %v1315 = vsel %vm1314, %v1311, %v1313
    %v1318 = vadd.f32 %v1257, %v1315
    %v1319 = vadd.f32 %v1258, %v1313
    %s1320 = sld [smem:[#allocation2 + $0xa4]]
    %s1321 = sld [smem:[#allocation2 + $0x124]]
    %s1322 = sld [smem:[#allocation2 + $0x1a4]]
    %s1323 = sld [smem:[#allocation2 + $0x224]]
    %v1324 = vstv %s1320
    %v1325 = vmul.f32 %v1324, 0.0
    %v1326 = vmul.f32 %v1324, %v50
    %1329 = vrot.lane.b32.xlu0 %v1325, 122
    %v1330 = vpop.permute.xlu0 %1329
    %1331 = vrot.lane.b32.xlu0 %v1326, 122
    %v1332 = vpop.permute.xlu0 %1331
    %v1333 = vsel %vm157, %v1330, %v1332
    %v1336 = vadd.f32 %v1275, %v1333
    %v1337 = vadd.f32 %v1276, %v1332
    %v1338 = vstv %s1321
    %v1339 = vmul.f32 %v1338, 0.0
    %v1340 = vmul.f32 %v1338, %v50
    %1343 = vrot.lane.b32.xlu0 %v1339, 112
    %v1344 = vpop.permute.xlu0 %1343
    %1345 = vrot.lane.b32.xlu0 %v1340, 112
    %v1346 = vpop.permute.xlu0 %1345
    %v1347 = vsel %vm413, %v1344, %v1346
    %v1350 = vadd.f32 %v1289, %v1347
    %v1351 = vadd.f32 %v1290, %v1346
    %v1352 = vstv %s1322
    %v1353 = vmul.f32 %v1352, 0.0
    %v1354 = vmul.f32 %v1352, %v50
    %1357 = vrot.lane.b32.xlu0 %v1353, 102
    %v1358 = vpop.permute.xlu0 %1357
    %1359 = vrot.lane.b32.xlu0 %v1354, 102
    %v1360 = vpop.permute.xlu0 %1359
    %v1361 = vsel %vm819, %v1358, %v1360
    %v1364 = vadd.f32 %v1303, %v1361
    %v1365 = vadd.f32 %v1304, %v1360
    %v1366 = vstv %s1323
    %v1367 = vmul.f32 %v1366, 0.0
    %v1368 = vmul.f32 %v1366, %v50
    %1371 = vrot.lane.b32.xlu0 %v1367, 92
    %v1372 = vpop.permute.xlu0 %1371
    %1373 = vrot.lane.b32.xlu0 %v1368, 92
    %v1374 = vpop.permute.xlu0 %1373
    %vm1375 = vcmask 752640
    %v1376 = vsel %vm1375, %v1372, %v1374
    %v1379 = vadd.f32 %v1318, %v1376
    %v1380 = vadd.f32 %v1319, %v1374
    %s1381 = sld [smem:[#allocation2 + $0xa5]]
    %s1382 = sld [smem:[#allocation2 + $0x125]]
    %s1383 = sld [smem:[#allocation2 + $0x1a5]]
    %s1384 = sld [smem:[#allocation2 + $0x225]]
    %v1385 = vstv %s1381
    %v1386 = vmul.f32 %v1385, 0.0
    %v1387 = vmul.f32 %v1385, %v50
    %1390 = vrot.lane.b32.xlu0 %v1386, 121
    %v1391 = vpop.permute.xlu0 %1390
    %1392 = vrot.lane.b32.xlu0 %v1387, 121
    %v1393 = vpop.permute.xlu0 %1392
    %v1394 = vsel %vm173, %v1391, %v1393
    %v1397 = vadd.f32 %v1336, %v1394
    %v1398 = vadd.f32 %v1337, %v1393
    %v1399 = vstv %s1382
    %v1400 = vmul.f32 %v1399, 0.0
    %v1401 = vmul.f32 %v1399, %v50
    %1404 = vrot.lane.b32.xlu0 %v1400, 111
    %v1405 = vpop.permute.xlu0 %1404
    %1406 = vrot.lane.b32.xlu0 %v1401, 111
    %v1407 = vpop.permute.xlu0 %1406
    %v1408 = vsel %vm444, %v1405, %v1407
    %v1411 = vadd.f32 %v1350, %v1408
    %v1412 = vadd.f32 %v1351, %v1407
    %v1413 = vstv %s1383
    %v1414 = vmul.f32 %v1413, 0.0
    %v1415 = vmul.f32 %v1413, %v50
    %1418 = vrot.lane.b32.xlu0 %v1414, 101
    %v1419 = vpop.permute.xlu0 %1418
    %1420 = vrot.lane.b32.xlu0 %v1415, 101
    %v1421 = vpop.permute.xlu0 %1420
    %v1422 = vsel %vm865, %v1419, %v1421
    %v1425 = vadd.f32 %v1364, %v1422
    %v1426 = vadd.f32 %v1365, %v1421
    %v1427 = vstv %s1384
    %v1428 = vmul.f32 %v1427, 0.0
    %v1429 = vmul.f32 %v1427, %v50
    %1432 = vrot.lane.b32.xlu0 %v1428, 91
    %v1433 = vpop.permute.xlu0 %1432
    %1434 = vrot.lane.b32.xlu0 %v1429, 91
    %v1435 = vpop.permute.xlu0 %1434
    %vm1436 = vcmask 744448
    %v1437 = vsel %vm1436, %v1433, %v1435
    %v1440 = vadd.f32 %v1379, %v1437
    %v1441 = vadd.f32 %v1380, %v1435
    %s1442 = sld [smem:[#allocation2 + $0x26]]
    %s1443 = sld [smem:[#allocation2 + $0xa6]]
    %s1444 = sld [smem:[#allocation2 + $0x126]]
    %s1445 = sld [smem:[#allocation2 + $0x1a6]]
    %s1446 = sld [smem:[#allocation2 + $0x226]]
    %v1447 = vstv %s1442
    %v1448 = vmul.f32 %v1447, 0.0
    %v1449 = vmul.f32 %v1447, %v50
    %v1450 = vadd.f32 %v52, %v1448
    %v1451 = vadd.f32 %v52, %v1449
    %v1452 = vstv %s1443
    %v1453 = vmul.f32 %v1452, 0.0
    %v1454 = vmul.f32 %v1452, %v50
    %1457 = vrot.lane.b32.xlu0 %v1453, 120
    %v1458 = vpop.permute.xlu0 %1457
    %1459 = vrot.lane.b32.xlu0 %v1454, 120
    %v1460 = vpop.permute.xlu0 %1459
    %v1461 = vsel %vm189, %v1458, %v1460
    %v1464 = vadd.f32 %v1397, %v1461
    %v1465 = vadd.f32 %v1398, %v1460
    %v1466 = vstv %s1444
    %v1467 = vmul.f32 %v1466, 0.0
    %v1468 = vmul.f32 %v1466, %v50
    %1471 = vrot.lane.b32.xlu0 %v1467, 110
    %v1472 = vpop.permute.xlu0 %1471
    %1473 = vrot.lane.b32.xlu0 %v1468, 110
    %v1474 = vpop.permute.xlu0 %1473
    %v1475 = vsel %vm475, %v1472, %v1474
    %v1478 = vadd.f32 %v1411, %v1475
    %v1479 = vadd.f32 %v1412, %v1474
    %v1480 = vstv %s1445
    %v1481 = vmul.f32 %v1480, 0.0
    %v1482 = vmul.f32 %v1480, %v50
    %1485 = vrot.lane.b32.xlu0 %v1481, 100
    %v1486 = vpop.permute.xlu0 %1485
    %1487 = vrot.lane.b32.xlu0 %v1482, 100
    %v1488 = vpop.permute.xlu0 %1487
    %v1489 = vsel %vm911, %v1486, %v1488
    %v1492 = vadd.f32 %v1425, %v1489
    %v1493 = vadd.f32 %v1426, %v1488
    %v1494 = vstv %s1446
    %v1495 = vmul.f32 %v1494, 0.0
    %v1496 = vmul.f32 %v1494, %v50
    %1499 = vrot.lane.b32.xlu0 %v1495, 90
    %v1500 = vpop.permute.xlu0 %1499
    %1501 = vrot.lane.b32.xlu0 %v1496, 90
    %v1502 = vpop.permute.xlu0 %1501
    %vm1503 = vcmask 736256
    %v1504 = vsel %vm1503, %v1500, %v1502
    %v1507 = vadd.f32 %v1440, %v1504
    %v1508 = vadd.f32 %v1441, %v1502
    %s1509 = sld [smem:[#allocation2 + $0x27]]
    %s1510 = sld [smem:[#allocation2 + $0xa7]]
    %s1511 = sld [smem:[#allocation2 + $0x127]]
    %s1512 = sld [smem:[#allocation2 + $0x1a7]]
    %s1513 = sld [smem:[#allocation2 + $0x227]]
    %v1514 = vstv %s1509
    %v1515 = vmul.f32 %v1514, 0.0
    %v1516 = vmul.f32 %v1514, %v50
    %1519 = vrot.lane.b32.xlu0 %v1515, 127
    %v1520 = vpop.permute.xlu0 %1519
    %1521 = vrot.lane.b32.xlu0 %v1516, 127
    %v1522 = vpop.permute.xlu0 %1521
    %v1523 = vsel %vm77, %v1520, %v1522
    %v1526 = vadd.f32 %v1450, %v1523
    %v1527 = vadd.f32 %v1451, %v1522
    %v1528 = vstv %s1510
    %v1529 = vmul.f32 %v1528, 0.0
    %v1530 = vmul.f32 %v1528, %v50
    %1533 = vrot.lane.b32.xlu0 %v1529, 119
    %v1534 = vpop.permute.xlu0 %1533
    %1535 = vrot.lane.b32.xlu0 %v1530, 119
    %v1536 = vpop.permute.xlu0 %1535
    %v1537 = vsel %vm205, %v1534, %v1536
    %v1540 = vadd.f32 %v1464, %v1537
    %v1541 = vadd.f32 %v1465, %v1536
    %v1542 = vstv %s1511
    %v1543 = vmul.f32 %v1542, 0.0
    %v1544 = vmul.f32 %v1542, %v50
    %1547 = vrot.lane.b32.xlu0 %v1543, 109
    %v1548 = vpop.permute.xlu0 %1547
    %1549 = vrot.lane.b32.xlu0 %v1544, 109
    %v1550 = vpop.permute.xlu0 %1549
    %v1551 = vsel %vm506, %v1548, %v1550
    %v1554 = vadd.f32 %v1478, %v1551
    %v1555 = vadd.f32 %v1479, %v1550
    %v1556 = vstv %s1512
    %v1557 = vmul.f32 %v1556, 0.0
    %v1558 = vmul.f32 %v1556, %v50
    %1561 = vrot.lane.b32.xlu0 %v1557, 99
    %v1562 = vpop.permute.xlu0 %1561
    %1563 = vrot.lane.b32.xlu0 %v1558, 99
    %v1564 = vpop.permute.xlu0 %1563
    %v1565 = vsel %vm957, %v1562, %v1564
    %v1568 = vadd.f32 %v1492, %v1565
    %v1569 = vadd.f32 %v1493, %v1564
    %v1570 = vstv %s1513
    %v1571 = vmul.f32 %v1570, 0.0
    %v1572 = vmul.f32 %v1570, %v50
    %1575 = vrot.lane.b32.xlu0 %v1571, 89
    %v1576 = vpop.permute.xlu0 %1575
    %1577 = vrot.lane.b32.xlu0 %v1572, 89
    %v1578 = vpop.permute.xlu0 %1577
    %vm1579 = vcmask 728064
    %v1580 = vsel %vm1579, %v1576, %v1578
    %v1583 = vadd.f32 %v1507, %v1580
    %v1584 = vadd.f32 %v1508, %v1578
    %s1585 = sld [smem:[#allocation2 + $0x28]]
    %s1586 = sld [smem:[#allocation2 + $0xa8]]
    %s1587 = sld [smem:[#allocation2 + $0x128]]
    %s1588 = sld [smem:[#allocation2 + $0x1a8]]
    %s1589 = sld [smem:[#allocation2 + $0x228]]
    %v1590 = vstv %s1585
    %v1591 = vmul.f32 %v1590, %v50
    %1593 = vrot.lane.b32.xlu0 %v1591, 126
    %v1594 = vpop.permute.xlu0 %1593
    %v1596 = vadd.f32 %v1526, %v1594
    %v1597 = vadd.f32 %v1527, %v1594
    %v1598 = vstv %s1586
    %v1599 = vmul.f32 %v1598, %v50
    %1601 = vrot.lane.b32.xlu0 %v1599, 118
    %v1602 = vpop.permute.xlu0 %1601
    %v1604 = vadd.f32 %v1540, %v1602
    %v1605 = vadd.f32 %v1541, %v1602
    %v1606 = vstv %s1587
    %v1607 = vmul.f32 %v1606, %v50
    %1609 = vrot.lane.b32.xlu0 %v1607, 108
    %v1610 = vpop.permute.xlu0 %1609
    %v1612 = vadd.f32 %v1554, %v1610
    %v1613 = vadd.f32 %v1555, %v1610
    %v1614 = vstv %s1588
    %v1615 = vmul.f32 %v1614, %v50
    %1617 = vrot.lane.b32.xlu0 %v1615, 98
    %v1618 = vpop.permute.xlu0 %1617
    %v1620 = vadd.f32 %v1568, %v1618
    %v1621 = vadd.f32 %v1569, %v1618
    %v1622 = vstv %s1589
    %v1623 = vmul.f32 %v1622, %v50
    %1625 = vrot.lane.b32.xlu0 %v1623, 88
    %v1626 = vpop.permute.xlu0 %1625
    %v1628 = vadd.f32 %v1583, %v1626
    %v1629 = vadd.f32 %v1584, %v1626
    %s1630 = sld [smem:[#allocation2 + $0x29]]
    %s1631 = sld [smem:[#allocation2 + $0xa9]]
    %s1632 = sld [smem:[#allocation2 + $0x129]]
    %s1633 = sld [smem:[#allocation2 + $0x1a9]]
    %s1634 = sld [smem:[#allocation2 + $0x229]]
    %v1635 = vstv %s1630
    %v1636 = vmul.f32 %v1635, %v50
    %v1637 = vmul.f32 %v1635, 0.0
    %1640 = vrot.lane.b32.xlu0 %v1636, 125
    %v1641 = vpop.permute.xlu0 %1640
    %1642 = vrot.lane.b32.xlu0 %v1637, 125
    %v1643 = vpop.permute.xlu0 %1642
    %v1644 = vsel %vm109, %v1641, %v1643
    %v1647 = vadd.f32 %v1596, %v1641
    %v1648 = vadd.f32 %v1597, %v1644
    %v1649 = vstv %s1631
    %v1650 = vmul.f32 %v1649, %v50
    %v1651 = vmul.f32 %v1649, 0.0
    %1654 = vrot.lane.b32.xlu0 %v1650, 117
    %v1655 = vpop.permute.xlu0 %1654
    %1656 = vrot.lane.b32.xlu0 %v1651, 117
    %v1657 = vpop.permute.xlu0 %1656
    %v1658 = vsel %vm258, %v1655, %v1657
    %v1661 = vadd.f32 %v1604, %v1655
    %v1662 = vadd.f32 %v1605, %v1658
    %v1663 = vstv %s1632
    %v1664 = vmul.f32 %v1663, %v50
    %v1665 = vmul.f32 %v1663, 0.0
    %1668 = vrot.lane.b32.xlu0 %v1664, 107
    %v1669 = vpop.permute.xlu0 %1668
    %1670 = vrot.lane.b32.xlu0 %v1665, 107
    %v1671 = vpop.permute.xlu0 %1670
    %v1672 = vsel %vm589, %v1669, %v1671
    %v1675 = vadd.f32 %v1612, %v1669
    %v1676 = vadd.f32 %v1613, %v1672
    %v1677 = vstv %s1633
    %v1678 = vmul.f32 %v1677, %v50
    %v1679 = vmul.f32 %v1677, 0.0
    %1682 = vrot.lane.b32.xlu0 %v1678, 97
    %v1683 = vpop.permute.xlu0 %1682
    %1684 = vrot.lane.b32.xlu0 %v1679, 97
    %v1685 = vpop.permute.xlu0 %1684
    %v1686 = vsel %vm1070, %v1683, %v1685
    %v1689 = vadd.f32 %v1620, %v1683
    %v1690 = vadd.f32 %v1621, %v1686
    %v1691 = vstv %s1634
    %v1692 = vmul.f32 %v1691, %v50
    %v1693 = vmul.f32 %v1691, 0.0
    %1696 = vrot.lane.b32.xlu0 %v1692, 87
    %v1697 = vpop.permute.xlu0 %1696
    %1698 = vrot.lane.b32.xlu0 %v1693, 87
    %v1699 = vpop.permute.xlu0 %1698
    %vm1700 = vcmask 711680
    %v1701 = vsel %vm1700, %v1697, %v1699
    %v1704 = vadd.f32 %v1628, %v1697
    %v1705 = vadd.f32 %v1629, %v1701
    %s1706 = sld [smem:[#allocation2 + $0x2a]]
    %s1707 = sld [smem:[#allocation2 + $0xaa]]
    %s1708 = sld [smem:[#allocation2 + $0x12a]]
    %s1709 = sld [smem:[#allocation2 + $0x1aa]]
    %s1710 = sld [smem:[#allocation2 + $0x22a]]
    %v1711 = vstv %s1706
    %v1712 = vmul.f32 %v1711, %v50
    %v1713 = vmul.f32 %v1711, 0.0
    %1716 = vrot.lane.b32.xlu0 %v1712, 124
    %v1717 = vpop.permute.xlu0 %1716
    %1718 = vrot.lane.b32.xlu0 %v1713, 124
    %v1719 = vpop.permute.xlu0 %1718
    %v1720 = vsel %vm125, %v1717, %v1719
    %v1723 = vadd.f32 %v1647, %v1717
    %v1724 = vadd.f32 %v1648, %v1720
    %v1725 = vstv %s1707
    %v1726 = vmul.f32 %v1725, %v50
    %v1727 = vmul.f32 %v1725, 0.0
    %1730 = vrot.lane.b32.xlu0 %v1726, 116
    %v1731 = vpop.permute.xlu0 %1730
    %1732 = vrot.lane.b32.xlu0 %v1727, 116
    %v1733 = vpop.permute.xlu0 %1732
    %v1734 = vsel %vm289, %v1731, %v1733
    %v1737 = vadd.f32 %v1661, %v1731
    %v1738 = vadd.f32 %v1662, %v1734
    %v1739 = vstv %s1708
    %v1740 = vmul.f32 %v1739, %v50
    %v1741 = vmul.f32 %v1739, 0.0
    %1744 = vrot.lane.b32.xlu0 %v1740, 106
    %v1745 = vpop.permute.xlu0 %1744
    %1746 = vrot.lane.b32.xlu0 %v1741, 106
    %v1747 = vpop.permute.xlu0 %1746
    %v1748 = vsel %vm635, %v1745, %v1747
    %v1751 = vadd.f32 %v1675, %v1745
    %v1752 = vadd.f32 %v1676, %v1748
    %v1753 = vstv %s1709
    %v1754 = vmul.f32 %v1753, %v50
    %v1755 = vmul.f32 %v1753, 0.0
    %1758 = vrot.lane.b32.xlu0 %v1754, 96
    %v1759 = vpop.permute.xlu0 %1758
    %1760 = vrot.lane.b32.xlu0 %v1755, 96
    %v1761 = vpop.permute.xlu0 %1760
    %v1762 = vsel %vm1131, %v1759, %v1761
    %v1765 = vadd.f32 %v1689, %v1759
    %v1766 = vadd.f32 %v1690, %v1762
    %v1767 = vstv %s1710
    %v1768 = vmul.f32 %v1767, %v50
    %v1769 = vmul.f32 %v1767, 0.0
    %1772 = vrot.lane.b32.xlu0 %v1768, 86
    %v1773 = vpop.permute.xlu0 %1772
    %1774 = vrot.lane.b32.xlu0 %v1769, 86
    %v1775 = vpop.permute.xlu0 %1774
    %vm1776 = vcmask 703488
    %v1777 = vsel %vm1776, %v1773, %v1775
    %v1780 = vadd.f32 %v1704, %v1773
    %v1781 = vadd.f32 %v1705, %v1777
    %s1782 = sld [smem:[#allocation2 + $0xab]]
    %s1783 = sld [smem:[#allocation2 + $0x12b]]
    %s1784 = sld [smem:[#allocation2 + $0x1ab]]
    %s1785 = sld [smem:[#allocation2 + $0x22b]]
    %v1786 = vstv %s1782
    %v1787 = vmul.f32 %v1786, %v50
    %v1788 = vmul.f32 %v1786, 0.0
    %1791 = vrot.lane.b32.xlu0 %v1787, 115
    %v1792 = vpop.permute.xlu0 %1791
    %1793 = vrot.lane.b32.xlu0 %v1788, 115
    %v1794 = vpop.permute.xlu0 %1793
    %v1795 = vsel %vm320, %v1792, %v1794
    %v1798 = vadd.f32 %v1737, %v1792
    %v1799 = vadd.f32 %v1738, %v1795
    %v1800 = vstv %s1783
    %v1801 = vmul.f32 %v1800, %v50
    %v1802 = vmul.f32 %v1800, 0.0
    %1805 = vrot.lane.b32.xlu0 %v1801, 105
    %v1806 = vpop.permute.xlu0 %1805
    %1807 = vrot.lane.b32.xlu0 %v1802, 105
    %v1808 = vpop.permute.xlu0 %1807
    %v1809 = vsel %vm681, %v1806, %v1808
    %v1812 = vadd.f32 %v1751, %v1806
    %v1813 = vadd.f32 %v1752, %v1809
    %v1814 = vstv %s1784
    %v1815 = vmul.f32 %v1814, %v50
    %v1816 = vmul.f32 %v1814, 0.0
    %1819 = vrot.lane.b32.xlu0 %v1815, 95
    %v1820 = vpop.permute.xlu0 %1819
    %1821 = vrot.lane.b32.xlu0 %v1816, 95
    %v1822 = vpop.permute.xlu0 %1821
    %v1823 = vsel %vm1192, %v1820, %v1822
    %v1826 = vadd.f32 %v1765, %v1820
    %v1827 = vadd.f32 %v1766, %v1823
    %v1828 = vstv %s1785
    %v1829 = vmul.f32 %v1828, %v50
    %v1830 = vmul.f32 %v1828, 0.0
    %1833 = vrot.lane.b32.xlu0 %v1829, 85
    %v1834 = vpop.permute.xlu0 %1833
    %1835 = vrot.lane.b32.xlu0 %v1830, 85
    %v1836 = vpop.permute.xlu0 %1835
    %vm1837 = vcmask 695296
    %v1838 = vsel %vm1837, %v1834, %v1836
    %v1841 = vadd.f32 %v1780, %v1834
    %v1842 = vadd.f32 %v1781, %v1838
    %s1843 = sld [smem:[#allocation2 + $0xac]]
    %s1844 = sld [smem:[#allocation2 + $0x12c]]
    %s1845 = sld [smem:[#allocation2 + $0x1ac]]
    %s1846 = sld [smem:[#allocation2 + $0x22c]]
    %v1847 = vstv %s1843
    %v1848 = vmul.f32 %v1847, %v50
    %v1849 = vmul.f32 %v1847, 0.0
    %1852 = vrot.lane.b32.xlu0 %v1848, 114
    %v1853 = vpop.permute.xlu0 %1852
    %1854 = vrot.lane.b32.xlu0 %v1849, 114
    %v1855 = vpop.permute.xlu0 %1854
    %v1856 = vsel %vm351, %v1853, %v1855
    %v1859 = vadd.f32 %v1798, %v1853
    %v1860 = vadd.f32 %v1799, %v1856
    %v1861 = vstv %s1844
    %v1862 = vmul.f32 %v1861, %v50
    %v1863 = vmul.f32 %v1861, 0.0
    %1866 = vrot.lane.b32.xlu0 %v1862, 104
    %v1867 = vpop.permute.xlu0 %1866
    %1868 = vrot.lane.b32.xlu0 %v1863, 104
    %v1869 = vpop.permute.xlu0 %1868
    %v1870 = vsel %vm727, %v1867, %v1869
    %v1873 = vadd.f32 %v1812, %v1867
    %v1874 = vadd.f32 %v1813, %v1870
    %v1875 = vstv %s1845
    %v1876 = vmul.f32 %v1875, %v50
    %v1877 = vmul.f32 %v1875, 0.0
    %1880 = vrot.lane.b32.xlu0 %v1876, 94
    %v1881 = vpop.permute.xlu0 %1880
    %1882 = vrot.lane.b32.xlu0 %v1877, 94
    %v1883 = vpop.permute.xlu0 %1882
    %v1884 = vsel %vm1253, %v1881, %v1883
    %v1887 = vadd.f32 %v1826, %v1881
    %v1888 = vadd.f32 %v1827, %v1884
    %v1889 = vstv %s1846
    %v1890 = vmul.f32 %v1889, %v50
    %v1891 = vmul.f32 %v1889, 0.0
    %1894 = vrot.lane.b32.xlu0 %v1890, 84
    %v1895 = vpop.permute.xlu0 %1894
    %1896 = vrot.lane.b32.xlu0 %v1891, 84
    %v1897 = vpop.permute.xlu0 %1896
    %vm1898 = vcmask 687104
    %v1899 = vsel %vm1898, %v1895, %v1897
    %v1902 = vadd.f32 %v1841, %v1895
    %v1903 = vadd.f32 %v1842, %v1899
    %s1904 = sld [smem:[#allocation2 + $0xad]]
    %s1905 = sld [smem:[#allocation2 + $0x12d]]
    %s1906 = sld [smem:[#allocation2 + $0x1ad]]
    %s1907 = sld [smem:[#allocation2 + $0x22d]]
    %v1908 = vstv %s1904
    %v1909 = vmul.f32 %v1908, %v50
    %v1910 = vmul.f32 %v1908, 0.0
    %1913 = vrot.lane.b32.xlu0 %v1909, 113
    %v1914 = vpop.permute.xlu0 %1913
    %1915 = vrot.lane.b32.xlu0 %v1910, 113
    %v1916 = vpop.permute.xlu0 %1915
    %v1917 = vsel %vm382, %v1914, %v1916
    %v1920 = vadd.f32 %v1859, %v1914
    %v1921 = vadd.f32 %v1860, %v1917
    %v1922 = vstv %s1905
    %v1923 = vmul.f32 %v1922, %v50
    %v1924 = vmul.f32 %v1922, 0.0
    %1927 = vrot.lane.b32.xlu0 %v1923, 103
    %v1928 = vpop.permute.xlu0 %1927
    %1929 = vrot.lane.b32.xlu0 %v1924, 103
    %v1930 = vpop.permute.xlu0 %1929
    %v1931 = vsel %vm773, %v1928, %v1930
    %v1934 = vadd.f32 %v1873, %v1928
    %v1935 = vadd.f32 %v1874, %v1931
    %v1936 = vstv %s1906
    %v1937 = vmul.f32 %v1936, %v50
    %v1938 = vmul.f32 %v1936, 0.0
    %1941 = vrot.lane.b32.xlu0 %v1937, 93
    %v1942 = vpop.permute.xlu0 %1941
    %1943 = vrot.lane.b32.xlu0 %v1938, 93
    %v1944 = vpop.permute.xlu0 %1943
    %v1945 = vsel %vm1314, %v1942, %v1944
    %v1948 = vadd.f32 %v1887, %v1942
    %v1949 = vadd.f32 %v1888, %v1945
    %v1950 = vstv %s1907
    %v1951 = vmul.f32 %v1950, %v50
    %v1952 = vmul.f32 %v1950, 0.0
    %1955 = vrot.lane.b32.xlu0 %v1951, 83
    %v1956 = vpop.permute.xlu0 %1955
    %1957 = vrot.lane.b32.xlu0 %v1952, 83
    %v1958 = vpop.permute.xlu0 %1957
    %vm1959 = vcmask 678912
    %v1960 = vsel %vm1959, %v1956, %v1958
    %v1963 = vadd.f32 %v1902, %v1956
    %v1964 = vadd.f32 %v1903, %v1960
    %s1965 = sld [smem:[#allocation2 + $0xae]]
    %s1966 = sld [smem:[#allocation2 + $0x12e]]
    %s1967 = sld [smem:[#allocation2 + $0x1ae]]
    %s1968 = sld [smem:[#allocation2 + $0x22e]]
    %v1969 = vstv %s1965
    %v1970 = vmul.f32 %v1969, %v50
    %v1971 = vmul.f32 %v1969, 0.0
    %1974 = vrot.lane.b32.xlu0 %v1970, 112
    %v1975 = vpop.permute.xlu0 %1974
    %1976 = vrot.lane.b32.xlu0 %v1971, 112
    %v1977 = vpop.permute.xlu0 %1976
    %v1978 = vsel %vm413, %v1975, %v1977
    %v1981 = vadd.f32 %v1920, %v1975
    %v1982 = vadd.f32 %v1921, %v1978
    %v1983 = vstv %s1966
    %v1984 = vmul.f32 %v1983, %v50
    %v1985 = vmul.f32 %v1983, 0.0
    %1988 = vrot.lane.b32.xlu0 %v1984, 102
    %v1989 = vpop.permute.xlu0 %1988
    %1990 = vrot.lane.b32.xlu0 %v1985, 102
    %v1991 = vpop.permute.xlu0 %1990
    %v1992 = vsel %vm819, %v1989, %v1991
    %v1995 = vadd.f32 %v1934, %v1989
    %v1996 = vadd.f32 %v1935, %v1992
    %v1997 = vstv %s1967
    %v1998 = vmul.f32 %v1997, %v50
    %v1999 = vmul.f32 %v1997, 0.0
    %2002 = vrot.lane.b32.xlu0 %v1998, 92
    %v2003 = vpop.permute.xlu0 %2002
    %2004 = vrot.lane.b32.xlu0 %v1999, 92
    %v2005 = vpop.permute.xlu0 %2004
    %v2006 = vsel %vm1375, %v2003, %v2005
    %v2009 = vadd.f32 %v1948, %v2003
    %v2010 = vadd.f32 %v1949, %v2006
    %v2011 = vstv %s1968
    %v2012 = vmul.f32 %v2011, %v50
    %v2013 = vmul.f32 %v2011, 0.0
    %2016 = vrot.lane.b32.xlu0 %v2012, 82
    %v2017 = vpop.permute.xlu0 %2016
    %2018 = vrot.lane.b32.xlu0 %v2013, 82
    %v2019 = vpop.permute.xlu0 %2018
    %vm2020 = vcmask 670720
    %v2021 = vsel %vm2020, %v2017, %v2019
    %v2024 = vadd.f32 %v1963, %v2017
    %v2025 = vadd.f32 %v1964, %v2021
    %s2026 = sld [smem:[#allocation2 + $0xaf]]
    %s2027 = sld [smem:[#allocation2 + $0x12f]]
    %s2028 = sld [smem:[#allocation2 + $0x1af]]
    %s2029 = sld [smem:[#allocation2 + $0x22f]]
    %v2030 = vstv %s2026
    %v2031 = vmul.f32 %v2030, %v50
    %v2032 = vmul.f32 %v2030, 0.0
    %2035 = vrot.lane.b32.xlu0 %v2031, 111
    %v2036 = vpop.permute.xlu0 %2035
    %2037 = vrot.lane.b32.xlu0 %v2032, 111
    %v2038 = vpop.permute.xlu0 %2037
    %v2039 = vsel %vm444, %v2036, %v2038
    %v2042 = vadd.f32 %v1981, %v2036
    %v2043 = vadd.f32 %v1982, %v2039
    %v2044 = vstv %s2027
    %v2045 = vmul.f32 %v2044, %v50
    %v2046 = vmul.f32 %v2044, 0.0
    %2049 = vrot.lane.b32.xlu0 %v2045, 101
    %v2050 = vpop.permute.xlu0 %2049
    %2051 = vrot.lane.b32.xlu0 %v2046, 101
    %v2052 = vpop.permute.xlu0 %2051
    %v2053 = vsel %vm865, %v2050, %v2052
    %v2056 = vadd.f32 %v1995, %v2050
    %v2057 = vadd.f32 %v1996, %v2053
    %v2058 = vstv %s2028
    %v2059 = vmul.f32 %v2058, %v50
    %v2060 = vmul.f32 %v2058, 0.0
    %2063 = vrot.lane.b32.xlu0 %v2059, 91
    %v2064 = vpop.permute.xlu0 %2063
    %2065 = vrot.lane.b32.xlu0 %v2060, 91
    %v2066 = vpop.permute.xlu0 %2065
    %v2067 = vsel %vm1436, %v2064, %v2066
    %v2070 = vadd.f32 %v2009, %v2064
    %v2071 = vadd.f32 %v2010, %v2067
    %v2072 = vstv %s2029
    %v2073 = vmul.f32 %v2072, %v50
    %v2074 = vmul.f32 %v2072, 0.0
    %2077 = vrot.lane.b32.xlu0 %v2073, 81
    %v2078 = vpop.permute.xlu0 %2077
    %2079 = vrot.lane.b32.xlu0 %v2074, 81
    %v2080 = vpop.permute.xlu0 %2079
    %vm2081 = vcmask 662528
    %v2082 = vsel %vm2081, %v2078, %v2080
    %v2085 = vadd.f32 %v2024, %v2078
    %v2086 = vadd.f32 %v2025, %v2082
    %s2087 = sld [smem:[#allocation2 + $0xb0]]
    %s2088 = sld [smem:[#allocation2 + $0x130]]
    %s2089 = sld [smem:[#allocation2 + $0x1b0]]
    %s2090 = sld [smem:[#allocation2 + $0x230]]
    %v2091 = vstv %s2087
    %v2092 = vmul.f32 %v2091, %v50
    %v2093 = vmul.f32 %v2091, 0.0
    %2096 = vrot.lane.b32.xlu0 %v2092, 110
    %v2097 = vpop.permute.xlu0 %2096
    %2098 = vrot.lane.b32.xlu0 %v2093, 110
    %v2099 = vpop.permute.xlu0 %2098
    %v2100 = vsel %vm475, %v2097, %v2099
    %v2103 = vadd.f32 %v2042, %v2097
    %v2104 = vadd.f32 %v2043, %v2100
    %v2105 = vstv %s2088
    %v2106 = vmul.f32 %v2105, %v50
    %v2107 = vmul.f32 %v2105, 0.0
    %2110 = vrot.lane.b32.xlu0 %v2106, 100
    %v2111 = vpop.permute.xlu0 %2110
    %2112 = vrot.lane.b32.xlu0 %v2107, 100
    %v2113 = vpop.permute.xlu0 %2112
    %v2114 = vsel %vm911, %v2111, %v2113
    %v2117 = vadd.f32 %v2056, %v2111
    %v2118 = vadd.f32 %v2057, %v2114
    %v2119 = vstv %s2089
    %v2120 = vmul.f32 %v2119, %v50
    %v2121 = vmul.f32 %v2119, 0.0
    %2124 = vrot.lane.b32.xlu0 %v2120, 90
    %v2125 = vpop.permute.xlu0 %2124
    %2126 = vrot.lane.b32.xlu0 %v2121, 90
    %v2127 = vpop.permute.xlu0 %2126
    %v2128 = vsel %vm1503, %v2125, %v2127
    %v2131 = vadd.f32 %v2070, %v2125
    %v2132 = vadd.f32 %v2071, %v2128
    %v2133 = vstv %s2090
    %v2134 = vmul.f32 %v2133, %v50
    %v2135 = vmul.f32 %v2133, 0.0
    %2138 = vrot.lane.b32.xlu0 %v2134, 80
    %v2139 = vpop.permute.xlu0 %2138
    %2140 = vrot.lane.b32.xlu0 %v2135, 80
    %v2141 = vpop.permute.xlu0 %2140
    %vm2142 = vcmask 654336
    %v2143 = vsel %vm2142, %v2139, %v2141
    %v2146 = vadd.f32 %v2085, %v2139
    %v2147 = vadd.f32 %v2086, %v2143
    %s2148 = sld [smem:[#allocation2 + $0xb1]]
    %s2149 = sld [smem:[#allocation2 + $0x131]]
    %s2150 = sld [smem:[#allocation2 + $0x1b1]]
    %s2151 = sld [smem:[#allocation2 + $0x231]]
    %v2152 = vstv %s2148
    %v2153 = vmul.f32 %v2152, %v50
    %v2154 = vmul.f32 %v2152, 0.0
    %2157 = vrot.lane.b32.xlu0 %v2153, 109
    %v2158 = vpop.permute.xlu0 %2157
    %2159 = vrot.lane.b32.xlu0 %v2154, 109
    %v2160 = vpop.permute.xlu0 %2159
    %v2161 = vsel %vm506, %v2158, %v2160
    %v2164 = vadd.f32 %v2103, %v2158
    %v2165 = vadd.f32 %v2104, %v2161
    %v2166 = vstv %s2149
    %v2167 = vmul.f32 %v2166, %v50
    %v2168 = vmul.f32 %v2166, 0.0
    %2171 = vrot.lane.b32.xlu0 %v2167, 99
    %v2172 = vpop.permute.xlu0 %2171
    %2173 = vrot.lane.b32.xlu0 %v2168, 99
    %v2174 = vpop.permute.xlu0 %2173
    %v2175 = vsel %vm957, %v2172, %v2174
    %v2178 = vadd.f32 %v2117, %v2172
    %v2179 = vadd.f32 %v2118, %v2175
    %v2180 = vstv %s2150
    %v2181 = vmul.f32 %v2180, %v50
    %v2182 = vmul.f32 %v2180, 0.0
    %2185 = vrot.lane.b32.xlu0 %v2181, 89
    %v2186 = vpop.permute.xlu0 %2185
    %2187 = vrot.lane.b32.xlu0 %v2182, 89
    %v2188 = vpop.permute.xlu0 %2187
    %v2189 = vsel %vm1579, %v2186, %v2188
    %v2192 = vadd.f32 %v2131, %v2186
    %v2193 = vadd.f32 %v2132, %v2189
    %v2194 = vstv %s2151
    %v2195 = vmul.f32 %v2194, %v50
    %v2196 = vmul.f32 %v2194, 0.0
    %2199 = vrot.lane.b32.xlu0 %v2195, 79
    %v2200 = vpop.permute.xlu0 %2199
    %2201 = vrot.lane.b32.xlu0 %v2196, 79
    %v2202 = vpop.permute.xlu0 %2201
    %vm2203 = vcmask 646144
    %v2204 = vsel %vm2203, %v2200, %v2202
    %v2207 = vadd.f32 %v2146, %v2200
    %v2208 = vadd.f32 %v2147, %v2204
    %s2209 = sld [smem:[#allocation2 + $0xb2]]
    %s2210 = sld [smem:[#allocation2 + $0x132]]
    %s2211 = sld [smem:[#allocation2 + $0x1b2]]
    %s2212 = sld [smem:[#allocation2 + $0x232]]
    %v2213 = vstv %s2209
    %v2214 = vmul.f32 %v2213, %v50
    %v2215 = vmul.f32 %v2213, 0.0
    %2218 = vrot.lane.b32.xlu0 %v2214, 108
    %v2219 = vpop.permute.xlu0 %2218
    %2220 = vrot.lane.b32.xlu0 %v2215, 108
    %v2221 = vpop.permute.xlu0 %2220
    %v2222 = vsel %vm543, %v2219, %v2221
    %v2225 = vadd.f32 %v2164, %v2219
    %v2226 = vadd.f32 %v2165, %v2222
    %v2227 = vstv %s2210
    %v2228 = vmul.f32 %v2227, %v50
    %v2229 = vmul.f32 %v2227, 0.0
    %2232 = vrot.lane.b32.xlu0 %v2228, 98
    %v2233 = vpop.permute.xlu0 %2232
    %2234 = vrot.lane.b32.xlu0 %v2229, 98
    %v2235 = vpop.permute.xlu0 %2234
    %v2236 = vsel %vm1009, %v2233, %v2235
    %v2239 = vadd.f32 %v2178, %v2233
    %v2240 = vadd.f32 %v2179, %v2236
    %v2241 = vstv %s2211
    %v2242 = vmul.f32 %v2241, %v50
    %v2243 = vmul.f32 %v2241, 0.0
    %2246 = vrot.lane.b32.xlu0 %v2242, 88
    %v2247 = vpop.permute.xlu0 %2246
    %2248 = vrot.lane.b32.xlu0 %v2243, 88
    %v2249 = vpop.permute.xlu0 %2248
    %vm2250 = vcmask 719872
    %v2251 = vsel %vm2250, %v2247, %v2249
    %v2254 = vadd.f32 %v2192, %v2247
    %v2255 = vadd.f32 %v2193, %v2251
    %v2256 = vstv %s2212
    %v2257 = vmul.f32 %v2256, %v50
    %v2258 = vmul.f32 %v2256, 0.0
    %2261 = vrot.lane.b32.xlu0 %v2257, 78
    %v2262 = vpop.permute.xlu0 %2261
    %2263 = vrot.lane.b32.xlu0 %v2258, 78
    %v2264 = vpop.permute.xlu0 %2263
    %vm2265 = vcmask 637952
    %v2266 = vsel %vm2265, %v2262, %v2264
    %v2269 = vadd.f32 %v2207, %v2262
    %v2270 = vadd.f32 %v2208, %v2266
    %s2271 = sld [smem:[#allocation2 + $0x133]]
    %s2272 = sld [smem:[#allocation2 + $0x1b3]]
    %s2273 = sld [smem:[#allocation2 + $0x233]]
    %v2274 = vstv %s2271
    %v2275 = vmul.f32 %v2274, %v50
    %v2276 = vmul.f32 %v2274, 0.0
    %2279 = vrot.lane.b32.xlu0 %v2275, 97
    %v2280 = vpop.permute.xlu0 %2279
    %2281 = vrot.lane.b32.xlu0 %v2276, 97
    %v2282 = vpop.permute.xlu0 %2281
    %v2283 = vsel %vm1070, %v2280, %v2282
    %v2286 = vadd.f32 %v2239, %v2280
    %v2287 = vadd.f32 %v2240, %v2283
    %v2288 = vstv %s2272
    %v2289 = vmul.f32 %v2288, %v50
    %v2290 = vmul.f32 %v2288, 0.0
    %2293 = vrot.lane.b32.xlu0 %v2289, 87
    %v2294 = vpop.permute.xlu0 %2293
    %2295 = vrot.lane.b32.xlu0 %v2290, 87
    %v2296 = vpop.permute.xlu0 %2295
    %v2297 = vsel %vm1700, %v2294, %v2296
    %v2300 = vadd.f32 %v2254, %v2294
    %v2301 = vadd.f32 %v2255, %v2297
    %v2302 = vstv %s2273
    %v2303 = vmul.f32 %v2302, %v50
    %v2304 = vmul.f32 %v2302, 0.0
    %2307 = vrot.lane.b32.xlu0 %v2303, 77
    %v2308 = vpop.permute.xlu0 %2307
    %2309 = vrot.lane.b32.xlu0 %v2304, 77
    %v2310 = vpop.permute.xlu0 %2309
    %vm2311 = vcmask 629760
    %v2312 = vsel %vm2311, %v2308, %v2310
    %v2315 = vadd.f32 %v2269, %v2308
    %v2316 = vadd.f32 %v2270, %v2312
    %s2317 = sld [smem:[#allocation2 + $0x134]]
    %s2318 = sld [smem:[#allocation2 + $0x1b4]]
    %s2319 = sld [smem:[#allocation2 + $0x234]]
    %v2320 = vstv %s2317
    %v2321 = vmul.f32 %v2320, %v50
    %v2322 = vmul.f32 %v2320, 0.0
    %2325 = vrot.lane.b32.xlu0 %v2321, 96
    %v2326 = vpop.permute.xlu0 %2325
    %2327 = vrot.lane.b32.xlu0 %v2322, 96
    %v2328 = vpop.permute.xlu0 %2327
    %v2329 = vsel %vm1131, %v2326, %v2328
    %v2332 = vadd.f32 %v2286, %v2326
    %v2333 = vadd.f32 %v2287, %v2329
    %v2334 = vstv %s2318
    %v2335 = vmul.f32 %v2334, %v50
    %v2336 = vmul.f32 %v2334, 0.0
    %2339 = vrot.lane.b32.xlu0 %v2335, 86
    %v2340 = vpop.permute.xlu0 %2339
    %2341 = vrot.lane.b32.xlu0 %v2336, 86
    %v2342 = vpop.permute.xlu0 %2341
    %v2343 = vsel %vm1776, %v2340, %v2342
    %v2346 = vadd.f32 %v2300, %v2340
    %v2347 = vadd.f32 %v2301, %v2343
    %v2348 = vstv %s2319
    %v2349 = vmul.f32 %v2348, %v50
    %v2350 = vmul.f32 %v2348, 0.0
    %2353 = vrot.lane.b32.xlu0 %v2349, 76
    %v2354 = vpop.permute.xlu0 %2353
    %2355 = vrot.lane.b32.xlu0 %v2350, 76
    %v2356 = vpop.permute.xlu0 %2355
    %vm2357 = vcmask 621568
    %v2358 = vsel %vm2357, %v2354, %v2356
    %v2361 = vadd.f32 %v2315, %v2354
    %v2362 = vadd.f32 %v2316, %v2358
    %s2363 = sld [smem:[#allocation2 + $0x135]]
    %s2364 = sld [smem:[#allocation2 + $0x1b5]]
    %s2365 = sld [smem:[#allocation2 + $0x235]]
    %v2366 = vstv %s2363
    %v2367 = vmul.f32 %v2366, %v50
    %v2368 = vmul.f32 %v2366, 0.0
    %2371 = vrot.lane.b32.xlu0 %v2367, 95
    %v2372 = vpop.permute.xlu0 %2371
    %2373 = vrot.lane.b32.xlu0 %v2368, 95
    %v2374 = vpop.permute.xlu0 %2373
    %v2375 = vsel %vm1192, %v2372, %v2374
    %v2378 = vadd.f32 %v2332, %v2372
    %v2379 = vadd.f32 %v2333, %v2375
    %v2380 = vstv %s2364
    %v2381 = vmul.f32 %v2380, %v50
    %v2382 = vmul.f32 %v2380, 0.0
    %2385 = vrot.lane.b32.xlu0 %v2381, 85
    %v2386 = vpop.permute.xlu0 %2385
    %2387 = vrot.lane.b32.xlu0 %v2382, 85
    %v2388 = vpop.permute.xlu0 %2387
    %v2389 = vsel %vm1837, %v2386, %v2388
    %v2392 = vadd.f32 %v2346, %v2386
    %v2393 = vadd.f32 %v2347, %v2389
    %v2394 = vstv %s2365
    %v2395 = vmul.f32 %v2394, %v50
    %v2396 = vmul.f32 %v2394, 0.0
    %2399 = vrot.lane.b32.xlu0 %v2395, 75
    %v2400 = vpop.permute.xlu0 %2399
    %2401 = vrot.lane.b32.xlu0 %v2396, 75
    %v2402 = vpop.permute.xlu0 %2401
    %vm2403 = vcmask 613376
    %v2404 = vsel %vm2403, %v2400, %v2402
    %v2407 = vadd.f32 %v2361, %v2400
    %v2408 = vadd.f32 %v2362, %v2404
    %s2409 = sld [smem:[#allocation2 + $0x136]]
    %s2410 = sld [smem:[#allocation2 + $0x1b6]]
    %s2411 = sld [smem:[#allocation2 + $0x236]]
    %v2412 = vstv %s2409
    %v2413 = vmul.f32 %v2412, %v50
    %v2414 = vmul.f32 %v2412, 0.0
    %2417 = vrot.lane.b32.xlu0 %v2413, 94
    %v2418 = vpop.permute.xlu0 %2417
    %2419 = vrot.lane.b32.xlu0 %v2414, 94
    %v2420 = vpop.permute.xlu0 %2419
    %v2421 = vsel %vm1253, %v2418, %v2420
    %v2424 = vadd.f32 %v2378, %v2418
    %v2425 = vadd.f32 %v2379, %v2421
    %v2426 = vstv %s2410
    %v2427 = vmul.f32 %v2426, %v50
    %v2428 = vmul.f32 %v2426, 0.0
    %2431 = vrot.lane.b32.xlu0 %v2427, 84
    %v2432 = vpop.permute.xlu0 %2431
    %2433 = vrot.lane.b32.xlu0 %v2428, 84
    %v2434 = vpop.permute.xlu0 %2433
    %v2435 = vsel %vm1898, %v2432, %v2434
    %v2438 = vadd.f32 %v2392, %v2432
    %v2439 = vadd.f32 %v2393, %v2435
    %v2440 = vstv %s2411
    %v2441 = vmul.f32 %v2440, %v50
    %v2442 = vmul.f32 %v2440, 0.0
    %2445 = vrot.lane.b32.xlu0 %v2441, 74
    %v2446 = vpop.permute.xlu0 %2445
    %2447 = vrot.lane.b32.xlu0 %v2442, 74
    %v2448 = vpop.permute.xlu0 %2447
    %vm2449 = vcmask 605184
    %v2450 = vsel %vm2449, %v2446, %v2448
    %v2453 = vadd.f32 %v2407, %v2446
    %v2454 = vadd.f32 %v2408, %v2450
    %s2455 = sld [smem:[#allocation2 + $0x137]]
    %s2456 = sld [smem:[#allocation2 + $0x1b7]]
    %s2457 = sld [smem:[#allocation2 + $0x237]]
    %v2458 = vstv %s2455
    %v2459 = vmul.f32 %v2458, %v50
    %v2460 = vmul.f32 %v2458, 0.0
    %2463 = vrot.lane.b32.xlu0 %v2459, 93
    %v2464 = vpop.permute.xlu0 %2463
    %2465 = vrot.lane.b32.xlu0 %v2460, 93
    %v2466 = vpop.permute.xlu0 %2465
    %v2467 = vsel %vm1314, %v2464, %v2466
    %v2470 = vadd.f32 %v2424, %v2464
    %v2471 = vadd.f32 %v2425, %v2467
    %v2472 = vstv %s2456
    %v2473 = vmul.f32 %v2472, %v50
    %v2474 = vmul.f32 %v2472, 0.0
    %2477 = vrot.lane.b32.xlu0 %v2473, 83
    %v2478 = vpop.permute.xlu0 %2477
    %2479 = vrot.lane.b32.xlu0 %v2474, 83
    %v2480 = vpop.permute.xlu0 %2479
    %v2481 = vsel %vm1959, %v2478, %v2480
    %v2484 = vadd.f32 %v2438, %v2478
    %v2485 = vadd.f32 %v2439, %v2481
    %v2486 = vstv %s2457
    %v2487 = vmul.f32 %v2486, %v50
    %v2488 = vmul.f32 %v2486, 0.0
    %2491 = vrot.lane.b32.xlu0 %v2487, 73
    %v2492 = vpop.permute.xlu0 %2491
    %2493 = vrot.lane.b32.xlu0 %v2488, 73
    %v2494 = vpop.permute.xlu0 %2493
    %vm2495 = vcmask 596992
    %v2496 = vsel %vm2495, %v2492, %v2494
    %v2499 = vadd.f32 %v2453, %v2492
    %v2500 = vadd.f32 %v2454, %v2496
    %s2501 = sld [smem:[#allocation2 + $0x138]]
    %s2502 = sld [smem:[#allocation2 + $0x1b8]]
    %s2503 = sld [smem:[#allocation2 + $0x238]]
    %v2504 = vstv %s2501
    %v2505 = vmul.f32 %v2504, %v50
    %v2506 = vmul.f32 %v2504, 0.0
    %2509 = vrot.lane.b32.xlu0 %v2505, 92
    %v2510 = vpop.permute.xlu0 %2509
    %2511 = vrot.lane.b32.xlu0 %v2506, 92
    %v2512 = vpop.permute.xlu0 %2511
    %v2513 = vsel %vm1375, %v2510, %v2512
    %v2516 = vadd.f32 %v2470, %v2510
    %v2517 = vadd.f32 %v2471, %v2513
    %v2518 = vstv %s2502
    %v2519 = vmul.f32 %v2518, %v50
    %v2520 = vmul.f32 %v2518, 0.0
    %2523 = vrot.lane.b32.xlu0 %v2519, 82
    %v2524 = vpop.permute.xlu0 %2523
    %2525 = vrot.lane.b32.xlu0 %v2520, 82
    %v2526 = vpop.permute.xlu0 %2525
    %v2527 = vsel %vm2020, %v2524, %v2526
    %v2530 = vadd.f32 %v2484, %v2524
    %v2531 = vadd.f32 %v2485, %v2527
    %v2532 = vstv %s2503
    %v2533 = vmul.f32 %v2532, %v50
    %v2534 = vmul.f32 %v2532, 0.0
    %2537 = vrot.lane.b32.xlu0 %v2533, 72
    %v2538 = vpop.permute.xlu0 %2537
    %2539 = vrot.lane.b32.xlu0 %v2534, 72
    %v2540 = vpop.permute.xlu0 %2539
    %vm2541 = vcmask 588800
    %v2542 = vsel %vm2541, %v2538, %v2540
    %v2545 = vadd.f32 %v2499, %v2538
    %v2546 = vadd.f32 %v2500, %v2542
    %s2547 = sld [smem:[#allocation2 + $0x139]]
    %s2548 = sld [smem:[#allocation2 + $0x1b9]]
    %s2549 = sld [smem:[#allocation2 + $0x239]]
    %v2550 = vstv %s2547
    %v2551 = vmul.f32 %v2550, %v50
    %v2552 = vmul.f32 %v2550, 0.0
    %2555 = vrot.lane.b32.xlu0 %v2551, 91
    %v2556 = vpop.permute.xlu0 %2555
    %2557 = vrot.lane.b32.xlu0 %v2552, 91
    %v2558 = vpop.permute.xlu0 %2557
    %v2559 = vsel %vm1436, %v2556, %v2558
    %v2562 = vadd.f32 %v2516, %v2556
    %v2563 = vadd.f32 %v2517, %v2559
    %v2564 = vstv %s2548
    %v2565 = vmul.f32 %v2564, %v50
    %v2566 = vmul.f32 %v2564, 0.0
    %2569 = vrot.lane.b32.xlu0 %v2565, 81
    %v2570 = vpop.permute.xlu0 %2569
    %2571 = vrot.lane.b32.xlu0 %v2566, 81
    %v2572 = vpop.permute.xlu0 %2571
    %v2573 = vsel %vm2081, %v2570, %v2572
    %v2576 = vadd.f32 %v2530, %v2570
    %v2577 = vadd.f32 %v2531, %v2573
    %v2578 = vstv %s2549
    %v2579 = vmul.f32 %v2578, %v50
    %v2580 = vmul.f32 %v2578, 0.0
    %2583 = vrot.lane.b32.xlu0 %v2579, 71
    %v2584 = vpop.permute.xlu0 %2583
    %2585 = vrot.lane.b32.xlu0 %v2580, 71
    %v2586 = vpop.permute.xlu0 %2585
    %vm2587 = vcmask 580608
    %v2588 = vsel %vm2587, %v2584, %v2586
    %v2591 = vadd.f32 %v2545, %v2584
    %v2592 = vadd.f32 %v2546, %v2588
    %s2593 = sld [smem:[#allocation2 + $0x13a]]
    %s2594 = sld [smem:[#allocation2 + $0x1ba]]
    %s2595 = sld [smem:[#allocation2 + $0x23a]]
    %v2596 = vstv %s2593
    %v2597 = vmul.f32 %v2596, %v50
    %v2598 = vmul.f32 %v2596, 0.0
    %2601 = vrot.lane.b32.xlu0 %v2597, 90
    %v2602 = vpop.permute.xlu0 %2601
    %2603 = vrot.lane.b32.xlu0 %v2598, 90
    %v2604 = vpop.permute.xlu0 %2603
    %v2605 = vsel %vm1503, %v2602, %v2604
    %v2608 = vadd.f32 %v2562, %v2602
    %v2609 = vadd.f32 %v2563, %v2605
    %v2610 = vstv %s2594
    %v2611 = vmul.f32 %v2610, %v50
    %v2612 = vmul.f32 %v2610, 0.0
    %2615 = vrot.lane.b32.xlu0 %v2611, 80
    %v2616 = vpop.permute.xlu0 %2615
    %2617 = vrot.lane.b32.xlu0 %v2612, 80
    %v2618 = vpop.permute.xlu0 %2617
    %v2619 = vsel %vm2142, %v2616, %v2618
    %v2622 = vadd.f32 %v2576, %v2616
    %v2623 = vadd.f32 %v2577, %v2619
    %v2624 = vstv %s2595
    %v2625 = vmul.f32 %v2624, %v50
    %v2626 = vmul.f32 %v2624, 0.0
    %2629 = vrot.lane.b32.xlu0 %v2625, 70
    %v2630 = vpop.permute.xlu0 %2629
    %2631 = vrot.lane.b32.xlu0 %v2626, 70
    %v2632 = vpop.permute.xlu0 %2631
    %vm2633 = vcmask 572416
    %v2634 = vsel %vm2633, %v2630, %v2632
    %v2637 = vadd.f32 %v2591, %v2630
    %v2638 = vadd.f32 %v2592, %v2634
    %s2639 = sld [smem:[#allocation2 + $0x13b]]
    %s2640 = sld [smem:[#allocation2 + $0x1bb]]
    %s2641 = sld [smem:[#allocation2 + $0x23b]]
    %v2642 = vstv %s2639
    %v2643 = vmul.f32 %v2642, %v50
    %v2644 = vmul.f32 %v2642, 0.0
    %2647 = vrot.lane.b32.xlu0 %v2643, 89
    %v2648 = vpop.permute.xlu0 %2647
    %2649 = vrot.lane.b32.xlu0 %v2644, 89
    %v2650 = vpop.permute.xlu0 %2649
    %v2651 = vsel %vm1579, %v2648, %v2650
    %v2654 = vadd.f32 %v2608, %v2648
    %v2655 = vadd.f32 %v2609, %v2651
    %v2656 = vstv %s2640
    %v2657 = vmul.f32 %v2656, %v50
    %v2658 = vmul.f32 %v2656, 0.0
    %2661 = vrot.lane.b32.xlu0 %v2657, 79
    %v2662 = vpop.permute.xlu0 %2661
    %2663 = vrot.lane.b32.xlu0 %v2658, 79
    %v2664 = vpop.permute.xlu0 %2663
    %v2665 = vsel %vm2203, %v2662, %v2664
    %v2668 = vadd.f32 %v2622, %v2662
    %v2669 = vadd.f32 %v2623, %v2665
    %v2670 = vstv %s2641
    %v2671 = vmul.f32 %v2670, %v50
    %v2672 = vmul.f32 %v2670, 0.0
    %2675 = vrot.lane.b32.xlu0 %v2671, 69
    %v2676 = vpop.permute.xlu0 %2675
    %2677 = vrot.lane.b32.xlu0 %v2672, 69
    %v2678 = vpop.permute.xlu0 %2677
    %vm2679 = vcmask 564224
    %v2680 = vsel %vm2679, %v2676, %v2678
    %v2683 = vadd.f32 %v2637, %v2676
    %v2684 = vadd.f32 %v2638, %v2680
    %s2685 = sld [smem:[#allocation2 + $0x13c]]
    %s2686 = sld [smem:[#allocation2 + $0x1bc]]
    %s2687 = sld [smem:[#allocation2 + $0x23c]]
    %v2688 = vstv %s2685
    %v2689 = vmul.f32 %v2688, %v50
    %v2690 = vmul.f32 %v2688, 0.0
    %2693 = vrot.lane.b32.xlu0 %v2689, 88
    %v2694 = vpop.permute.xlu0 %2693
    %2695 = vrot.lane.b32.xlu0 %v2690, 88
    %v2696 = vpop.permute.xlu0 %2695
    %v2697 = vsel %vm2250, %v2694, %v2696
    %v2700 = vadd.f32 %v2654, %v2694
    %v2701 = vadd.f32 %v2655, %v2697
    %v2702 = vstv %s2686
    %v2703 = vmul.f32 %v2702, %v50
    %v2704 = vmul.f32 %v2702, 0.0
    %2707 = vrot.lane.b32.xlu0 %v2703, 78
    %v2708 = vpop.permute.xlu0 %2707
    %2709 = vrot.lane.b32.xlu0 %v2704, 78
    %v2710 = vpop.permute.xlu0 %2709
    %v2711 = vsel %vm2265, %v2708, %v2710
    %v2714 = vadd.f32 %v2668, %v2708
    %v2715 = vadd.f32 %v2669, %v2711
    %v2716 = vstv %s2687
    %v2717 = vmul.f32 %v2716, %v50
    %v2718 = vmul.f32 %v2716, 0.0
    %2721 = vrot.lane.b32.xlu0 %v2717, 68
    %v2722 = vpop.permute.xlu0 %2721
    %2723 = vrot.lane.b32.xlu0 %v2718, 68
    %v2724 = vpop.permute.xlu0 %2723
    %vm2725 = vcmask 556032
    %v2726 = vsel %vm2725, %v2722, %v2724
    %v2729 = vadd.f32 %v2683, %v2722
    %v2730 = vadd.f32 %v2684, %v2726
    %s2731 = sld [smem:[#allocation2 + $0x1bd]]
    %s2732 = sld [smem:[#allocation2 + $0x23d]]
    %v2733 = vstv %s2731
    %v2734 = vmul.f32 %v2733, %v50
    %v2735 = vmul.f32 %v2733, 0.0
    %2738 = vrot.lane.b32.xlu0 %v2734, 77
    %v2739 = vpop.permute.xlu0 %2738
    %2740 = vrot.lane.b32.xlu0 %v2735, 77
    %v2741 = vpop.permute.xlu0 %2740
    %v2742 = vsel %vm2311, %v2739, %v2741
    %v2745 = vadd.f32 %v2714, %v2739
    %v2746 = vadd.f32 %v2715, %v2742
    %v2747 = vstv %s2732
    %v2748 = vmul.f32 %v2747, %v50
    %v2749 = vmul.f32 %v2747, 0.0
    %2752 = vrot.lane.b32.xlu0 %v2748, 67
    %v2753 = vpop.permute.xlu0 %2752
    %2754 = vrot.lane.b32.xlu0 %v2749, 67
    %v2755 = vpop.permute.xlu0 %2754
    %vm2756 = vcmask 547840
    %v2757 = vsel %vm2756, %v2753, %v2755
    %v2760 = vadd.f32 %v2729, %v2753
    %v2761 = vadd.f32 %v2730, %v2757
    %s2762 = sld [smem:[#allocation2 + $0x1be]]
    %s2763 = sld [smem:[#allocation2 + $0x23e]]
    %v2764 = vstv %s2762
    %v2765 = vmul.f32 %v2764, %v50
    %v2766 = vmul.f32 %v2764, 0.0
    %2769 = vrot.lane.b32.xlu0 %v2765, 76
    %v2770 = vpop.permute.xlu0 %2769
    %2771 = vrot.lane.b32.xlu0 %v2766, 76
    %v2772 = vpop.permute.xlu0 %2771
    %v2773 = vsel %vm2357, %v2770, %v2772
    %v2776 = vadd.f32 %v2745, %v2770
    %v2777 = vadd.f32 %v2746, %v2773
    %v2778 = vstv %s2763
    %v2779 = vmul.f32 %v2778, %v50
    %v2780 = vmul.f32 %v2778, 0.0
    %2783 = vrot.lane.b32.xlu0 %v2779, 66
    %v2784 = vpop.permute.xlu0 %2783
    %2785 = vrot.lane.b32.xlu0 %v2780, 66
    %v2786 = vpop.permute.xlu0 %2785
    %vm2787 = vcmask 539648
    %v2788 = vsel %vm2787, %v2784, %v2786
    %v2791 = vadd.f32 %v2760, %v2784
    %v2792 = vadd.f32 %v2761, %v2788
    %s2793 = sld [smem:[#allocation2 + $0x1bf]]
    %s2794 = sld [smem:[#allocation2 + $0x23f]]
    %v2795 = vstv %s2793
    %v2796 = vmul.f32 %v2795, %v50
    %v2797 = vmul.f32 %v2795, 0.0
    %2800 = vrot.lane.b32.xlu0 %v2796, 75
    %v2801 = vpop.permute.xlu0 %2800
    %2802 = vrot.lane.b32.xlu0 %v2797, 75
    %v2803 = vpop.permute.xlu0 %2802
    %v2804 = vsel %vm2403, %v2801, %v2803
    %v2807 = vadd.f32 %v2776, %v2801
    %v2808 = vadd.f32 %v2777, %v2804
    %v2809 = vstv %s2794
    %v2810 = vmul.f32 %v2809, %v50
    %v2811 = vmul.f32 %v2809, 0.0
    %2814 = vrot.lane.b32.xlu0 %v2810, 65
    %v2815 = vpop.permute.xlu0 %2814
    %2816 = vrot.lane.b32.xlu0 %v2811, 65
    %v2817 = vpop.permute.xlu0 %2816
    %vm2818 = vcmask 531456
    %v2819 = vsel %vm2818, %v2815, %v2817
    %v2822 = vadd.f32 %v2791, %v2815
    %v2823 = vadd.f32 %v2792, %v2819
    %s2824 = sld [smem:[#allocation2 + $0x1c0]]
    %s2825 = sld [smem:[#allocation2 + $0x240]]
    %v2826 = vstv %s2824
    %v2827 = vmul.f32 %v2826, %v50
    %v2828 = vmul.f32 %v2826, 0.0
    %2831 = vrot.lane.b32.xlu0 %v2827, 74
    %v2832 = vpop.permute.xlu0 %2831
    %2833 = vrot.lane.b32.xlu0 %v2828, 74
    %v2834 = vpop.permute.xlu0 %2833
    %v2835 = vsel %vm2449, %v2832, %v2834
    %v2838 = vadd.f32 %v2807, %v2832
    %v2839 = vadd.f32 %v2808, %v2835
    %v2840 = vstv %s2825
    %v2841 = vmul.f32 %v2840, %v50
    %v2842 = vmul.f32 %v2840, 0.0
    %2845 = vrot.lane.b32.xlu0 %v2841, 64
    %v2846 = vpop.permute.xlu0 %2845
    %2847 = vrot.lane.b32.xlu0 %v2842, 64
    %v2848 = vpop.permute.xlu0 %2847
    %vm2849 = vcmask 523264
    %v2850 = vsel %vm2849, %v2846, %v2848
    %v2853 = vadd.f32 %v2822, %v2846
    %v2854 = vadd.f32 %v2823, %v2850
    %s2855 = sld [smem:[#allocation2 + $0x1c1]]
    %s2856 = sld [smem:[#allocation2 + $0x241]]
    %v2857 = vstv %s2855
    %v2858 = vmul.f32 %v2857, %v50
    %v2859 = vmul.f32 %v2857, 0.0
    %2862 = vrot.lane.b32.xlu0 %v2858, 73
    %v2863 = vpop.permute.xlu0 %2862
    %2864 = vrot.lane.b32.xlu0 %v2859, 73
    %v2865 = vpop.permute.xlu0 %2864
    %v2866 = vsel %vm2495, %v2863, %v2865
    %v2869 = vadd.f32 %v2838, %v2863
    %v2870 = vadd.f32 %v2839, %v2866
    %v2871 = vstv %s2856
    %v2872 = vmul.f32 %v2871, %v50
    %v2873 = vmul.f32 %v2871, 0.0
    %2876 = vrot.lane.b32.xlu0 %v2872, 63
    %v2877 = vpop.permute.xlu0 %2876
    %2878 = vrot.lane.b32.xlu0 %v2873, 63
    %v2879 = vpop.permute.xlu0 %2878
    %vm2880 = vcmask 515072
    %v2881 = vsel %vm2880, %v2877, %v2879
    %v2884 = vadd.f32 %v2853, %v2877
    %v2885 = vadd.f32 %v2854, %v2881
    %s2886 = sld [smem:[#allocation2 + $0x1c2]]
    %s2887 = sld [smem:[#allocation2 + $0x242]]
    %v2888 = vstv %s2886
    %v2889 = vmul.f32 %v2888, %v50
    %v2890 = vmul.f32 %v2888, 0.0
    %2893 = vrot.lane.b32.xlu0 %v2889, 72
    %v2894 = vpop.permute.xlu0 %2893
    %2895 = vrot.lane.b32.xlu0 %v2890, 72
    %v2896 = vpop.permute.xlu0 %2895
    %v2897 = vsel %vm2541, %v2894, %v2896
    %v2900 = vadd.f32 %v2869, %v2894
    %v2901 = vadd.f32 %v2870, %v2897
    %v2902 = vstv %s2887
    %v2903 = vmul.f32 %v2902, %v50
    %v2904 = vmul.f32 %v2902, 0.0
    %2907 = vrot.lane.b32.xlu0 %v2903, 62
    %v2908 = vpop.permute.xlu0 %2907
    %2909 = vrot.lane.b32.xlu0 %v2904, 62
    %v2910 = vpop.permute.xlu0 %2909
    %vm2911 = vcmask 506880
    %v2912 = vsel %vm2911, %v2908, %v2910
    %v2915 = vadd.f32 %v2884, %v2908
    %v2916 = vadd.f32 %v2885, %v2912
    %s2917 = sld [smem:[#allocation2 + $0x1c3]]
    %s2918 = sld [smem:[#allocation2 + $0x243]]
    %v2919 = vstv %s2917
    %v2920 = vmul.f32 %v2919, %v50
    %v2921 = vmul.f32 %v2919, 0.0
    %2924 = vrot.lane.b32.xlu0 %v2920, 71
    %v2925 = vpop.permute.xlu0 %2924
    %2926 = vrot.lane.b32.xlu0 %v2921, 71
    %v2927 = vpop.permute.xlu0 %2926
    %v2928 = vsel %vm2587, %v2925, %v2927
    %v2931 = vadd.f32 %v2900, %v2925
    %v2932 = vadd.f32 %v2901, %v2928
    %v2933 = vstv %s2918
    %v2934 = vmul.f32 %v2933, %v50
    %v2935 = vmul.f32 %v2933, 0.0
    %2938 = vrot.lane.b32.xlu0 %v2934, 61
    %v2939 = vpop.permute.xlu0 %2938
    %2940 = vrot.lane.b32.xlu0 %v2935, 61
    %v2941 = vpop.permute.xlu0 %2940
    %vm2942 = vcmask 498688
    %v2943 = vsel %vm2942, %v2939, %v2941
    %v2946 = vadd.f32 %v2915, %v2939
    %v2947 = vadd.f32 %v2916, %v2943
    %s2948 = sld [smem:[#allocation2 + $0x1c4]]
    %s2949 = sld [smem:[#allocation2 + $0x244]]
    %v2950 = vstv %s2948
    %v2951 = vmul.f32 %v2950, %v50
    %v2952 = vmul.f32 %v2950, 0.0
    %2955 = vrot.lane.b32.xlu0 %v2951, 70
    %v2956 = vpop.permute.xlu0 %2955
    %2957 = vrot.lane.b32.xlu0 %v2952, 70
    %v2958 = vpop.permute.xlu0 %2957
    %v2959 = vsel %vm2633, %v2956, %v2958
    %v2962 = vadd.f32 %v2931, %v2956
    %v2963 = vadd.f32 %v2932, %v2959
    %v2964 = vstv %s2949
    %v2965 = vmul.f32 %v2964, %v50
    %v2966 = vmul.f32 %v2964, 0.0
    %2969 = vrot.lane.b32.xlu0 %v2965, 60
    %v2970 = vpop.permute.xlu0 %2969
    %2971 = vrot.lane.b32.xlu0 %v2966, 60
    %v2972 = vpop.permute.xlu0 %2971
    %vm2973 = vcmask 490496
    %v2974 = vsel %vm2973, %v2970, %v2972
    %v2977 = vadd.f32 %v2946, %v2970
    %v2978 = vadd.f32 %v2947, %v2974
    %s2979 = sld [smem:[#allocation2 + $0x1c5]]
    %s2980 = sld [smem:[#allocation2 + $0x245]]
    %v2981 = vstv %s2979
    %v2982 = vmul.f32 %v2981, %v50
    %v2983 = vmul.f32 %v2981, 0.0
    %2986 = vrot.lane.b32.xlu0 %v2982, 69
    %v2987 = vpop.permute.xlu0 %2986
    %2988 = vrot.lane.b32.xlu0 %v2983, 69
    %v2989 = vpop.permute.xlu0 %2988
    %v2990 = vsel %vm2679, %v2987, %v2989
    %v2993 = vadd.f32 %v2962, %v2987
    %v2994 = vadd.f32 %v2963, %v2990
    %v2995 = vstv %s2980
    %v2996 = vmul.f32 %v2995, %v50
    %v2997 = vmul.f32 %v2995, 0.0
    %3000 = vrot.lane.b32.xlu0 %v2996, 59
    %v3001 = vpop.permute.xlu0 %3000
    %3002 = vrot.lane.b32.xlu0 %v2997, 59
    %v3003 = vpop.permute.xlu0 %3002
    %vm3004 = vcmask 482304
    %v3005 = vsel %vm3004, %v3001, %v3003
    %v3008 = vadd.f32 %v2977, %v3001
    %v3009 = vadd.f32 %v2978, %v3005
    %s3010 = sld [smem:[#allocation2 + $0x1c6]]
    %s3011 = sld [smem:[#allocation2 + $0x246]]
    %v3012 = vstv %s3010
    %v3013 = vmul.f32 %v3012, %v50
    %v3014 = vmul.f32 %v3012, 0.0
    %3017 = vrot.lane.b32.xlu0 %v3013, 68
    %v3018 = vpop.permute.xlu0 %3017
    %3019 = vrot.lane.b32.xlu0 %v3014, 68
    %v3020 = vpop.permute.xlu0 %3019
    %v3021 = vsel %vm2725, %v3018, %v3020
    %v3024 = vadd.f32 %v2993, %v3018
    %v3025 = vadd.f32 %v2994, %v3021
    %v3026 = vstv %s3011
    %v3027 = vmul.f32 %v3026, %v50
    %v3028 = vmul.f32 %v3026, 0.0
    %3031 = vrot.lane.b32.xlu0 %v3027, 58
    %v3032 = vpop.permute.xlu0 %3031
    %3033 = vrot.lane.b32.xlu0 %v3028, 58
    %v3034 = vpop.permute.xlu0 %3033
    %vm3035 = vcmask 474112
    %v3036 = vsel %vm3035, %v3032, %v3034
    %v3039 = vadd.f32 %v3008, %v3032
    %v3040 = vadd.f32 %v3009, %v3036
    %s3041 = sld [smem:[#allocation2 + $0x247]]
    %v3042 = vstv %s3041
    %v3043 = vmul.f32 %v3042, %v50
    %v3044 = vmul.f32 %v3042, 0.0
    %3047 = vrot.lane.b32.xlu0 %v3043, 57
    %v3048 = vpop.permute.xlu0 %3047
    %3049 = vrot.lane.b32.xlu0 %v3044, 57
    %v3050 = vpop.permute.xlu0 %3049
    %vm3051 = vcmask 465920
    %v3052 = vsel %vm3051, %v3048, %v3050
    %v3055 = vadd.f32 %v3039, %v3048
    %v3056 = vadd.f32 %v3040, %v3052
    %s3057 = sld [smem:[#allocation2 + $0x248]]
    %v3058 = vstv %s3057
    %v3059 = vmul.f32 %v3058, %v50
    %v3060 = vmul.f32 %v3058, 0.0
    %3063 = vrot.lane.b32.xlu0 %v3059, 56
    %v3064 = vpop.permute.xlu0 %3063
    %3065 = vrot.lane.b32.xlu0 %v3060, 56
    %v3066 = vpop.permute.xlu0 %3065
    %vm3067 = vcmask 457728
    %v3068 = vsel %vm3067, %v3064, %v3066
    %v3071 = vadd.f32 %v3055, %v3064
    %v3072 = vadd.f32 %v3056, %v3068
    %s3073 = sld [smem:[#allocation2 + $0x249]]
    %v3074 = vstv %s3073
    %v3075 = vmul.f32 %v3074, %v50
    %v3076 = vmul.f32 %v3074, 0.0
    %3079 = vrot.lane.b32.xlu0 %v3075, 55
    %v3080 = vpop.permute.xlu0 %3079
    %3081 = vrot.lane.b32.xlu0 %v3076, 55
    %v3082 = vpop.permute.xlu0 %3081
    %vm3083 = vcmask 449536
    %v3084 = vsel %vm3083, %v3080, %v3082
    %v3087 = vadd.f32 %v3071, %v3080
    %v3088 = vadd.f32 %v3072, %v3084
    %s3089 = sld [smem:[#allocation2 + $0x24a]]
    %v3090 = vstv %s3089
    %v3091 = vmul.f32 %v3090, %v50
    %v3092 = vmul.f32 %v3090, 0.0
    %3095 = vrot.lane.b32.xlu0 %v3091, 54
    %v3096 = vpop.permute.xlu0 %3095
    %3097 = vrot.lane.b32.xlu0 %v3092, 54
    %v3098 = vpop.permute.xlu0 %3097
    %vm3099 = vcmask 441344
    %v3100 = vsel %vm3099, %v3096, %v3098
    %v3103 = vadd.f32 %v3087, %v3096
    %v3104 = vadd.f32 %v3088, %v3100
    %s3105 = sld [smem:[#allocation2 + $0x24b]]
    %v3106 = vstv %s3105
    %v3107 = vmul.f32 %v3106, %v50
    %v3108 = vmul.f32 %v3106, 0.0
    %3111 = vrot.lane.b32.xlu0 %v3107, 53
    %v3112 = vpop.permute.xlu0 %3111
    %3113 = vrot.lane.b32.xlu0 %v3108, 53
    %v3114 = vpop.permute.xlu0 %3113
    %vm3115 = vcmask 433152
    %v3116 = vsel %vm3115, %v3112, %v3114
    %v3119 = vadd.f32 %v3103, %v3112
    %v3120 = vadd.f32 %v3104, %v3116
    %s3121 = sld [smem:[#allocation2 + $0x24c]]
    %v3122 = vstv %s3121
    %v3123 = vmul.f32 %v3122, %v50
    %v3124 = vmul.f32 %v3122, 0.0
    %3127 = vrot.lane.b32.xlu0 %v3123, 52
    %v3128 = vpop.permute.xlu0 %3127
    %3129 = vrot.lane.b32.xlu0 %v3124, 52
    %v3130 = vpop.permute.xlu0 %3129
    %vm3131 = vcmask 424960
    %v3132 = vsel %vm3131, %v3128, %v3130
    %v3135 = vadd.f32 %v3119, %v3128
    %v3136 = vadd.f32 %v3120, %v3132
    %s3137 = sld [smem:[#allocation2 + $0x24d]]
    %v3138 = vstv %s3137
    %v3139 = vmul.f32 %v3138, %v50
    %v3140 = vmul.f32 %v3138, 0.0
    %3143 = vrot.lane.b32.xlu0 %v3139, 51
    %v3144 = vpop.permute.xlu0 %3143
    %3145 = vrot.lane.b32.xlu0 %v3140, 51
    %v3146 = vpop.permute.xlu0 %3145
    %vm3147 = vcmask 416768
    %v3148 = vsel %vm3147, %v3144, %v3146
    %v3151 = vadd.f32 %v3135, %v3144
    %v3152 = vadd.f32 %v3136, %v3148
    %s3153 = sld [smem:[#allocation2 + $0x24e]]
    %v3154 = vstv %s3153
    %v3155 = vmul.f32 %v3154, %v50
    %v3156 = vmul.f32 %v3154, 0.0
    %3159 = vrot.lane.b32.xlu0 %v3155, 50
    %v3160 = vpop.permute.xlu0 %3159
    %3161 = vrot.lane.b32.xlu0 %v3156, 50
    %v3162 = vpop.permute.xlu0 %3161
    %vm3163 = vcmask 408576
    %v3164 = vsel %vm3163, %v3160, %v3162
    %v3167 = vadd.f32 %v3151, %v3160
    %v3168 = vadd.f32 %v3152, %v3164
    %s3169 = sld [smem:[#allocation2 + $0x24f]]
    %v3170 = vstv %s3169
    %v3171 = vmul.f32 %v3170, %v50
    %v3172 = vmul.f32 %v3170, 0.0
    %3175 = vrot.lane.b32.xlu0 %v3171, 49
    %v3176 = vpop.permute.xlu0 %3175
    %3177 = vrot.lane.b32.xlu0 %v3172, 49
    %v3178 = vpop.permute.xlu0 %3177
    %vm3179 = vcmask 400384
    %v3180 = vsel %vm3179, %v3176, %v3178
    %v3183 = vadd.f32 %v3167, %v3176
    %v3184 = vadd.f32 %v3168, %v3180
    %s3185 = sld [smem:[#allocation2 + $0x250]]
    %v3186 = vstv %s3185
    %v3187 = vmul.f32 %v3186, %v50
    %v3188 = vmul.f32 %v3186, 0.0
    %3191 = vrot.lane.b32.xlu0 %v3187, 48
    %v3192 = vpop.permute.xlu0 %3191
    %3193 = vrot.lane.b32.xlu0 %v3188, 48
    %v3194 = vpop.permute.xlu0 %3193
    %vm3195 = vcmask 392192
    %v3196 = vsel %vm3195, %v3192, %v3194
    %v3199 = vadd.f32 %v3183, %v3192
    %v3200 = vadd.f32 %v3184, %v3196
    %3203 = vrot.lane.b32.xlu0 %v1723, 2
    %v3204 = vpop.permute.xlu0 %3203
    %3205 = vrot.lane.b32.xlu0 %v1724, 2
    %v3206 = vpop.permute.xlu0 %3205
    %vm3207 = vcmask 15360
    %v3208 = vsel %vm3207, %v3204, %v3206
    %3210 = vst [vmem:[#allocation9] sm:$0xff] %v3208
    %3213 = vrot.lane.b32.xlu0 %v2225, 10
    %v3214 = vpop.permute.xlu0 %3213
    %3215 = vrot.lane.b32.xlu0 %v2226, 10
    %v3216 = vpop.permute.xlu0 %3215
    %vm3217 = vcmask 80896
    %v3218 = vsel %vm3217, %v3214, %v3216
    %3220 = vst [vmem:[#allocation9 + $0x8] sm:$0xff] %v3218
    %3223 = vrot.lane.b32.xlu0 %v2700, 20
    %v3224 = vpop.permute.xlu0 %3223
    %3225 = vrot.lane.b32.xlu0 %v2701, 20
    %v3226 = vpop.permute.xlu0 %3225
    %vm3227 = vcmask 162816
    %v3228 = vsel %vm3227, %v3224, %v3226
    %3230 = vst [vmem:[#allocation9 + $0x10] sm:$0xff] %v3228
    %3233 = vrot.lane.b32.xlu0 %v3024, 30
    %v3234 = vpop.permute.xlu0 %3233
    %3235 = vrot.lane.b32.xlu0 %v3025, 30
    %v3236 = vpop.permute.xlu0 %3235
    %vm3237 = vcmask 244736
    %v3238 = vsel %vm3237, %v3234, %v3236
    %3240 = vst [vmem:[#allocation9 + $0x18] sm:$0xff] %v3238
    %3243 = vrot.lane.b32.xlu0 %v3199, 40
    %v3244 = vpop.permute.xlu0 %3243
    %3245 = vrot.lane.b32.xlu0 %v3200, 40
    %v3246 = vpop.permute.xlu0 %3245
    %vm3247 = vcmask 326656
    %v3248 = vsel %vm3247, %v3244, %v3246
    %3250 = vst [vmem:[#allocation9 + $0x20] sm:$0xff] %v3248
    // Predicated region
    $region26: #{inception_block.1} parent=1 // pred_check
      _
    $region27: #{inception_block.1} parent=1 // pred_check_branch
      %3252 = sbr.rel (0) target = $region29
    $region28: #{inception_block.1} parent=1 // pred_region
      %s3254 = ssub.s32 640, 640
      %3255 = vsyncadd [#allocation4], %s3254
      %s3257 = sshll.u32 [#allocation9], 4
      %s3258 = int_to_ptr.vmem [resolvable:$true] %s3257
      %3260 = dma.vmem_to_hbm [thread:$0]  %s3258, 640, %s3, [#allocation4]
    $region29: #{inception_block.1} parent=1 // pred_fallthru
      _
    // Predicated region
    $region30: #{inception_block.1} parent=1 // pred_check
      _
    $region31: #{inception_block.1} parent=1 // pred_check_branch
      %3262 = sbr.rel (0) target = $region33
    $region32: #{inception_block.1} parent=1 // pred_region
      %3263 = dma.done [#allocation4], 640
    $region33: #{inception_block.1} parent=1 // pred_fallthru
      _
    %3264 = vsyncpa [#allocation3], 1
    %3265 = vsyncpa [#allocation4], 1
    %3266 = vsyncpa [#allocation5], 1
    %3267 = vsyncpa [#allocation6], 1

</llo_original>
